<compile_context>
chip_gen: v7x
topology: tpu7x:2x2x1
jax: 0.10.0
libtpu: 0.0.40
codegen_flags: <defaults>
</compile_context>

<pallas_src>
import functools

import jax
import jax.numpy as jnp
import numpy as np
from jax.experimental import pallas as pl
from jax.experimental.pallas import tpu as pltpu


def _round_up(x, m):
    return (x + m - 1) // m * m


def _pick_tile_k(k_pad, max_tile=1024):
    """Largest multiple of 128 that divides k_pad and is <= max_tile."""
    if k_pad <= max_tile:
        return k_pad
    t = max_tile
    while k_pad % t != 0:
        t -= 128
    return t


def _fused_tile_k(p_pad, k_pad, c_pad, x_item, o_item, limit=12 * 1024 * 1024):
    """Largest K tile (multiple of 128, divides k_pad, <=1024) whose fused
    working set (double-buffered x/w/out + f32 acc) fits under `limit` bytes.
    Returns None if even tile_k=128 does not fit (caller falls back)."""
    for t in range(min(k_pad, 1024), 0, -128):
        if k_pad % t:
            continue
        need = (2 * p_pad * t * x_item          # x double buffer
                + 2 * t * c_pad * x_item        # weight double buffer
                + 2 * p_pad * c_pad * o_item    # output double buffer
                + p_pad * c_pad * 4)            # f32 accumulator
        if need <= limit:
            return t
    return None


# ---------------------------------------------------------------------------
# Kernel 1: tiled im2col-matmul (+ bias, + optional LeakyReLU epilogue)
# ---------------------------------------------------------------------------
def _conv_matmul_kernel(x_ref, w_ref, b_ref, o_ref, acc_ref, *, use_bias, use_act):
    k = pl.program_id(1)

    @pl.when(k == 0)
    def _():
        acc_ref[...] = jnp.zeros_like(acc_ref)

    acc_ref[...] += jnp.dot(x_ref[...], w_ref[...],
                            preferred_element_type=jnp.float32)

    @pl.when(k == pl.num_programs(1) - 1)
    def _():
        y = acc_ref[...]                       # f32 accumulator
        if use_bias:
            y = y + b_ref[...]                 # bias in f32
        if use_act:
            y = jnp.where(y >= 0, y, 0.2 * y)  # LeakyReLU(0.2) in f32
        o_ref[...] = y.astype(o_ref.dtype)


def conv_matmul_pallas(x2d, wmat, bvec, *, tile_m, tile_k, use_bias, use_act,
                       out_dtype):
    m_pad, k_pad = x2d.shape
    c_pad = wmat.shape[1]
    grid = (m_pad // tile_m, k_pad // tile_k)
    kernel = functools.partial(_conv_matmul_kernel, use_bias=use_bias, use_act=use_act)

    flops = 2 * m_pad * k_pad * c_pad
    bytes_accessed = (
        m_pad * k_pad * x2d.dtype.itemsize
        + grid[0] * k_pad * c_pad * wmat.dtype.itemsize  # weights re-read per M tile
        + m_pad * c_pad * jnp.dtype(out_dtype).itemsize
    )
    return pl.pallas_call(
        kernel,
        out_shape=jax.ShapeDtypeStruct((m_pad, c_pad), out_dtype),
        grid_spec=pltpu.PrefetchScalarGridSpec(
            num_scalar_prefetch=0,
            grid=grid,
            in_specs=[
                pl.BlockSpec((tile_m, tile_k), lambda i, k: (i, k)),
                pl.BlockSpec((tile_k, c_pad), lambda i, k: (k, 0)),
                pl.BlockSpec((1, c_pad), lambda i, k: (0, 0)),
            ],
            out_specs=pl.BlockSpec((tile_m, c_pad), lambda i, k: (i, 0)),
            scratch_shapes=[pltpu.VMEM((tile_m, c_pad), jnp.float32)],
        ),
        compiler_params=pltpu.CompilerParams(
            dimension_semantics=("parallel", "arbitrary")),
        cost_estimate=pl.CostEstimate(flops=flops, transcendentals=0,
                                      bytes_accessed=bytes_accessed),
    )(x2d, wmat, bvec)


# ---------------------------------------------------------------------------
# Kernel 2: fused conv-matmul + InstanceNorm2d(affine=False) + LeakyReLU(0.2)
#           (grid over batch; one per-sample (P, C) block; conv bias skipped
#            because it cancels under the InstanceNorm mean subtraction)
# ---------------------------------------------------------------------------
def _conv_inorm_lrelu_kernel(x_ref, w_ref, o_ref, acc_ref, *, p_valid):
    k = pl.program_id(1)

    @pl.when(k == 0)
    def _():
        acc_ref[...] = jnp.zeros_like(acc_ref)

    acc_ref[...] += jnp.dot(x_ref[0], w_ref[...],
                            preferred_element_type=jnp.float32)

    @pl.when(k == pl.num_programs(1) - 1)
    def _():
        y = acc_ref[...]                                  # (P_pad, C_pad), f32
        inv_p = 1.0 / float(p_valid)
        if p_valid == y.shape[0]:
            mean = jnp.sum(y, axis=0, keepdims=True) * inv_p
            cen = y - mean
            var = jnp.sum(cen * cen, axis=0, keepdims=True) * inv_p
        else:
            # Spatial rows were zero-padded to a sublane multiple: mask them out
            # of the statistics (biased variance, matching PyTorch InstanceNorm).
            mask = jax.lax.broadcasted_iota(jnp.int32, y.shape, 0) < p_valid
            mean = jnp.sum(jnp.where(mask, y, 0.0), axis=0, keepdims=True) * inv_p
            cen = y - mean
            var = jnp.sum(jnp.where(mask, cen * cen, 0.0), axis=0,
                          keepdims=True) * inv_p
        yn = cen * jax.lax.rsqrt(var + 1e-5)              # eps = 1e-5 (PyTorch)
        o_ref[0] = jnp.where(yn >= 0, yn, 0.2 * yn).astype(o_ref.dtype)


def conv_inorm_lrelu_pallas(x3d, wmat, *, tile_k, p_valid, out_dtype):
    n, p_pad, k_pad = x3d.shape
    c_pad = wmat.shape[1]
    grid = (n, k_pad // tile_k)
    kernel = functools.partial(_conv_inorm_lrelu_kernel, p_valid=p_valid)

    flops = 2 * n * p_pad * k_pad * c_pad
    bytes_accessed = (
        n * p_pad * k_pad * x3d.dtype.itemsize
        + n * k_pad * c_pad * wmat.dtype.itemsize   # weights re-read per sample
        + n * p_pad * c_pad * jnp.dtype(out_dtype).itemsize
    )
    return pl.pallas_call(
        kernel,
        out_shape=jax.ShapeDtypeStruct((n, p_pad, c_pad), out_dtype),
        grid_spec=pltpu.PrefetchScalarGridSpec(
            num_scalar_prefetch=0,
            grid=grid,
            in_specs=[
                pl.BlockSpec((1, p_pad, tile_k), lambda i, k: (i, 0, k)),
                pl.BlockSpec((tile_k, c_pad), lambda i, k: (k, 0)),
            ],
            out_specs=pl.BlockSpec((1, p_pad, c_pad), lambda i, k: (i, 0, 0)),
            scratch_shapes=[pltpu.VMEM((p_pad, c_pad), jnp.float32)],
        ),
        compiler_params=pltpu.CompilerParams(
            dimension_semantics=("parallel", "arbitrary")),
        cost_estimate=pl.CostEstimate(flops=flops, transcendentals=n * c_pad,
                                      bytes_accessed=bytes_accessed),
    )(x3d, wmat)


# ---------------------------------------------------------------------------
# Kernel 3 (fallback): InstanceNorm2d(affine=False) + LeakyReLU(0.2), per sample
# ---------------------------------------------------------------------------
def _inorm_lrelu_kernel(y_ref, o_ref):
    y = y_ref[...]                                    # (1, P, C), f32
    mean = jnp.mean(y, axis=1, keepdims=True)
    cen = y - mean
    var = jnp.mean(cen * cen, axis=1, keepdims=True)  # biased variance (PyTorch)
    yn = cen * jax.lax.rsqrt(var + 1e-5)
    o_ref[...] = jnp.where(yn >= 0, yn, 0.2 * yn).astype(o_ref.dtype)


def inorm_lrelu_pallas(y, out_dtype):
    n, p, c = y.shape
    return pl.pallas_call(
        _inorm_lrelu_kernel,
        out_shape=jax.ShapeDtypeStruct((n, p, c), out_dtype),
        grid=(n,),
        in_specs=[pl.BlockSpec((1, p, c), lambda i: (i, 0, 0))],
        out_specs=pl.BlockSpec((1, p, c), lambda i: (i, 0, 0)),
        compiler_params=pltpu.CompilerParams(dimension_semantics=("parallel",)),
    )(y)


# ---------------------------------------------------------------------------
# Glue: NHWC im2col, per-layer wrapper, params, full forward
# ---------------------------------------------------------------------------
def im2col_nhwc(x, kh, kw, stride, pad):
    """x: (N, H, W, C); pad = ((top, bottom), (left, right)).
    Returns (N, OH*OW, KH*KW*C) with patch ordering (KH, KW, C)."""
    (pt, pb), (pleft, pright) = pad
    x = jnp.pad(x, ((0, 0), (pt, pb), (pleft, pright), (0, 0)))
    n, h, w, c = x.shape
    oh = (h - kh) // stride + 1
    ow = (w - kw) // stride + 1
    cols = []
    for i in range(kh):
        for j in range(kw):
            cols.append(x[:, i: i + stride * (oh - 1) + 1: stride,
                             j: j + stride * (ow - 1) + 1: stride, :])
    col = jnp.concatenate(cols, axis=-1)              # (N, OH, OW, KH*KW*C)
    return col.reshape(n, oh * ow, kh * kw * c), oh, ow


def conv_layer_pallas(x_nhwc, w, b, stride, pad, use_norm, use_act,
                      matmul_dtype, out_dtype):
    n = x_nhwc.shape[0]
    cout, cin, kh, kw = w.shape

    # Cast activations to the matmul dtype BEFORE im2col (halves im2col HBM bytes).
    col, oh, ow = im2col_nhwc(x_nhwc.astype(matmul_dtype), kh, kw, stride, pad)
    p = oh * ow
    k = kh * kw * cin
    k_pad = _round_up(k, 128)        # lane-aligned MXU contraction
    c_pad = _round_up(cout, 128)     # lane-dense output stores

    # Weight as (K, Cout), row ordering (KH, KW, Cin) to match the patches.
    wmat = jnp.transpose(w, (2, 3, 1, 0)).reshape(k, cout)
    wmat = jnp.pad(wmat, ((0, k_pad - k), (0, c_pad - cout))).astype(matmul_dtype)

    x_item = jnp.dtype(matmul_dtype).itemsize
    o_item = jnp.dtype(out_dtype).itemsize

    if use_norm:
        # Fused conv + InstanceNorm + LeakyReLU: one per-sample (P, C) block.
        p_pad = _round_up(p, 8)
        tile_k = _fused_tile_k(p_pad, k_pad, c_pad, x_item, o_item)
        if tile_k is not None:
            x3d = jnp.pad(col, ((0, 0), (0, p_pad - p), (0, k_pad - k)))
            y = conv_inorm_lrelu_pallas(x3d, wmat, tile_k=tile_k, p_valid=p,
                                        out_dtype=out_dtype)
            y = y[:, :p, :cout]                     # strip P / Cout padding
            return y.reshape(n, oh, ow, cout)       # stay NHWC between layers

    # Flat (M, K) x (K, C) path; used for non-norm layers and as fallback.
    m = n * p
    m8 = _round_up(m, 8)
    tile_m = 512 if m8 >= 512 else m8
    m_pad = _round_up(m8, tile_m)
    tile_k = _pick_tile_k(k_pad)

    x2d = col.reshape(m, k)
    x2d = jnp.pad(x2d, ((0, m_pad - m), (0, k_pad - k)))

    # Bias cancels exactly under InstanceNorm's mean subtraction -> skip it there.
    use_bias = (b is not None) and (not use_norm)
    bvec = jnp.zeros((1, c_pad), jnp.float32)
    if use_bias:
        bvec = bvec.at[0, :cout].set(b.astype(jnp.float32))

    y = conv_matmul_pallas(
        x2d, wmat, bvec,
        tile_m=tile_m, tile_k=tile_k,
        use_bias=use_bias,
        use_act=(use_act and not use_norm),          # fuse act only when no norm
        out_dtype=(jnp.float32 if use_norm else out_dtype),
    )                                                # (m_pad, c_pad)
    y = y[:m, :cout]                                 # strip M / Cout padding

    if use_norm:
        y = inorm_lrelu_pallas(y.reshape(n, p, cout), out_dtype).reshape(m, cout)

    return y.reshape(n, oh, ow, cout)                # stay NHWC between layers


def init_params(key, in_channels=2):
    """Deterministic synthetic weights with the same shapes as the nn.Module."""
    specs = [(in_channels, 64), (64, 128), (128, 256), (256, 512)]
    params = []
    for cin, cout in specs:
        key, k1, k2 = jax.random.split(key, 3)
        fan = cin * 4 * 4
        w = jax.random.normal(k1, (cout, cin, 4, 4), jnp.float32) / jnp.sqrt(float(fan))
        b = 0.01 * jax.random.normal(k2, (cout,), jnp.float32)
        params.append((w, b))
    key, k1 = jax.random.split(key)
    w_last = jax.random.normal(k1, (1, 512, 4, 4), jnp.float32) / jnp.sqrt(512.0 * 16.0)
    params.append((w_last, None))  # final conv has bias=False
    return params


@functools.partial(jax.jit, static_argnames=("matmul_dtype",))
def forward_pallas(img_A, img_B, params, matmul_dtype=jnp.bfloat16):
    x = jnp.concatenate([img_A, img_B], axis=1)     # (N, C, H, W), PyTorch layout
    x = jnp.transpose(x, (0, 2, 3, 1))              # NHWC once; stays NHWC inside
    # (params, stride, ((pad_t,pad_b),(pad_l,pad_r)), instance_norm, leaky_relu, out_dtype)
    cfgs = [
        (params[0], 2, ((1, 1), (1, 1)), False, True, matmul_dtype),
        (params[1], 2, ((1, 1), (1, 1)), True, True, matmul_dtype),
        (params[2], 2, ((1, 1), (1, 1)), True, True, matmul_dtype),
        (params[3], 2, ((1, 1), (1, 1)), True, True, matmul_dtype),
        # ZeroPad2d((1,0,1,0)) + Conv2d(padding=1)  ==> pad top/left = 2, bottom/right = 1
        (params[4], 1, ((2, 1), (2, 1)), False, False, jnp.float32),
    ]
    for (w, b), stride, pad, use_norm, use_act, out_dtype in cfgs:
        x = conv_layer_pallas(x, w, b, stride, pad, use_norm, use_act,
                              matmul_dtype, out_dtype)
    return jnp.transpose(x, (0, 3, 1, 2))           # back to NCHW for the caller


# Pure-JAX reference (correctness sanity check), with matching matmul dtype.
def forward_ref(img_A, img_B, params, matmul_dtype=jnp.float32):
    x = jnp.concatenate([img_A, img_B], axis=1)

    def conv(x, w, b, stride, pad):
        y = jax.lax.conv_general_dilated(
            x.astype(matmul_dtype), w.astype(matmul_dtype), (stride, stride), pad,
            dimension_numbers=("NCHW", "OIHW", "NCHW"),
            preferred_element_type=jnp.float32)
        if b is not None:
            y = y + b[None, :, None, None]
        return y

    def inorm(x):
        m = jnp.mean(x, axis=(2, 3), keepdims=True)
        v = jnp.mean(jnp.square(x - m), axis=(2, 3), keepdims=True)
        return (x - m) * jax.lax.rsqrt(v + 1e-5)

    def lrelu(x):
        return jnp.where(x >= 0, x, 0.2 * x)

    x = lrelu(conv(x, params[0][0], params[0][1], 2, [(1, 1), (1, 1)]))
    x = lrelu(inorm(conv(x, params[1][0], params[1][1], 2, [(1, 1), (1, 1)])))
    x = lrelu(inorm(conv(x, params[2][0], params[2][1], 2, [(1, 1), (1, 1)])))
    x = lrelu(inorm(conv(x, params[3][0], params[3][1], 2, [(1, 1), (1, 1)])))
    x = conv(x, params[4][0], None, 1, [(2, 1), (2, 1)])
    return x


if __name__ == "__main__":
    key = jax.random.PRNGKey(0)
    kA, kB, kP = jax.random.split(key, 3)
    # Small shapes: batch=2, one channel per image (concat -> in_channels=2), 32x32.
    img_A = jax.random.normal(kA, (2, 1, 32, 32), jnp.float32)
    img_B = jax.random.normal(kB, (2, 1, 32, 32), jnp.float32)
    params = init_params(kP, in_channels=2)

    # f32 matmul path: exact semantic check against the f32 reference.
    out_f32 = forward_pallas(img_A, img_B, params, matmul_dtype=jnp.float32)
    # bf16 matmul path (recommended on v6e/v7x): check against a bf16-input reference.
    out_bf16 = forward_pallas(img_A, img_B, params, matmul_dtype=jnp.bfloat16)
    out_f32, out_bf16 = jax.block_until_ready((out_f32, out_bf16))

    assert out_f32.shape == (2, 1, 2, 2), out_f32.shape
    assert out_bf16.shape == (2, 1, 2, 2), out_bf16.shape

    ref_f32 = forward_ref(img_A, img_B, params, matmul_dtype=jnp.float32)
    ref_bf16 = forward_ref(img_A, img_B, params, matmul_dtype=jnp.bfloat16)
    np.testing.assert_allclose(np.asarray(out_f32), np.asarray(ref_f32),
                               rtol=5e-3, atol=5e-3)
    np.testing.assert_allclose(np.asarray(out_bf16), np.asarray(ref_bf16),
                               rtol=2e-2, atol=2e-2)

    print("KERNEL_OK")
</pallas_src>

<mosaic_0001>
module attributes {stable_mosaic.version = 11 : i64} {
  func.func @_conv_matmul_kernel(%arg0: i32, %arg1: i32, %arg2: memref<512x128xf32, #tpu.memory_space<vmem>>, %arg3: memref<128x128xf32, #tpu.memory_space<vmem>>, %arg4: memref<1x128xf32, #tpu.memory_space<vmem>>, %arg5: memref<512x128xf32, #tpu.memory_space<vmem>>, %arg6: memref<512x128xf32, #tpu.memory_space<vmem>>) attributes {dimension_semantics = [#tpu.dimension_semantics<parallel>, #tpu.dimension_semantics<arbitrary>], iteration_bounds = array<i64: 1, 1>, scalar_prefetch = 0 : i64, scratch_operands = 1 : i64, tpu.core_type = #tpu.core_type<tc>, window_params = [{transform_indices = @transform_0, window_bounds = array<i64: 512, 128>}, {transform_indices = @transform_1, window_bounds = array<i64: 128, 128>}, {pipeline_mode = #tpu.pipeline_mode<synchronous>, transform_indices = @transform_2, window_bounds = array<i64: 1, 128>}, {transform_indices = @transform_3, window_bounds = array<i64: 512, 128>}]} {
    %c0_i32 = arith.constant 0 : i32
    %0 = arith.cmpi eq, %arg1, %c0_i32 : i32
    %1 = arith.extui %0 : i1 to i32
    %c0_i32_0 = arith.constant 0 : i32
    %2 = arith.cmpi ne, %1, %c0_i32_0 : i32
    scf.if %2 {
      %cst_10 = arith.constant 0.000000e+00 : f32
      %12 = vector.broadcast %cst_10 : f32 to vector<512x128xf32>
      %c0_11 = arith.constant 0 : index
      %c0_12 = arith.constant 0 : index
      %13 = vector.load %arg6[%c0_11, %c0_12] : memref<512x128xf32, #tpu.memory_space<vmem>>, vector<512x128xf32>
      tpu.vector_store %arg6[%c0_11, %c0_12], %12 {strides = array<i32>} : memref<512x128xf32, #tpu.memory_space<vmem>>, vector<512x128xf32>,
    } else {
    }
    %c0 = arith.constant 0 : index
    %c0_1 = arith.constant 0 : index
    %3 = vector.load %arg6[%c0, %c0_1] : memref<512x128xf32, #tpu.memory_space<vmem>>, vector<512x128xf32>
    %c0_2 = arith.constant 0 : index
    %c0_3 = arith.constant 0 : index
    %4 = vector.load %arg2[%c0_2, %c0_3] : memref<512x128xf32, #tpu.memory_space<vmem>>, vector<512x128xf32>
    %c0_4 = arith.constant 0 : index
    %c0_5 = arith.constant 0 : index
    %5 = vector.load %arg3[%c0_4, %c0_5] : memref<128x128xf32, #tpu.memory_space<vmem>>, vector<128x128xf32>
    %cst = arith.constant dense<0.000000e+00> : vector<512x128xf32>
    %6 = tpu.matmul %4, %5, %cst {dimension_numbers = #tpu.dot_dimension_numbers<[1], [0], [0], [1], [0, 0, 1, 1], [], []>} : vector<512x128xf32>, vector<128x128xf32>, vector<512x128xf32> -> vector<512x128xf32>
    %7 = arith.addf %3, %6 : vector<512x128xf32>
    %c0_6 = arith.constant 0 : index
    %c0_7 = arith.constant 0 : index
    %8 = vector.load %arg6[%c0_6, %c0_7] : memref<512x128xf32, #tpu.memory_space<vmem>>, vector<512x128xf32>
    tpu.vector_store %arg6[%c0_6, %c0_7], %7 {strides = array<i32>} : memref<512x128xf32, #tpu.memory_space<vmem>>, vector<512x128xf32>,
    %c0_i32_8 = arith.constant 0 : i32
    %9 = arith.cmpi eq, %arg1, %c0_i32_8 : i32
    %10 = arith.extui %9 : i1 to i32
    %c0_i32_9 = arith.constant 0 : i32
    %11 = arith.cmpi ne, %10, %c0_i32_9 : i32
    scf.if %11 {
      %c0_10 = arith.constant 0 : index
      %c0_11 = arith.constant 0 : index
      %12 = vector.load %arg6[%c0_10, %c0_11] : memref<512x128xf32, #tpu.memory_space<vmem>>, vector<512x128xf32>
      %c0_12 = arith.constant 0 : index
      %c0_13 = arith.constant 0 : index
      %13 = vector.load %arg4[%c0_12, %c0_13] : memref<1x128xf32, #tpu.memory_space<vmem>>, vector<1x128xf32>
      %14 = vector.broadcast %13 : vector<1x128xf32> to vector<512x128xf32>
      %15 = arith.addf %12, %14 : vector<512x128xf32>
      %cst_14 = arith.constant 0.000000e+00 : f32
      %16 = vector.broadcast %cst_14 : f32 to vector<512x128xf32>
      %17 = arith.cmpf oge, %15, %16 : vector<512x128xf32>
      %cst_15 = arith.constant 2.000000e-01 : f32
      %18 = vector.broadcast %cst_15 : f32 to vector<512x128xf32>
      %19 = arith.mulf %18, %15 : vector<512x128xf32>
      %20 = arith.select %17, %15, %19 : vector<512x128xi1>, vector<512x128xf32>
      %c0_16 = arith.constant 0 : index
      %c0_17 = arith.constant 0 : index
      %21 = vector.load %arg5[%c0_16, %c0_17] : memref<512x128xf32, #tpu.memory_space<vmem>>, vector<512x128xf32>
      tpu.vector_store %arg5[%c0_16, %c0_17], %20 {strides = array<i32>} : memref<512x128xf32, #tpu.memory_space<vmem>>, vector<512x128xf32>,
    } else {
    }
    return
  }
  func.func @transform_0(%arg0: i32, %arg1: i32) -> (i32, i32) {
    %c0_i32 = arith.constant 0 : i32
    return %arg0, %arg1 : i32, i32
  }
  func.func @transform_1(%arg0: i32, %arg1: i32) -> (i32, i32) {
    %c0_i32 = arith.constant 0 : i32
    %c0_i32_0 = arith.constant 0 : i32
    return %arg1, %c0_i32 : i32, i32
  }
  func.func @transform_2(%arg0: i32, %arg1: i32) -> (i32, i32) {
    %c0_i32 = arith.constant 0 : i32
    %c0_i32_0 = arith.constant 0 : i32
    %c0_i32_1 = arith.constant 0 : i32
    return %c0_i32, %c0_i32_0 : i32, i32
  }
  func.func @transform_3(%arg0: i32, %arg1: i32) -> (i32, i32) {
    %c0_i32 = arith.constant 0 : i32
    %c0_i32_0 = arith.constant 0 : i32
    return %arg0, %c0_i32 : i32, i32
  }
}

module attributes {stable_mosaic.version = 11 : i64} {
  func.func @_conv_inorm_lrelu_kernel(%arg0: i32, %arg1: i32, %arg2: memref<1x64x1024xf32, #tpu.memory_space<vmem>>, %arg3: memref<1024x128xf32, #tpu.memory_space<vmem>>, %arg4: memref<1x64x128xf32, #tpu.memory_space<vmem>>, %arg5: memref<64x128xf32, #tpu.memory_space<vmem>>) attributes {dimension_semantics = [#tpu.dimension_semantics<parallel>, #tpu.dimension_semantics<arbitrary>], iteration_bounds = array<i64: 2, 1>, scalar_prefetch = 0 : i64, scratch_operands = 1 : i64, tpu.core_type = #tpu.core_type<tc>, window_params = [{transform_indices = @transform_0, window_bounds = array<i64: 1, 64, 1024>}, {transform_indices = @transform_1, window_bounds = array<i64: 1024, 128>}, {transform_indices = @transform_2, window_bounds = array<i64: 1, 64, 128>}]} {
    %c0_i32 = arith.constant 0 : i32
    %0 = arith.cmpi eq, %arg1, %c0_i32 : i32
    %1 = arith.extui %0 : i1 to i32
    %c0_i32_0 = arith.constant 0 : i32
    %2 = arith.cmpi ne, %1, %c0_i32_0 : i32
    scf.if %2 {
      %cst_11 = arith.constant 0.000000e+00 : f32
      %13 = vector.broadcast %cst_11 : f32 to vector<64x128xf32>
      %c0_12 = arith.constant 0 : index
      %c0_13 = arith.constant 0 : index
      %14 = vector.load %arg5[%c0_12, %c0_13] : memref<64x128xf32, #tpu.memory_space<vmem>>, vector<64x128xf32>
      tpu.vector_store %arg5[%c0_12, %c0_13], %13 {strides = array<i32>} : memref<64x128xf32, #tpu.memory_space<vmem>>, vector<64x128xf32>,
    } else {
    }
    %c0 = arith.constant 0 : index
    %c0_1 = arith.constant 0 : index
    %3 = vector.load %arg5[%c0, %c0_1] : memref<64x128xf32, #tpu.memory_space<vmem>>, vector<64x128xf32>
    %c0_2 = arith.constant 0 : index
    %c0_3 = arith.constant 0 : index
    %c0_4 = arith.constant 0 : index
    %4 = vector.load %arg2[%c0_2, %c0_3, %c0_4] : memref<1x64x1024xf32, #tpu.memory_space<vmem>>, vector<1x64x1024xf32>
    %5 = vector.shape_cast %4 : vector<1x64x1024xf32> to vector<64x1024xf32>
    %c0_5 = arith.constant 0 : index
    %c0_6 = arith.constant 0 : index
    %6 = vector.load %arg3[%c0_5, %c0_6] : memref<1024x128xf32, #tpu.memory_space<vmem>>, vector<1024x128xf32>
    %cst = arith.constant dense<0.000000e+00> : vector<64x128xf32>
    %7 = tpu.matmul %5, %6, %cst {dimension_numbers = #tpu.dot_dimension_numbers<[1], [0], [0], [1], [0, 0, 1, 1], [], []>} : vector<64x1024xf32>, vector<1024x128xf32>, vector<64x128xf32> -> vector<64x128xf32>
    %8 = arith.addf %3, %7 : vector<64x128xf32>
    %c0_7 = arith.constant 0 : index
    %c0_8 = arith.constant 0 : index
    %9 = vector.load %arg5[%c0_7, %c0_8] : memref<64x128xf32, #tpu.memory_space<vmem>>, vector<64x128xf32>
    tpu.vector_store %arg5[%c0_7, %c0_8], %8 {strides = array<i32>} : memref<64x128xf32, #tpu.memory_space<vmem>>, vector<64x128xf32>,
    %c0_i32_9 = arith.constant 0 : i32
    %10 = arith.cmpi eq, %arg1, %c0_i32_9 : i32
    %11 = arith.extui %10 : i1 to i32
    %c0_i32_10 = arith.constant 0 : i32
    %12 = arith.cmpi ne, %11, %c0_i32_10 : i32
    scf.if %12 {
      %c0_11 = arith.constant 0 : index
      %c0_12 = arith.constant 0 : index
      %13 = vector.load %arg5[%c0_11, %c0_12] : memref<64x128xf32, #tpu.memory_space<vmem>>, vector<64x128xf32>
      %cst_13 = arith.constant dense<0.000000e+00> : vector<128xf32>
      %14 = vector.multi_reduction <add>, %13, %cst_13 [0] : vector<64x128xf32> to vector<128xf32>
      %15 = vector.shape_cast %14 : vector<128xf32> to vector<1x128xf32>
      %cst_14 = arith.constant 1.562500e-02 : f32
      %16 = vector.broadcast %cst_14 : f32 to vector<1x128xf32>
      %17 = arith.mulf %15, %16 : vector<1x128xf32>
      %18 = vector.broadcast %17 : vector<1x128xf32> to vector<64x128xf32>
      %19 = arith.subf %13, %18 : vector<64x128xf32>
      %20 = arith.mulf %19, %19 : vector<64x128xf32>
      %cst_15 = arith.constant dense<0.000000e+00> : vector<128xf32>
      %21 = vector.multi_reduction <add>, %20, %cst_15 [0] : vector<64x128xf32> to vector<128xf32>
      %22 = vector.shape_cast %21 : vector<128xf32> to vector<1x128xf32>
      %cst_16 = arith.constant 1.562500e-02 : f32
      %23 = vector.broadcast %cst_16 : f32 to vector<1x128xf32>
      %24 = arith.mulf %22, %23 : vector<1x128xf32>
      %cst_17 = arith.constant 9.99999974E-6 : f32
      %25 = vector.broadcast %cst_17 : f32 to vector<1x128xf32>
      %26 = arith.addf %24, %25 : vector<1x128xf32>
      %27 = math.rsqrt %26 : vector<1x128xf32>
      %28 = vector.broadcast %27 : vector<1x128xf32> to vector<64x128xf32>
      %29 = arith.mulf %19, %28 : vector<64x128xf32>
      %cst_18 = arith.constant 0.000000e+00 : f32
      %30 = vector.broadcast %cst_18 : f32 to vector<64x128xf32>
      %31 = arith.cmpf oge, %29, %30 : vector<64x128xf32>
      %cst_19 = arith.constant 2.000000e-01 : f32
      %32 = vector.broadcast %cst_19 : f32 to vector<64x128xf32>
      %33 = arith.mulf %32, %29 : vector<64x128xf32>
      %34 = arith.select %31, %29, %33 : vector<64x128xi1>, vector<64x128xf32>
      %c0_20 = arith.constant 0 : index
      %c0_21 = arith.constant 0 : index
      %c0_22 = arith.constant 0 : index
      %35 = vector.load %arg4[%c0_20, %c0_21, %c0_22] : memref<1x64x128xf32, #tpu.memory_space<vmem>>, vector<1x64x128xf32>
      %36 = vector.shape_cast %35 : vector<1x64x128xf32> to vector<64x128xf32>
      %37 = vector.shape_cast %34 : vector<64x128xf32> to vector<1x64x128xf32>
      tpu.vector_store %arg4[%c0_20, %c0_21, %c0_22], %37 {strides = array<i32>} : memref<1x64x128xf32, #tpu.memory_space<vmem>>, vector<1x64x128xf32>,
    } else {
    }
    return
  }
  func.func @transform_0(%arg0: i32, %arg1: i32) -> (i32, i32, i32) {
    %c0_i32 = arith.constant 0 : i32
    %c0_i32_0 = arith.constant 0 : i32
    return %arg0, %c0_i32, %arg1 : i32, i32, i32
  }
  func.func @transform_1(%arg0: i32, %arg1: i32) -> (i32, i32) {
    %c0_i32 = arith.constant 0 : i32
    %c0_i32_0 = arith.constant 0 : i32
    return %arg1, %c0_i32 : i32, i32
  }
  func.func @transform_2(%arg0: i32, %arg1: i32) -> (i32, i32, i32) {
    %c0_i32 = arith.constant 0 : i32
    %c0_i32_0 = arith.constant 0 : i32
    %c0_i32_1 = arith.constant 0 : i32
    return %arg0, %c0_i32, %c0_i32_0 : i32, i32, i32
  }
}

module attributes {stable_mosaic.version = 11 : i64} {
  func.func @_conv_inorm_lrelu_kernel(%arg0: i32, %arg1: i32, %arg2: memref<1x16x1024xf32, #tpu.memory_space<vmem>>, %arg3: memref<1024x256xf32, #tpu.memory_space<vmem>>, %arg4: memref<1x16x256xf32, #tpu.memory_space<vmem>>, %arg5: memref<16x256xf32, #tpu.memory_space<vmem>>) attributes {dimension_semantics = [#tpu.dimension_semantics<parallel>, #tpu.dimension_semantics<arbitrary>], iteration_bounds = array<i64: 2, 2>, scalar_prefetch = 0 : i64, scratch_operands = 1 : i64, tpu.core_type = #tpu.core_type<tc>, window_params = [{transform_indices = @transform_0, window_bounds = array<i64: 1, 16, 1024>}, {transform_indices = @transform_1, window_bounds = array<i64: 1024, 256>}, {transform_indices = @transform_2, window_bounds = array<i64: 1, 16, 256>}]} {
    %c0_i32 = arith.constant 0 : i32
    %0 = arith.cmpi eq, %arg1, %c0_i32 : i32
    %1 = arith.extui %0 : i1 to i32
    %c0_i32_0 = arith.constant 0 : i32
    %2 = arith.cmpi ne, %1, %c0_i32_0 : i32
    scf.if %2 {
      %cst_10 = arith.constant 0.000000e+00 : f32
      %13 = vector.broadcast %cst_10 : f32 to vector<16x256xf32>
      %c0_11 = arith.constant 0 : index
      %c0_12 = arith.constant 0 : index
      %14 = vector.load %arg5[%c0_11, %c0_12] : memref<16x256xf32, #tpu.memory_space<vmem>>, vector<16x256xf32>
      tpu.vector_store %arg5[%c0_11, %c0_12], %13 {strides = array<i32>} : memref<16x256xf32, #tpu.memory_space<vmem>>, vector<16x256xf32>,
    } else {
    }
    %c0 = arith.constant 0 : index
    %c0_1 = arith.constant 0 : index
    %3 = vector.load %arg5[%c0, %c0_1] : memref<16x256xf32, #tpu.memory_space<vmem>>, vector<16x256xf32>
    %c0_2 = arith.constant 0 : index
    %c0_3 = arith.constant 0 : index
    %c0_4 = arith.constant 0 : index
    %4 = vector.load %arg2[%c0_2, %c0_3, %c0_4] : memref<1x16x1024xf32, #tpu.memory_space<vmem>>, vector<1x16x1024xf32>
    %5 = vector.shape_cast %4 : vector<1x16x1024xf32> to vector<16x1024xf32>
    %c0_5 = arith.constant 0 : index
    %c0_6 = arith.constant 0 : index
    %6 = vector.load %arg3[%c0_5, %c0_6] : memref<1024x256xf32, #tpu.memory_space<vmem>>, vector<1024x256xf32>
    %cst = arith.constant dense<0.000000e+00> : vector<16x256xf32>
    %7 = tpu.matmul %5, %6, %cst {dimension_numbers = #tpu.dot_dimension_numbers<[1], [0], [0], [1], [0, 0, 1, 1], [], []>} : vector<16x1024xf32>, vector<1024x256xf32>, vector<16x256xf32> -> vector<16x256xf32>
    %8 = arith.addf %3, %7 : vector<16x256xf32>
    %c0_7 = arith.constant 0 : index
    %c0_8 = arith.constant 0 : index
    %9 = vector.load %arg5[%c0_7, %c0_8] : memref<16x256xf32, #tpu.memory_space<vmem>>, vector<16x256xf32>
    tpu.vector_store %arg5[%c0_7, %c0_8], %8 {strides = array<i32>} : memref<16x256xf32, #tpu.memory_space<vmem>>, vector<16x256xf32>,
    %c1_i32 = arith.constant 1 : i32
    %10 = arith.cmpi eq, %arg1, %c1_i32 : i32
    %11 = arith.extui %10 : i1 to i32
    %c0_i32_9 = arith.constant 0 : i32
    %12 = arith.cmpi ne, %11, %c0_i32_9 : i32
    scf.if %12 {
      %c0_10 = arith.constant 0 : index
      %c0_11 = arith.constant 0 : index
      %13 = vector.load %arg5[%c0_10, %c0_11] : memref<16x256xf32, #tpu.memory_space<vmem>>, vector<16x256xf32>
      %cst_12 = arith.constant dense<0.000000e+00> : vector<256xf32>
      %14 = vector.multi_reduction <add>, %13, %cst_12 [0] : vector<16x256xf32> to vector<256xf32>
      %15 = vector.shape_cast %14 : vector<256xf32> to vector<1x256xf32>
      %cst_13 = arith.constant 6.250000e-02 : f32
      %16 = vector.broadcast %cst_13 : f32 to vector<1x256xf32>
      %17 = arith.mulf %15, %16 : vector<1x256xf32>
      %18 = vector.broadcast %17 : vector<1x256xf32> to vector<16x256xf32>
      %19 = arith.subf %13, %18 : vector<16x256xf32>
      %20 = arith.mulf %19, %19 : vector<16x256xf32>
      %cst_14 = arith.constant dense<0.000000e+00> : vector<256xf32>
      %21 = vector.multi_reduction <add>, %20, %cst_14 [0] : vector<16x256xf32> to vector<256xf32>
      %22 = vector.shape_cast %21 : vector<256xf32> to vector<1x256xf32>
      %cst_15 = arith.constant 6.250000e-02 : f32
      %23 = vector.broadcast %cst_15 : f32 to vector<1x256xf32>
      %24 = arith.mulf %22, %23 : vector<1x256xf32>
      %cst_16 = arith.constant 9.99999974E-6 : f32
      %25 = vector.broadcast %cst_16 : f32 to vector<1x256xf32>
      %26 = arith.addf %24, %25 : vector<1x256xf32>
      %27 = math.rsqrt %26 : vector<1x256xf32>
      %28 = vector.broadcast %27 : vector<1x256xf32> to vector<16x256xf32>
      %29 = arith.mulf %19, %28 : vector<16x256xf32>
      %cst_17 = arith.constant 0.000000e+00 : f32
      %30 = vector.broadcast %cst_17 : f32 to vector<16x256xf32>
      %31 = arith.cmpf oge, %29, %30 : vector<16x256xf32>
      %cst_18 = arith.constant 2.000000e-01 : f32
      %32 = vector.broadcast %cst_18 : f32 to vector<16x256xf32>
      %33 = arith.mulf %32, %29 : vector<16x256xf32>
      %34 = arith.select %31, %29, %33 : vector<16x256xi1>, vector<16x256xf32>
      %c0_19 = arith.constant 0 : index
      %c0_20 = arith.constant 0 : index
      %c0_21 = arith.constant 0 : index
      %35 = vector.load %arg4[%c0_19, %c0_20, %c0_21] : memref<1x16x256xf32, #tpu.memory_space<vmem>>, vector<1x16x256xf32>
      %36 = vector.shape_cast %35 : vector<1x16x256xf32> to vector<16x256xf32>
      %37 = vector.shape_cast %34 : vector<16x256xf32> to vector<1x16x256xf32>
      tpu.vector_store %arg4[%c0_19, %c0_20, %c0_21], %37 {strides = array<i32>} : memref<1x16x256xf32, #tpu.memory_space<vmem>>, vector<1x16x256xf32>,
    } else {
    }
    return
  }
  func.func @transform_0(%arg0: i32, %arg1: i32) -> (i32, i32, i32) {
    %c0_i32 = arith.constant 0 : i32
    %c0_i32_0 = arith.constant 0 : i32
    return %arg0, %c0_i32, %arg1 : i32, i32, i32
  }
  func.func @transform_1(%arg0: i32, %arg1: i32) -> (i32, i32) {
    %c0_i32 = arith.constant 0 : i32
    %c0_i32_0 = arith.constant 0 : i32
    return %arg1, %c0_i32 : i32, i32
  }
  func.func @transform_2(%arg0: i32, %arg1: i32) -> (i32, i32, i32) {
    %c0_i32 = arith.constant 0 : i32
    %c0_i32_0 = arith.constant 0 : i32
    %c0_i32_1 = arith.constant 0 : i32
    return %arg0, %c0_i32, %c0_i32_0 : i32, i32, i32
  }
}

module attributes {stable_mosaic.version = 11 : i64} {
  func.func @_conv_inorm_lrelu_kernel(%arg0: i32, %arg1: i32, %arg2: memref<1x8x1024xf32, #tpu.memory_space<vmem>>, %arg3: memref<1024x512xf32, #tpu.memory_space<vmem>>, %arg4: memref<1x8x512xf32, #tpu.memory_space<vmem>>, %arg5: memref<8x512xf32, #tpu.memory_space<vmem>>) attributes {dimension_semantics = [#tpu.dimension_semantics<parallel>, #tpu.dimension_semantics<arbitrary>], iteration_bounds = array<i64: 2, 4>, scalar_prefetch = 0 : i64, scratch_operands = 1 : i64, tpu.core_type = #tpu.core_type<tc>, window_params = [{transform_indices = @transform_0, window_bounds = array<i64: 1, 8, 1024>}, {transform_indices = @transform_1, window_bounds = array<i64: 1024, 512>}, {transform_indices = @transform_2, window_bounds = array<i64: 1, 8, 512>}]} {
    %c0_i32 = arith.constant 0 : i32
    %0 = arith.cmpi eq, %arg1, %c0_i32 : i32
    %1 = arith.extui %0 : i1 to i32
    %c0_i32_0 = arith.constant 0 : i32
    %2 = arith.cmpi ne, %1, %c0_i32_0 : i32
    scf.if %2 {
      %cst_10 = arith.constant 0.000000e+00 : f32
      %13 = vector.broadcast %cst_10 : f32 to vector<8x512xf32>
      %c0_11 = arith.constant 0 : index
      %c0_12 = arith.constant 0 : index
      %14 = vector.load %arg5[%c0_11, %c0_12] : memref<8x512xf32, #tpu.memory_space<vmem>>, vector<8x512xf32>
      tpu.vector_store %arg5[%c0_11, %c0_12], %13 {strides = array<i32>} : memref<8x512xf32, #tpu.memory_space<vmem>>, vector<8x512xf32>,
    } else {
    }
    %c0 = arith.constant 0 : index
    %c0_1 = arith.constant 0 : index
    %3 = vector.load %arg5[%c0, %c0_1] : memref<8x512xf32, #tpu.memory_space<vmem>>, vector<8x512xf32>
    %c0_2 = arith.constant 0 : index
    %c0_3 = arith.constant 0 : index
    %c0_4 = arith.constant 0 : index
    %4 = vector.load %arg2[%c0_2, %c0_3, %c0_4] : memref<1x8x1024xf32, #tpu.memory_space<vmem>>, vector<1x8x1024xf32>
    %5 = vector.shape_cast %4 : vector<1x8x1024xf32> to vector<8x1024xf32>
    %c0_5 = arith.constant 0 : index
    %c0_6 = arith.constant 0 : index
    %6 = vector.load %arg3[%c0_5, %c0_6] : memref<1024x512xf32, #tpu.memory_space<vmem>>, vector<1024x512xf32>
    %cst = arith.constant dense<0.000000e+00> : vector<8x512xf32>
    %7 = tpu.matmul %5, %6, %cst {dimension_numbers = #tpu.dot_dimension_numbers<[1], [0], [0], [1], [0, 0, 1, 1], [], []>} : vector<8x1024xf32>, vector<1024x512xf32>, vector<8x512xf32> -> vector<8x512xf32>
    %8 = arith.addf %3, %7 : vector<8x512xf32>
    %c0_7 = arith.constant 0 : index
    %c0_8 = arith.constant 0 : index
    %9 = vector.load %arg5[%c0_7, %c0_8] : memref<8x512xf32, #tpu.memory_space<vmem>>, vector<8x512xf32>
    tpu.vector_store %arg5[%c0_7, %c0_8], %8 {strides = array<i32>} : memref<8x512xf32, #tpu.memory_space<vmem>>, vector<8x512xf32>,
    %c3_i32 = arith.constant 3 : i32
    %10 = arith.cmpi eq, %arg1, %c3_i32 : i32
    %11 = arith.extui %10 : i1 to i32
    %c0_i32_9 = arith.constant 0 : i32
    %12 = arith.cmpi ne, %11, %c0_i32_9 : i32
    scf.if %12 {
      %c0_10 = arith.constant 0 : index
      %c0_11 = arith.constant 0 : index
      %13 = vector.load %arg5[%c0_10, %c0_11] : memref<8x512xf32, #tpu.memory_space<vmem>>, vector<8x512xf32>
      %14 = tpu.iota {dimensions = array<i32: 0>} : vector<8x512xi32>
      %c4_i32 = arith.constant 4 : i32
      %15 = vector.broadcast %c4_i32 : i32 to vector<8x512xi32>
      %16 = arith.cmpi slt, %14, %15 : vector<8x512xi32>
      %cst_12 = arith.constant 0.000000e+00 : f32
      %17 = vector.broadcast %cst_12 : f32 to vector<8x512xf32>
      %18 = arith.select %16, %13, %17 : vector<8x512xi1>, vector<8x512xf32>
      %cst_13 = arith.constant dense<0.000000e+00> : vector<512xf32>
      %19 = vector.multi_reduction <add>, %18, %cst_13 [0] : vector<8x512xf32> to vector<512xf32>
      %20 = vector.shape_cast %19 : vector<512xf32> to vector<1x512xf32>
      %cst_14 = arith.constant 2.500000e-01 : f32
      %21 = vector.broadcast %cst_14 : f32 to vector<1x512xf32>
      %22 = arith.mulf %20, %21 : vector<1x512xf32>
      %23 = vector.broadcast %22 : vector<1x512xf32> to vector<8x512xf32>
      %24 = arith.subf %13, %23 : vector<8x512xf32>
      %25 = arith.mulf %24, %24 : vector<8x512xf32>
      %cst_15 = arith.constant 0.000000e+00 : f32
      %26 = vector.broadcast %cst_15 : f32 to vector<8x512xf32>
      %27 = arith.select %16, %25, %26 : vector<8x512xi1>, vector<8x512xf32>
      %cst_16 = arith.constant dense<0.000000e+00> : vector<512xf32>
      %28 = vector.multi_reduction <add>, %27, %cst_16 [0] : vector<8x512xf32> to vector<512xf32>
      %29 = vector.shape_cast %28 : vector<512xf32> to vector<1x512xf32>
      %cst_17 = arith.constant 2.500000e-01 : f32
      %30 = vector.broadcast %cst_17 : f32 to vector<1x512xf32>
      %31 = arith.mulf %29, %30 : vector<1x512xf32>
      %cst_18 = arith.constant 9.99999974E-6 : f32
      %32 = vector.broadcast %cst_18 : f32 to vector<1x512xf32>
      %33 = arith.addf %31, %32 : vector<1x512xf32>
      %34 = math.rsqrt %33 : vector<1x512xf32>
      %35 = vector.broadcast %34 : vector<1x512xf32> to vector<8x512xf32>
      %36 = arith.mulf %24, %35 : vector<8x512xf32>
      %cst_19 = arith.constant 0.000000e+00 : f32
      %37 = vector.broadcast %cst_19 : f32 to vector<8x512xf32>
      %38 = arith.cmpf oge, %36, %37 : vector<8x512xf32>
      %cst_20 = arith.constant 2.000000e-01 : f32
      %39 = vector.broadcast %cst_20 : f32 to vector<8x512xf32>
      %40 = arith.mulf %39, %36 : vector<8x512xf32>
      %41 = arith.select %38, %36, %40 : vector<8x512xi1>, vector<8x512xf32>
      %c0_21 = arith.constant 0 : index
      %c0_22 = arith.constant 0 : index
      %c0_23 = arith.constant 0 : index
      %42 = vector.load %arg4[%c0_21, %c0_22, %c0_23] : memref<1x8x512xf32, #tpu.memory_space<vmem>>, vector<1x8x512xf32>
      %43 = vector.shape_cast %42 : vector<1x8x512xf32> to vector<8x512xf32>
      %44 = vector.shape_cast %41 : vector<8x512xf32> to vector<1x8x512xf32>
      tpu.vector_store %arg4[%c0_21, %c0_22, %c0_23], %44 {strides = array<i32>} : memref<1x8x512xf32, #tpu.memory_space<vmem>>, vector<1x8x512xf32>,
    } else {
    }
    return
  }
  func.func @transform_0(%arg0: i32, %arg1: i32) -> (i32, i32, i32) {
    %c0_i32 = arith.constant 0 : i32
    %c0_i32_0 = arith.constant 0 : i32
    return %arg0, %c0_i32, %arg1 : i32, i32, i32
  }
  func.func @transform_1(%arg0: i32, %arg1: i32) -> (i32, i32) {
    %c0_i32 = arith.constant 0 : i32
    %c0_i32_0 = arith.constant 0 : i32
    return %arg1, %c0_i32 : i32, i32
  }
  func.func @transform_2(%arg0: i32, %arg1: i32) -> (i32, i32, i32) {
    %c0_i32 = arith.constant 0 : i32
    %c0_i32_0 = arith.constant 0 : i32
    %c0_i32_1 = arith.constant 0 : i32
    return %arg0, %c0_i32, %c0_i32_0 : i32, i32, i32
  }
}

module attributes {stable_mosaic.version = 11 : i64} {
  func.func @_conv_matmul_kernel(%arg0: i32, %arg1: i32, %arg2: memref<8x1024xf32, #tpu.memory_space<vmem>>, %arg3: memref<1024x128xf32, #tpu.memory_space<vmem>>, %arg4: memref<1x128xf32, #tpu.memory_space<vmem>>, %arg5: memref<8x128xf32, #tpu.memory_space<vmem>>, %arg6: memref<8x128xf32, #tpu.memory_space<vmem>>) attributes {dimension_semantics = [#tpu.dimension_semantics<parallel>, #tpu.dimension_semantics<arbitrary>], iteration_bounds = array<i64: 1, 8>, scalar_prefetch = 0 : i64, scratch_operands = 1 : i64, tpu.core_type = #tpu.core_type<tc>, window_params = [{transform_indices = @transform_0, window_bounds = array<i64: 8, 1024>}, {transform_indices = @transform_1, window_bounds = array<i64: 1024, 128>}, {pipeline_mode = #tpu.pipeline_mode<synchronous>, transform_indices = @transform_2, window_bounds = array<i64: 1, 128>}, {transform_indices = @transform_3, window_bounds = array<i64: 8, 128>}]} {
    %c0_i32 = arith.constant 0 : i32
    %0 = arith.cmpi eq, %arg1, %c0_i32 : i32
    %1 = arith.extui %0 : i1 to i32
    %c0_i32_0 = arith.constant 0 : i32
    %2 = arith.cmpi ne, %1, %c0_i32_0 : i32
    scf.if %2 {
      %cst_9 = arith.constant 0.000000e+00 : f32
      %12 = vector.broadcast %cst_9 : f32 to vector<8x128xf32>
      %c0_10 = arith.constant 0 : index
      %c0_11 = arith.constant 0 : index
      %13 = vector.load %arg6[%c0_10, %c0_11] : memref<8x128xf32, #tpu.memory_space<vmem>>, vector<8x128xf32>
      tpu.vector_store %arg6[%c0_10, %c0_11], %12 {strides = array<i32>} : memref<8x128xf32, #tpu.memory_space<vmem>>, vector<8x128xf32>,
    } else {
    }
    %c0 = arith.constant 0 : index
    %c0_1 = arith.constant 0 : index
    %3 = vector.load %arg6[%c0, %c0_1] : memref<8x128xf32, #tpu.memory_space<vmem>>, vector<8x128xf32>
    %c0_2 = arith.constant 0 : index
    %c0_3 = arith.constant 0 : index
    %4 = vector.load %arg2[%c0_2, %c0_3] : memref<8x1024xf32, #tpu.memory_space<vmem>>, vector<8x1024xf32>
    %c0_4 = arith.constant 0 : index
    %c0_5 = arith.constant 0 : index
    %5 = vector.load %arg3[%c0_4, %c0_5] : memref<1024x128xf32, #tpu.memory_space<vmem>>, vector<1024x128xf32>
    %cst = arith.constant dense<0.000000e+00> : vector<8x128xf32>
    %6 = tpu.matmul %4, %5, %cst {dimension_numbers = #tpu.dot_dimension_numbers<[1], [0], [0], [1], [0, 0, 1, 1], [], []>} : vector<8x1024xf32>, vector<1024x128xf32>, vector<8x128xf32> -> vector<8x128xf32>
    %7 = arith.addf %3, %6 : vector<8x128xf32>
    %c0_6 = arith.constant 0 : index
    %c0_7 = arith.constant 0 : index
    %8 = vector.load %arg6[%c0_6, %c0_7] : memref<8x128xf32, #tpu.memory_space<vmem>>, vector<8x128xf32>
    tpu.vector_store %arg6[%c0_6, %c0_7], %7 {strides = array<i32>} : memref<8x128xf32, #tpu.memory_space<vmem>>, vector<8x128xf32>,
    %c7_i32 = arith.constant 7 : i32
    %9 = arith.cmpi eq, %arg1, %c7_i32 : i32
    %10 = arith.extui %9 : i1 to i32
    %c0_i32_8 = arith.constant 0 : i32
    %11 = arith.cmpi ne, %10, %c0_i32_8 : i32
    scf.if %11 {
      %c0_9 = arith.constant 0 : index
      %c0_10 = arith.constant 0 : index
      %12 = vector.load %arg6[%c0_9, %c0_10] : memref<8x128xf32, #tpu.memory_space<vmem>>, vector<8x128xf32>
      %c0_11 = arith.constant 0 : index
      %c0_12 = arith.constant 0 : index
      %13 = vector.load %arg5[%c0_11, %c0_12] : memref<8x128xf32, #tpu.memory_space<vmem>>, vector<8x128xf32>
      tpu.vector_store %arg5[%c0_11, %c0_12], %12 {strides = array<i32>} : memref<8x128xf32, #tpu.memory_space<vmem>>, vector<8x128xf32>,
    } else {
    }
    return
  }
  func.func @transform_0(%arg0: i32, %arg1: i32) -> (i32, i32) {
    %c0_i32 = arith.constant 0 : i32
    return %arg0, %arg1 : i32, i32
  }
  func.func @transform_1(%arg0: i32, %arg1: i32) -> (i32, i32) {
    %c0_i32 = arith.constant 0 : i32
    %c0_i32_0 = arith.constant 0 : i32
    return %arg1, %c0_i32 : i32, i32
  }
  func.func @transform_2(%arg0: i32, %arg1: i32) -> (i32, i32) {
    %c0_i32 = arith.constant 0 : i32
    %c0_i32_0 = arith.constant 0 : i32
    %c0_i32_1 = arith.constant 0 : i32
    return %c0_i32, %c0_i32_0 : i32, i32
  }
  func.func @transform_3(%arg0: i32, %arg1: i32) -> (i32, i32) {
    %c0_i32 = arith.constant 0 : i32
    %c0_i32_0 = arith.constant 0 : i32
    return %arg0, %c0_i32 : i32, i32
  }
}

</mosaic_0001>

<llo_original>
// kernel: forward_pallas.5
$region0: #{forward_pallas.5}
  #allocation0 [shape = 'u32[]', space=smem, size = 0x4, offset = 0x4, fixed_abs, tag = 'smem constant byte address 0x4 - core index']
  #allocation1 [shape = 'u32[144,128]{1,0:T(1,128)}', space=vmem, size = 0x12000, scoped, tag = 'internal scratch']
  #allocation2 [shape = 'f32[512,128]{1,0:T(8,128)}', space=vmem, size = 0x40000, scoped, tag = 'scratch operand']
  %s0 = inlined_call_operand.vmem [shape: f32[512,128], index: 0, kind: input, shape index: {}]
  %s1 = inlined_call_operand.vmem [shape: f32[128,128], index: 1, kind: input, shape index: {}]
  %s2 = inlined_call_operand.vmem [shape: f32[1,128], index: 2, kind: input, shape index: {}]
  %s3 = inlined_call_operand.vmem [shape: f32[512,128], index: 3, kind: output, shape index: {}]
  %s4 = sld [smem:[#allocation0]]
  $region30: #{forward_pallas.5} parent=0
    _
  %s6 = ssub.s32 1, %s4
  %s7 = scalar_select 0, %s6, %s4
  // Predicated region
  $region2: #{forward_pallas.5} parent=0 // pred_check
    _
  $region3: #{forward_pallas.5} parent=0 // pred_check_branch
    %9 = sbr.rel (0) target = $region5
  $region4: #{forward_pallas.5} parent=0 // pred_region
    _
  $region5: #{forward_pallas.5} parent=0 // pred_fallthru
    _
  // Predicated region
  $region6: #{forward_pallas.5} parent=0 // pred_check
    _
  $region7: #{forward_pallas.5} parent=0 // pred_check_branch
    %11 = sbr.rel (0) target = $region9
  $region8: #{forward_pallas.5} parent=0 // pred_region
    _
  $region9: #{forward_pallas.5} parent=0 // pred_fallthru
    _
  // Predicated region
  $region10: #{forward_pallas.5} parent=0 // pred_check
    _
  $region11: #{forward_pallas.5} parent=0 // pred_check_branch
    %13 = sbr.rel (0) target = $region13
  $region12: #{forward_pallas.5} parent=0 // pred_region
    _
  $region13: #{forward_pallas.5} parent=0 // pred_fallthru
    _
  %p14 = scmp.eq.s32.totalorder 0, 0
  // Predicated region
  $region14: #{forward_pallas.5} parent=0 // pred_check
    %p15 = pneg %p14
  $region15: #{forward_pallas.5} parent=0 // pred_check_branch
    %17 = sbr.rel (%p15) target = $region17
  $region16: #{forward_pallas.5} parent=0 // pred_region
    %18 = vst [vmem:[#allocation2] sm:$0xff] 0.0
    %19 = vst [vmem:[#allocation2 + $0x8] sm:$0xff] 0.0
    %20 = vst [vmem:[#allocation2 + $0x10] sm:$0xff] 0.0
    %21 = vst [vmem:[#allocation2 + $0x18] sm:$0xff] 0.0
    %22 = vst [vmem:[#allocation2 + $0x20] sm:$0xff] 0.0
    %23 = vst [vmem:[#allocation2 + $0x28] sm:$0xff] 0.0
    %24 = vst [vmem:[#allocation2 + $0x30] sm:$0xff] 0.0
    %25 = vst [vmem:[#allocation2 + $0x38] sm:$0xff] 0.0
    %26 = vst [vmem:[#allocation2 + $0x40] sm:$0xff] 0.0
    %27 = vst [vmem:[#allocation2 + $0x48] sm:$0xff] 0.0
    %28 = vst [vmem:[#allocation2 + $0x50] sm:$0xff] 0.0
    %29 = vst [vmem:[#allocation2 + $0x58] sm:$0xff] 0.0
    %30 = vst [vmem:[#allocation2 + $0x60] sm:$0xff] 0.0
    %31 = vst [vmem:[#allocation2 + $0x68] sm:$0xff] 0.0
    %32 = vst [vmem:[#allocation2 + $0x70] sm:$0xff] 0.0
    %33 = vst [vmem:[#allocation2 + $0x78] sm:$0xff] 0.0
    %34 = vst [vmem:[#allocation2 + $0x80] sm:$0xff] 0.0
    %35 = vst [vmem:[#allocation2 + $0x88] sm:$0xff] 0.0
    %36 = vst [vmem:[#allocation2 + $0x90] sm:$0xff] 0.0
    %37 = vst [vmem:[#allocation2 + $0x98] sm:$0xff] 0.0
    %38 = vst [vmem:[#allocation2 + $0xa0] sm:$0xff] 0.0
    %39 = vst [vmem:[#allocation2 + $0xa8] sm:$0xff] 0.0
    %40 = vst [vmem:[#allocation2 + $0xb0] sm:$0xff] 0.0
    %41 = vst [vmem:[#allocation2 + $0xb8] sm:$0xff] 0.0
    %42 = vst [vmem:[#allocation2 + $0xc0] sm:$0xff] 0.0
    %43 = vst [vmem:[#allocation2 + $0xc8] sm:$0xff] 0.0
    %44 = vst [vmem:[#allocation2 + $0xd0] sm:$0xff] 0.0
    %45 = vst [vmem:[#allocation2 + $0xd8] sm:$0xff] 0.0
    %46 = vst [vmem:[#allocation2 + $0xe0] sm:$0xff] 0.0
    %47 = vst [vmem:[#allocation2 + $0xe8] sm:$0xff] 0.0
    %48 = vst [vmem:[#allocation2 + $0xf0] sm:$0xff] 0.0
    %49 = vst [vmem:[#allocation2 + $0xf8] sm:$0xff] 0.0
    %50 = vst [vmem:[#allocation2 + $0x100] sm:$0xff] 0.0
    %51 = vst [vmem:[#allocation2 + $0x108] sm:$0xff] 0.0
    %52 = vst [vmem:[#allocation2 + $0x110] sm:$0xff] 0.0
    %53 = vst [vmem:[#allocation2 + $0x118] sm:$0xff] 0.0
    %54 = vst [vmem:[#allocation2 + $0x120] sm:$0xff] 0.0
    %55 = vst [vmem:[#allocation2 + $0x128] sm:$0xff] 0.0
    %56 = vst [vmem:[#allocation2 + $0x130] sm:$0xff] 0.0
    %57 = vst [vmem:[#allocation2 + $0x138] sm:$0xff] 0.0
    %58 = vst [vmem:[#allocation2 + $0x140] sm:$0xff] 0.0
    %59 = vst [vmem:[#allocation2 + $0x148] sm:$0xff] 0.0
    %60 = vst [vmem:[#allocation2 + $0x150] sm:$0xff] 0.0
    %61 = vst [vmem:[#allocation2 + $0x158] sm:$0xff] 0.0
    %62 = vst [vmem:[#allocation2 + $0x160] sm:$0xff] 0.0
    %63 = vst [vmem:[#allocation2 + $0x168] sm:$0xff] 0.0
    %64 = vst [vmem:[#allocation2 + $0x170] sm:$0xff] 0.0
    %65 = vst [vmem:[#allocation2 + $0x178] sm:$0xff] 0.0
    %66 = vst [vmem:[#allocation2 + $0x180] sm:$0xff] 0.0
    %67 = vst [vmem:[#allocation2 + $0x188] sm:$0xff] 0.0
    %68 = vst [vmem:[#allocation2 + $0x190] sm:$0xff] 0.0
    %69 = vst [vmem:[#allocation2 + $0x198] sm:$0xff] 0.0
    %70 = vst [vmem:[#allocation2 + $0x1a0] sm:$0xff] 0.0
    %71 = vst [vmem:[#allocation2 + $0x1a8] sm:$0xff] 0.0
    %72 = vst [vmem:[#allocation2 + $0x1b0] sm:$0xff] 0.0
    %73 = vst [vmem:[#allocation2 + $0x1b8] sm:$0xff] 0.0
    %74 = vst [vmem:[#allocation2 + $0x1c0] sm:$0xff] 0.0
    %75 = vst [vmem:[#allocation2 + $0x1c8] sm:$0xff] 0.0
    %76 = vst [vmem:[#allocation2 + $0x1d0] sm:$0xff] 0.0
    %77 = vst [vmem:[#allocation2 + $0x1d8] sm:$0xff] 0.0
    %78 = vst [vmem:[#allocation2 + $0x1e0] sm:$0xff] 0.0
    %79 = vst [vmem:[#allocation2 + $0x1e8] sm:$0xff] 0.0
    %80 = vst [vmem:[#allocation2 + $0x1f0] sm:$0xff] 0.0
    %81 = vst [vmem:[#allocation2 + $0x1f8] sm:$0xff] 0.0
  $region17: #{forward_pallas.5} parent=0 // pred_fallthru
    _
  %v82 = vld [vmem:[#allocation2] sm:$0xff]
  %v83 = vld [vmem:[#allocation2 + $0x8] sm:$0xff]
  %v84 = vld [vmem:[#allocation2 + $0x10] sm:$0xff]
  %v85 = vld [vmem:[#allocation2 + $0x18] sm:$0xff]
  %v86 = vld [vmem:[#allocation2 + $0x20] sm:$0xff]
  %v87 = vld [vmem:[#allocation2 + $0x28] sm:$0xff]
  %v88 = vld [vmem:[#allocation2 + $0x30] sm:$0xff]
  %v89 = vld [vmem:[#allocation2 + $0x38] sm:$0xff]
  %v90 = vld [vmem:[#allocation2 + $0x40] sm:$0xff]
  %v91 = vld [vmem:[#allocation2 + $0x48] sm:$0xff]
  %v92 = vld [vmem:[#allocation2 + $0x50] sm:$0xff]
  %v93 = vld [vmem:[#allocation2 + $0x58] sm:$0xff]
  %v94 = vld [vmem:[#allocation2 + $0x60] sm:$0xff]
  %v95 = vld [vmem:[#allocation2 + $0x68] sm:$0xff]
  %v96 = vld [vmem:[#allocation2 + $0x70] sm:$0xff]
  %v97 = vld [vmem:[#allocation2 + $0x78] sm:$0xff]
  %v98 = vld [vmem:[#allocation2 + $0x80] sm:$0xff]
  %v99 = vld [vmem:[#allocation2 + $0x88] sm:$0xff]
  %v100 = vld [vmem:[#allocation2 + $0x90] sm:$0xff]
  %v101 = vld [vmem:[#allocation2 + $0x98] sm:$0xff]
  %v102 = vld [vmem:[#allocation2 + $0xa0] sm:$0xff]
  %v103 = vld [vmem:[#allocation2 + $0xa8] sm:$0xff]
  %v104 = vld [vmem:[#allocation2 + $0xb0] sm:$0xff]
  %v105 = vld [vmem:[#allocation2 + $0xb8] sm:$0xff]
  %v106 = vld [vmem:[#allocation2 + $0xc0] sm:$0xff]
  %v107 = vld [vmem:[#allocation2 + $0xc8] sm:$0xff]
  %v108 = vld [vmem:[#allocation2 + $0xd0] sm:$0xff]
  %v109 = vld [vmem:[#allocation2 + $0xd8] sm:$0xff]
  %v110 = vld [vmem:[#allocation2 + $0xe0] sm:$0xff]
  %v111 = vld [vmem:[#allocation2 + $0xe8] sm:$0xff]
  %v112 = vld [vmem:[#allocation2 + $0xf0] sm:$0xff]
  %v113 = vld [vmem:[#allocation2 + $0xf8] sm:$0xff]
  %v114 = vld [vmem:[#allocation2 + $0x100] sm:$0xff]
  %v115 = vld [vmem:[#allocation2 + $0x108] sm:$0xff]
  %v116 = vld [vmem:[#allocation2 + $0x110] sm:$0xff]
  %v117 = vld [vmem:[#allocation2 + $0x118] sm:$0xff]
  %v118 = vld [vmem:[#allocation2 + $0x120] sm:$0xff]
  %v119 = vld [vmem:[#allocation2 + $0x128] sm:$0xff]
  %v120 = vld [vmem:[#allocation2 + $0x130] sm:$0xff]
  %v121 = vld [vmem:[#allocation2 + $0x138] sm:$0xff]
  %v122 = vld [vmem:[#allocation2 + $0x140] sm:$0xff]
  %v123 = vld [vmem:[#allocation2 + $0x148] sm:$0xff]
  %v124 = vld [vmem:[#allocation2 + $0x150] sm:$0xff]
  %v125 = vld [vmem:[#allocation2 + $0x158] sm:$0xff]
  %v126 = vld [vmem:[#allocation2 + $0x160] sm:$0xff]
  %v127 = vld [vmem:[#allocation2 + $0x168] sm:$0xff]
  %v128 = vld [vmem:[#allocation2 + $0x170] sm:$0xff]
  %v129 = vld [vmem:[#allocation2 + $0x178] sm:$0xff]
  %v130 = vld [vmem:[#allocation2 + $0x180] sm:$0xff]
  %v131 = vld [vmem:[#allocation2 + $0x188] sm:$0xff]
  %v132 = vld [vmem:[#allocation2 + $0x190] sm:$0xff]
  %v133 = vld [vmem:[#allocation2 + $0x198] sm:$0xff]
  %v134 = vld [vmem:[#allocation2 + $0x1a0] sm:$0xff]
  %v135 = vld [vmem:[#allocation2 + $0x1a8] sm:$0xff]
  %v136 = vld [vmem:[#allocation2 + $0x1b0] sm:$0xff]
  %v137 = vld [vmem:[#allocation2 + $0x1b8] sm:$0xff]
  %v138 = vld [vmem:[#allocation2 + $0x1c0] sm:$0xff]
  %v139 = vld [vmem:[#allocation2 + $0x1c8] sm:$0xff]
  %v140 = vld [vmem:[#allocation2 + $0x1d0] sm:$0xff]
  %v141 = vld [vmem:[#allocation2 + $0x1d8] sm:$0xff]
  %v142 = vld [vmem:[#allocation2 + $0x1e0] sm:$0xff]
  %v143 = vld [vmem:[#allocation2 + $0x1e8] sm:$0xff]
  %v144 = vld [vmem:[#allocation2 + $0x1f0] sm:$0xff]
  %v145 = vld [vmem:[#allocation2 + $0x1f8] sm:$0xff]
  %v146 = vld [vmem:[%s0] sm:$0xff]
  %v147 = vld [vmem:[%s0 + $0x8] sm:$0xff]
  %v148 = vld [vmem:[%s0 + $0x10] sm:$0xff]
  %v149 = vld [vmem:[%s0 + $0x18] sm:$0xff]
  %v150 = vld [vmem:[%s0 + $0x20] sm:$0xff]
  %v151 = vld [vmem:[%s0 + $0x28] sm:$0xff]
  %v152 = vld [vmem:[%s0 + $0x30] sm:$0xff]
  %v153 = vld [vmem:[%s0 + $0x38] sm:$0xff]
  %v154 = vld [vmem:[%s0 + $0x40] sm:$0xff]
  %v155 = vld [vmem:[%s0 + $0x48] sm:$0xff]
  %v156 = vld [vmem:[%s0 + $0x50] sm:$0xff]
  %v157 = vld [vmem:[%s0 + $0x58] sm:$0xff]
  %v158 = vld [vmem:[%s0 + $0x60] sm:$0xff]
  %v159 = vld [vmem:[%s0 + $0x68] sm:$0xff]
  %v160 = vld [vmem:[%s0 + $0x70] sm:$0xff]
  %v161 = vld [vmem:[%s0 + $0x78] sm:$0xff]
  %v162 = vld [vmem:[%s0 + $0x80] sm:$0xff]
  %v163 = vld [vmem:[%s0 + $0x88] sm:$0xff]
  %v164 = vld [vmem:[%s0 + $0x90] sm:$0xff]
  %v165 = vld [vmem:[%s0 + $0x98] sm:$0xff]
  %v166 = vld [vmem:[%s0 + $0xa0] sm:$0xff]
  %v167 = vld [vmem:[%s0 + $0xa8] sm:$0xff]
  %v168 = vld [vmem:[%s0 + $0xb0] sm:$0xff]
  %v169 = vld [vmem:[%s0 + $0xb8] sm:$0xff]
  %v170 = vld [vmem:[%s0 + $0xc0] sm:$0xff]
  %v171 = vld [vmem:[%s0 + $0xc8] sm:$0xff]
  %v172 = vld [vmem:[%s0 + $0xd0] sm:$0xff]
  %v173 = vld [vmem:[%s0 + $0xd8] sm:$0xff]
  %v174 = vld [vmem:[%s0 + $0xe0] sm:$0xff]
  %v175 = vld [vmem:[%s0 + $0xe8] sm:$0xff]
  %v176 = vld [vmem:[%s0 + $0xf0] sm:$0xff]
  %v177 = vld [vmem:[%s0 + $0xf8] sm:$0xff]
  %v178 = vld [vmem:[%s0 + $0x100] sm:$0xff]
  %v179 = vld [vmem:[%s0 + $0x108] sm:$0xff]
  %v180 = vld [vmem:[%s0 + $0x110] sm:$0xff]
  %v181 = vld [vmem:[%s0 + $0x118] sm:$0xff]
  %v182 = vld [vmem:[%s0 + $0x120] sm:$0xff]
  %v183 = vld [vmem:[%s0 + $0x128] sm:$0xff]
  %v184 = vld [vmem:[%s0 + $0x130] sm:$0xff]
  %v185 = vld [vmem:[%s0 + $0x138] sm:$0xff]
  %v186 = vld [vmem:[%s0 + $0x140] sm:$0xff]
  %v187 = vld [vmem:[%s0 + $0x148] sm:$0xff]
  %v188 = vld [vmem:[%s0 + $0x150] sm:$0xff]
  %v189 = vld [vmem:[%s0 + $0x158] sm:$0xff]
  %v190 = vld [vmem:[%s0 + $0x160] sm:$0xff]
  %v191 = vld [vmem:[%s0 + $0x168] sm:$0xff]
  %v192 = vld [vmem:[%s0 + $0x170] sm:$0xff]
  %v193 = vld [vmem:[%s0 + $0x178] sm:$0xff]
  %v194 = vld [vmem:[%s0 + $0x180] sm:$0xff]
  %v195 = vld [vmem:[%s0 + $0x188] sm:$0xff]
  %v196 = vld [vmem:[%s0 + $0x190] sm:$0xff]
  %v197 = vld [vmem:[%s0 + $0x198] sm:$0xff]
  %v198 = vld [vmem:[%s0 + $0x1a0] sm:$0xff]
  %v199 = vld [vmem:[%s0 + $0x1a8] sm:$0xff]
  %v200 = vld [vmem:[%s0 + $0x1b0] sm:$0xff]
  %v201 = vld [vmem:[%s0 + $0x1b8] sm:$0xff]
  %v202 = vld [vmem:[%s0 + $0x1c0] sm:$0xff]
  %v203 = vld [vmem:[%s0 + $0x1c8] sm:$0xff]
  %v204 = vld [vmem:[%s0 + $0x1d0] sm:$0xff]
  %v205 = vld [vmem:[%s0 + $0x1d8] sm:$0xff]
  %v206 = vld [vmem:[%s0 + $0x1e0] sm:$0xff]
  %v207 = vld [vmem:[%s0 + $0x1e8] sm:$0xff]
  %v208 = vld [vmem:[%s0 + $0x1f0] sm:$0xff]
  %v209 = vld [vmem:[%s0 + $0x1f8] sm:$0xff]
  %v210 = vld [vmem:[%s1] sm:$0xff]
  %v211 = vld [vmem:[%s1 + $0x8] sm:$0xff]
  %v212 = vld [vmem:[%s1 + $0x10] sm:$0xff]
  %v213 = vld [vmem:[%s1 + $0x18] sm:$0xff]
  %v214 = vld [vmem:[%s1 + $0x20] sm:$0xff]
  %v215 = vld [vmem:[%s1 + $0x28] sm:$0xff]
  %v216 = vld [vmem:[%s1 + $0x30] sm:$0xff]
  %v217 = vld [vmem:[%s1 + $0x38] sm:$0xff]
  %v218 = vld [vmem:[%s1 + $0x40] sm:$0xff]
  %v219 = vld [vmem:[%s1 + $0x48] sm:$0xff]
  %v220 = vld [vmem:[%s1 + $0x50] sm:$0xff]
  %v221 = vld [vmem:[%s1 + $0x58] sm:$0xff]
  %v222 = vld [vmem:[%s1 + $0x60] sm:$0xff]
  %v223 = vld [vmem:[%s1 + $0x68] sm:$0xff]
  %v224 = vld [vmem:[%s1 + $0x70] sm:$0xff]
  %v225 = vld [vmem:[%s1 + $0x78] sm:$0xff]
  %226 = vmatprep.subr.mxu0 0.0
  %227 = vmatpush1.msra.mxu0 %v210
  %228 = vmatprep.subr.mxu0 0.0
  %229 = vmatpush1.msra.mxu0 %v211
  %230 = vmatprep.subr.mxu0 0.0
  %231 = vmatpush1.msra.mxu0 %v212
  %232 = vmatprep.subr.mxu0 0.0
  %233 = vmatpush1.msra.mxu0 %v213
  %234 = vmatprep.subr.mxu0 0.0
  %235 = vmatpush1.msra.mxu0 %v214
  %236 = vmatprep.subr.mxu0 0.0
  %237 = vmatpush1.msra.mxu0 %v215
  %238 = vmatprep.subr.mxu0 0.0
  %239 = vmatpush1.msra.mxu0 %v216
  %240 = vmatprep.subr.mxu0 0.0
  %241 = vmatpush1.msra.mxu0 %v217
  %242 = vmatprep.subr.mxu0 0.0
  %243 = vmatpush1.msra.mxu0 %v218
  %244 = vmatprep.subr.mxu0 0.0
  %245 = vmatpush1.msra.mxu0 %v219
  %246 = vmatprep.subr.mxu0 0.0
  %247 = vmatpush1.msra.mxu0 %v220
  %248 = vmatprep.subr.mxu0 0.0
  %249 = vmatpush1.msra.mxu0 %v221
  %250 = vmatprep.subr.mxu0 0.0
  %251 = vmatpush1.msra.mxu0 %v222
  %252 = vmatprep.subr.mxu0 0.0
  %253 = vmatpush1.msra.mxu0 %v223
  %254 = vmatprep.subr.mxu0 0.0
  %255 = vmatpush1.msra.mxu0 %v224
  %256 = vmatprep.subr.mxu0 0.0
  %257 = vmatpush1.msra.mxu0 %v225
  %258 = vmatprep.subr.mxu0 0.0
  %259 = vmatpush1.msra.mxu0 0.0
  %260 = vmatprep.subr.mxu0 0.0
  %261 = vmatpush1.msra.mxu0 0.0
  %262 = vmatprep.subr.mxu0 0.0
  %263 = vmatpush1.msra.mxu0 0.0
  %264 = vmatprep.subr.mxu0 0.0
  %265 = vmatpush1.msra.mxu0 0.0
  %266 = vmatprep.subr.mxu0 0.0
  %267 = vmatpush1.msra.mxu0 0.0
  %268 = vmatprep.subr.mxu0 0.0
  %269 = vmatpush1.msra.mxu0 0.0
  %270 = vmatprep.subr.mxu0 0.0
  %271 = vmatpush1.msra.mxu0 0.0
  %272 = vmatprep.subr.mxu0 0.0
  %273 = vmatpush1.msra.mxu0 0.0
  %274 = vmatprep.subr.mxu0 0.0
  %275 = vmatpush1.msra.mxu0 0.0
  %276 = vmatprep.subr.mxu0 0.0
  %277 = vmatpush1.msra.mxu0 0.0
  %278 = vmatprep.subr.mxu0 0.0
  %279 = vmatpush1.msra.mxu0 0.0
  %280 = vmatprep.subr.mxu0 0.0
  %281 = vmatpush1.msra.mxu0 0.0
  %282 = vmatprep.subr.mxu0 0.0
  %283 = vmatpush1.msra.mxu0 0.0
  %284 = vmatprep.subr.mxu0 0.0
  %285 = vmatpush1.msra.mxu0 0.0
  %286 = vmatprep.subr.mxu0 0.0
  %287 = vmatpush1.msra.mxu0 0.0
  %288 = vmatprep.subr.mxu0 0.0
  %289 = vmatpush1.msra.mxu0 0.0
  %290 = vmatprep.mubr.f32.mxu0 0.0
  %291 = vmatmul.mubr.f32.gmra.mrb[0].mxu0 %v146
  %v292 = vpop.f32.mrb[0].mxu0
  %v293 = vadd.f32 0.0, %v292
  %v294 = vpop.f32.mrb[0].mxu0
  %295 = vmatprep.mubr.f32.mxu0 0.0
  %296 = vmatmul.mubr.f32.gmra.mrb[0].mxu0 %v147
  %v297 = vpop.f32.mrb[0].mxu0
  %v298 = vadd.f32 0.0, %v297
  %v299 = vpop.f32.mrb[0].mxu0
  %300 = vmatprep.mubr.f32.mxu0 0.0
  %301 = vmatmul.mubr.f32.gmra.mrb[0].mxu0 %v148
  %v302 = vpop.f32.mrb[0].mxu0
  %v303 = vadd.f32 0.0, %v302
  %v304 = vpop.f32.mrb[0].mxu0
  %305 = vmatprep.mubr.f32.mxu0 0.0
  %306 = vmatmul.mubr.f32.gmra.mrb[0].mxu0 %v149
  %v307 = vpop.f32.mrb[0].mxu0
  %v308 = vadd.f32 0.0, %v307
  %v309 = vpop.f32.mrb[0].mxu0
  %310 = vmatprep.mubr.f32.mxu0 0.0
  %311 = vmatmul.mubr.f32.gmra.mrb[0].mxu0 %v150
  %v312 = vpop.f32.mrb[0].mxu0
  %v313 = vadd.f32 0.0, %v312
  %v314 = vpop.f32.mrb[0].mxu0
  %315 = vmatprep.mubr.f32.mxu0 0.0
  %316 = vmatmul.mubr.f32.gmra.mrb[0].mxu0 %v151
  %v317 = vpop.f32.mrb[0].mxu0
  %v318 = vadd.f32 0.0, %v317
  %v319 = vpop.f32.mrb[0].mxu0
  %320 = vmatprep.mubr.f32.mxu0 0.0
  %321 = vmatmul.mubr.f32.gmra.mrb[0].mxu0 %v152
  %v322 = vpop.f32.mrb[0].mxu0
  %v323 = vadd.f32 0.0, %v322
  %v324 = vpop.f32.mrb[0].mxu0
  %325 = vmatprep.mubr.f32.mxu0 0.0
  %326 = vmatmul.mubr.f32.gmra.mrb[0].mxu0 %v153
  %v327 = vpop.f32.mrb[0].mxu0
  %v328 = vadd.f32 0.0, %v327
  %v329 = vpop.f32.mrb[0].mxu0
  %330 = vmatprep.mubr.f32.mxu0 0.0
  %331 = vmatmul.mubr.f32.gmra.mrb[0].mxu0 %v154
  %v332 = vpop.f32.mrb[0].mxu0
  %v333 = vadd.f32 0.0, %v332
  %v334 = vpop.f32.mrb[0].mxu0
  %335 = vmatprep.mubr.f32.mxu0 0.0
  %336 = vmatmul.mubr.f32.gmra.mrb[0].mxu0 %v155
  %v337 = vpop.f32.mrb[0].mxu0
  %v338 = vadd.f32 0.0, %v337
  %v339 = vpop.f32.mrb[0].mxu0
  %340 = vmatprep.mubr.f32.mxu0 0.0
  %341 = vmatmul.mubr.f32.gmra.mrb[0].mxu0 %v156
  %v342 = vpop.f32.mrb[0].mxu0
  %v343 = vadd.f32 0.0, %v342
  %v344 = vpop.f32.mrb[0].mxu0
  %345 = vmatprep.mubr.f32.mxu0 0.0
  %346 = vmatmul.mubr.f32.gmra.mrb[0].mxu0 %v157
  %v347 = vpop.f32.mrb[0].mxu0
  %v348 = vadd.f32 0.0, %v347
  %v349 = vpop.f32.mrb[0].mxu0
  %350 = vmatprep.mubr.f32.mxu0 0.0
  %351 = vmatmul.mubr.f32.gmra.mrb[0].mxu0 %v158
  %v352 = vpop.f32.mrb[0].mxu0
  %v353 = vadd.f32 0.0, %v352
  %v354 = vpop.f32.mrb[0].mxu0
  %355 = vmatprep.mubr.f32.mxu0 0.0
  %356 = vmatmul.mubr.f32.gmra.mrb[0].mxu0 %v159
  %v357 = vpop.f32.mrb[0].mxu0
  %v358 = vadd.f32 0.0, %v357
  %v359 = vpop.f32.mrb[0].mxu0
  %360 = vmatprep.mubr.f32.mxu0 0.0
  %361 = vmatmul.mubr.f32.gmra.mrb[0].mxu0 %v160
  %v362 = vpop.f32.mrb[0].mxu0
  %v363 = vadd.f32 0.0, %v362
  %v364 = vpop.f32.mrb[0].mxu0
  %365 = vmatprep.mubr.f32.mxu0 0.0
  %366 = vmatmul.mubr.f32.gmra.mrb[0].mxu0 %v161
  %v367 = vpop.f32.mrb[0].mxu0
  %v368 = vadd.f32 0.0, %v367
  %v369 = vpop.f32.mrb[0].mxu0
  %370 = vmatprep.mubr.f32.mxu0 0.0
  %371 = vmatmul.mubr.f32.gmra.mrb[0].mxu0 %v162
  %v372 = vpop.f32.mrb[0].mxu0
  %v373 = vadd.f32 0.0, %v372
  %v374 = vpop.f32.mrb[0].mxu0
  %375 = vmatprep.mubr.f32.mxu0 0.0
  %376 = vmatmul.mubr.f32.gmra.mrb[0].mxu0 %v163
  %v377 = vpop.f32.mrb[0].mxu0
  %v378 = vadd.f32 0.0, %v377
  %v379 = vpop.f32.mrb[0].mxu0
  %380 = vmatprep.mubr.f32.mxu0 0.0
  %381 = vmatmul.mubr.f32.gmra.mrb[0].mxu0 %v164
  %v382 = vpop.f32.mrb[0].mxu0
  %v383 = vadd.f32 0.0, %v382
  %v384 = vpop.f32.mrb[0].mxu0
  %385 = vmatprep.mubr.f32.mxu0 0.0
  %386 = vmatmul.mubr.f32.gmra.mrb[0].mxu0 %v165
  %v387 = vpop.f32.mrb[0].mxu0
  %v388 = vadd.f32 0.0, %v387
  %v389 = vpop.f32.mrb[0].mxu0
  %390 = vmatprep.mubr.f32.mxu0 0.0
  %391 = vmatmul.mubr.f32.gmra.mrb[0].mxu0 %v166
  %v392 = vpop.f32.mrb[0].mxu0
  %v393 = vadd.f32 0.0, %v392
  %v394 = vpop.f32.mrb[0].mxu0
  %395 = vmatprep.mubr.f32.mxu0 0.0
  %396 = vmatmul.mubr.f32.gmra.mrb[0].mxu0 %v167
  %v397 = vpop.f32.mrb[0].mxu0
  %v398 = vadd.f32 0.0, %v397
  %v399 = vpop.f32.mrb[0].mxu0
  %400 = vmatprep.mubr.f32.mxu0 0.0
  %401 = vmatmul.mubr.f32.gmra.mrb[0].mxu0 %v168
  %v402 = vpop.f32.mrb[0].mxu0
  %v403 = vadd.f32 0.0, %v402
  %v404 = vpop.f32.mrb[0].mxu0
  %405 = vmatprep.mubr.f32.mxu0 0.0
  %406 = vmatmul.mubr.f32.gmra.mrb[0].mxu0 %v169
  %v407 = vpop.f32.mrb[0].mxu0
  %v408 = vadd.f32 0.0, %v407
  %v409 = vpop.f32.mrb[0].mxu0
  %410 = vmatprep.mubr.f32.mxu0 0.0
  %411 = vmatmul.mubr.f32.gmra.mrb[0].mxu0 %v170
  %v412 = vpop.f32.mrb[0].mxu0
  %v413 = vadd.f32 0.0, %v412
  %v414 = vpop.f32.mrb[0].mxu0
  %415 = vmatprep.mubr.f32.mxu0 0.0
  %416 = vmatmul.mubr.f32.gmra.mrb[0].mxu0 %v171
  %v417 = vpop.f32.mrb[0].mxu0
  %v418 = vadd.f32 0.0, %v417
  %v419 = vpop.f32.mrb[0].mxu0
  %420 = vmatprep.mubr.f32.mxu0 0.0
  %421 = vmatmul.mubr.f32.gmra.mrb[0].mxu0 %v172
  %v422 = vpop.f32.mrb[0].mxu0
  %v423 = vadd.f32 0.0, %v422
  %v424 = vpop.f32.mrb[0].mxu0
  %425 = vmatprep.mubr.f32.mxu0 0.0
  %426 = vmatmul.mubr.f32.gmra.mrb[0].mxu0 %v173
  %v427 = vpop.f32.mrb[0].mxu0
  %v428 = vadd.f32 0.0, %v427
  %v429 = vpop.f32.mrb[0].mxu0
  %430 = vmatprep.mubr.f32.mxu0 0.0
  %431 = vmatmul.mubr.f32.gmra.mrb[0].mxu0 %v174
  %v432 = vpop.f32.mrb[0].mxu0
  %v433 = vadd.f32 0.0, %v432
  %v434 = vpop.f32.mrb[0].mxu0
  %435 = vmatprep.mubr.f32.mxu0 0.0
  %436 = vmatmul.mubr.f32.gmra.mrb[0].mxu0 %v175
  %v437 = vpop.f32.mrb[0].mxu0
  %v438 = vadd.f32 0.0, %v437
  %v439 = vpop.f32.mrb[0].mxu0
  %440 = vmatprep.mubr.f32.mxu0 0.0
  %441 = vmatmul.mubr.f32.gmra.mrb[0].mxu0 %v176
  %v442 = vpop.f32.mrb[0].mxu0
  %v443 = vadd.f32 0.0, %v442
  %v444 = vpop.f32.mrb[0].mxu0
  %445 = vmatprep.mubr.f32.mxu0 0.0
  %446 = vmatmul.mubr.f32.gmra.mrb[0].mxu0 %v177
  %v447 = vpop.f32.mrb[0].mxu0
  %v448 = vadd.f32 0.0, %v447
  %v449 = vpop.f32.mrb[0].mxu0
  %450 = vmatprep.mubr.f32.mxu0 0.0
  %451 = vmatmul.mubr.f32.gmra.mrb[0].mxu0 %v178
  %v452 = vpop.f32.mrb[0].mxu0
  %v453 = vadd.f32 0.0, %v452
  %v454 = vpop.f32.mrb[0].mxu0
  %455 = vmatprep.mubr.f32.mxu0 0.0
  %456 = vmatmul.mubr.f32.gmra.mrb[0].mxu0 %v179
  %v457 = vpop.f32.mrb[0].mxu0
  %v458 = vadd.f32 0.0, %v457
  %v459 = vpop.f32.mrb[0].mxu0
  %460 = vmatprep.mubr.f32.mxu0 0.0
  %461 = vmatmul.mubr.f32.gmra.mrb[0].mxu0 %v180
  %v462 = vpop.f32.mrb[0].mxu0
  %v463 = vadd.f32 0.0, %v462
  %v464 = vpop.f32.mrb[0].mxu0
  %465 = vmatprep.mubr.f32.mxu0 0.0
  %466 = vmatmul.mubr.f32.gmra.mrb[0].mxu0 %v181
  %v467 = vpop.f32.mrb[0].mxu0
  %v468 = vadd.f32 0.0, %v467
  %v469 = vpop.f32.mrb[0].mxu0
  %470 = vmatprep.mubr.f32.mxu0 0.0
  %471 = vmatmul.mubr.f32.gmra.mrb[0].mxu0 %v182
  %v472 = vpop.f32.mrb[0].mxu0
  %v473 = vadd.f32 0.0, %v472
  %v474 = vpop.f32.mrb[0].mxu0
  %475 = vmatprep.mubr.f32.mxu0 0.0
  %476 = vmatmul.mubr.f32.gmra.mrb[0].mxu0 %v183
  %v477 = vpop.f32.mrb[0].mxu0
  %v478 = vadd.f32 0.0, %v477
  %v479 = vpop.f32.mrb[0].mxu0
  %480 = vmatprep.mubr.f32.mxu0 0.0
  %481 = vmatmul.mubr.f32.gmra.mrb[0].mxu0 %v184
  %v482 = vpop.f32.mrb[0].mxu0
  %v483 = vadd.f32 0.0, %v482
  %v484 = vpop.f32.mrb[0].mxu0
  %485 = vmatprep.mubr.f32.mxu0 0.0
  %486 = vmatmul.mubr.f32.gmra.mrb[0].mxu0 %v185
  %v487 = vpop.f32.mrb[0].mxu0
  %v488 = vadd.f32 0.0, %v487
  %v489 = vpop.f32.mrb[0].mxu0
  %490 = vmatprep.mubr.f32.mxu0 0.0
  %491 = vmatmul.mubr.f32.gmra.mrb[0].mxu0 %v186
  %v492 = vpop.f32.mrb[0].mxu0
  %v493 = vadd.f32 0.0, %v492
  %v494 = vpop.f32.mrb[0].mxu0
  %495 = vmatprep.mubr.f32.mxu0 0.0
  %496 = vmatmul.mubr.f32.gmra.mrb[0].mxu0 %v187
  %v497 = vpop.f32.mrb[0].mxu0
  %v498 = vadd.f32 0.0, %v497
  %v499 = vpop.f32.mrb[0].mxu0
  %500 = vmatprep.mubr.f32.mxu0 0.0
  %501 = vmatmul.mubr.f32.gmra.mrb[0].mxu0 %v188
  %v502 = vpop.f32.mrb[0].mxu0
  %v503 = vadd.f32 0.0, %v502
  %v504 = vpop.f32.mrb[0].mxu0
  %505 = vmatprep.mubr.f32.mxu0 0.0
  %506 = vmatmul.mubr.f32.gmra.mrb[0].mxu0 %v189
  %v507 = vpop.f32.mrb[0].mxu0
  %v508 = vadd.f32 0.0, %v507
  %v509 = vpop.f32.mrb[0].mxu0
  %510 = vmatprep.mubr.f32.mxu0 0.0
  %511 = vmatmul.mubr.f32.gmra.mrb[0].mxu0 %v190
  %v512 = vpop.f32.mrb[0].mxu0
  %v513 = vadd.f32 0.0, %v512
  %v514 = vpop.f32.mrb[0].mxu0
  %515 = vmatprep.mubr.f32.mxu0 0.0
  %516 = vmatmul.mubr.f32.gmra.mrb[0].mxu0 %v191
  %v517 = vpop.f32.mrb[0].mxu0
  %v518 = vadd.f32 0.0, %v517
  %v519 = vpop.f32.mrb[0].mxu0
  %520 = vmatprep.mubr.f32.mxu0 0.0
  %521 = vmatmul.mubr.f32.gmra.mrb[0].mxu0 %v192
  %v522 = vpop.f32.mrb[0].mxu0
  %v523 = vadd.f32 0.0, %v522
  %v524 = vpop.f32.mrb[0].mxu0
  %525 = vmatprep.mubr.f32.mxu0 0.0
  %526 = vmatmul.mubr.f32.gmra.mrb[0].mxu0 %v193
  %v527 = vpop.f32.mrb[0].mxu0
  %v528 = vadd.f32 0.0, %v527
  %v529 = vpop.f32.mrb[0].mxu0
  %530 = vmatprep.mubr.f32.mxu0 0.0
  %531 = vmatmul.mubr.f32.gmra.mrb[0].mxu0 %v194
  %v532 = vpop.f32.mrb[0].mxu0
  %v533 = vadd.f32 0.0, %v532
  %v534 = vpop.f32.mrb[0].mxu0
  %535 = vmatprep.mubr.f32.mxu0 0.0
  %536 = vmatmul.mubr.f32.gmra.mrb[0].mxu0 %v195
  %v537 = vpop.f32.mrb[0].mxu0
  %v538 = vadd.f32 0.0, %v537
  %v539 = vpop.f32.mrb[0].mxu0
  %540 = vmatprep.mubr.f32.mxu0 0.0
  %541 = vmatmul.mubr.f32.gmra.mrb[0].mxu0 %v196
  %v542 = vpop.f32.mrb[0].mxu0
  %v543 = vadd.f32 0.0, %v542
  %v544 = vpop.f32.mrb[0].mxu0
  %545 = vmatprep.mubr.f32.mxu0 0.0
  %546 = vmatmul.mubr.f32.gmra.mrb[0].mxu0 %v197
  %v547 = vpop.f32.mrb[0].mxu0
  %v548 = vadd.f32 0.0, %v547
  %v549 = vpop.f32.mrb[0].mxu0
  %550 = vmatprep.mubr.f32.mxu0 0.0
  %551 = vmatmul.mubr.f32.gmra.mrb[0].mxu0 %v198
  %v552 = vpop.f32.mrb[0].mxu0
  %v553 = vadd.f32 0.0, %v552
  %v554 = vpop.f32.mrb[0].mxu0
  %555 = vmatprep.mubr.f32.mxu0 0.0
  %556 = vmatmul.mubr.f32.gmra.mrb[0].mxu0 %v199
  %v557 = vpop.f32.mrb[0].mxu0
  %v558 = vadd.f32 0.0, %v557
  %v559 = vpop.f32.mrb[0].mxu0
  %560 = vmatprep.mubr.f32.mxu0 0.0
  %561 = vmatmul.mubr.f32.gmra.mrb[0].mxu0 %v200
  %v562 = vpop.f32.mrb[0].mxu0
  %v563 = vadd.f32 0.0, %v562
  %v564 = vpop.f32.mrb[0].mxu0
  %565 = vmatprep.mubr.f32.mxu0 0.0
  %566 = vmatmul.mubr.f32.gmra.mrb[0].mxu0 %v201
  %v567 = vpop.f32.mrb[0].mxu0
  %v568 = vadd.f32 0.0, %v567
  %v569 = vpop.f32.mrb[0].mxu0
  %570 = vmatprep.mubr.f32.mxu0 0.0
  %571 = vmatmul.mubr.f32.gmra.mrb[0].mxu0 %v202
  %v572 = vpop.f32.mrb[0].mxu0
  %v573 = vadd.f32 0.0, %v572
  %v574 = vpop.f32.mrb[0].mxu0
  %575 = vmatprep.mubr.f32.mxu0 0.0
  %576 = vmatmul.mubr.f32.gmra.mrb[0].mxu0 %v203
  %v577 = vpop.f32.mrb[0].mxu0
  %v578 = vadd.f32 0.0, %v577
  %v579 = vpop.f32.mrb[0].mxu0
  %580 = vmatprep.mubr.f32.mxu0 0.0
  %581 = vmatmul.mubr.f32.gmra.mrb[0].mxu0 %v204
  %v582 = vpop.f32.mrb[0].mxu0
  %v583 = vadd.f32 0.0, %v582
  %v584 = vpop.f32.mrb[0].mxu0
  %585 = vmatprep.mubr.f32.mxu0 0.0
  %586 = vmatmul.mubr.f32.gmra.mrb[0].mxu0 %v205
  %v587 = vpop.f32.mrb[0].mxu0
  %v588 = vadd.f32 0.0, %v587
  %v589 = vpop.f32.mrb[0].mxu0
  %590 = vmatprep.mubr.f32.mxu0 0.0
  %591 = vmatmul.mubr.f32.gmra.mrb[0].mxu0 %v206
  %v592 = vpop.f32.mrb[0].mxu0
  %v593 = vadd.f32 0.0, %v592
  %v594 = vpop.f32.mrb[0].mxu0
  %595 = vmatprep.mubr.f32.mxu0 0.0
  %596 = vmatmul.mubr.f32.gmra.mrb[0].mxu0 %v207
  %v597 = vpop.f32.mrb[0].mxu0
  %v598 = vadd.f32 0.0, %v597
  %v599 = vpop.f32.mrb[0].mxu0
  %600 = vmatprep.mubr.f32.mxu0 0.0
  %601 = vmatmul.mubr.f32.gmra.mrb[0].mxu0 %v208
  %v602 = vpop.f32.mrb[0].mxu0
  %v603 = vadd.f32 0.0, %v602
  %v604 = vpop.f32.mrb[0].mxu0
  %605 = vmatprep.mubr.f32.mxu0 0.0
  %606 = vmatmul.mubr.f32.gmra.mrb[0].mxu0 %v209
  %v607 = vpop.f32.mrb[0].mxu0
  %v608 = vadd.f32 0.0, %v607
  %v609 = vpop.f32.mrb[0].mxu0
  %610 = vdwg.mxu0
  %v611 = vadd.f32 %v82, %v293
  %v612 = vadd.f32 %v83, %v298
  %v613 = vadd.f32 %v84, %v303
  %v614 = vadd.f32 %v85, %v308
  %v615 = vadd.f32 %v86, %v313
  %v616 = vadd.f32 %v87, %v318
  %v617 = vadd.f32 %v88, %v323
  %v618 = vadd.f32 %v89, %v328
  %v619 = vadd.f32 %v90, %v333
  %v620 = vadd.f32 %v91, %v338
  %v621 = vadd.f32 %v92, %v343
  %v622 = vadd.f32 %v93, %v348
  %v623 = vadd.f32 %v94, %v353
  %v624 = vadd.f32 %v95, %v358
  %v625 = vadd.f32 %v96, %v363
  %v626 = vadd.f32 %v97, %v368
  %v627 = vadd.f32 %v98, %v373
  %v628 = vadd.f32 %v99, %v378
  %v629 = vadd.f32 %v100, %v383
  %v630 = vadd.f32 %v101, %v388
  %v631 = vadd.f32 %v102, %v393
  %v632 = vadd.f32 %v103, %v398
  %v633 = vadd.f32 %v104, %v403
  %v634 = vadd.f32 %v105, %v408
  %v635 = vadd.f32 %v106, %v413
  %v636 = vadd.f32 %v107, %v418
  %v637 = vadd.f32 %v108, %v423
  %v638 = vadd.f32 %v109, %v428
  %v639 = vadd.f32 %v110, %v433
  %v640 = vadd.f32 %v111, %v438
  %v641 = vadd.f32 %v112, %v443
  %v642 = vadd.f32 %v113, %v448
  %v643 = vadd.f32 %v114, %v453
  %v644 = vadd.f32 %v115, %v458
  %v645 = vadd.f32 %v116, %v463
  %v646 = vadd.f32 %v117, %v468
  %v647 = vadd.f32 %v118, %v473
  %v648 = vadd.f32 %v119, %v478
  %v649 = vadd.f32 %v120, %v483
  %v650 = vadd.f32 %v121, %v488
  %v651 = vadd.f32 %v122, %v493
  %v652 = vadd.f32 %v123, %v498
  %v653 = vadd.f32 %v124, %v503
  %v654 = vadd.f32 %v125, %v508
  %v655 = vadd.f32 %v126, %v513
  %v656 = vadd.f32 %v127, %v518
  %v657 = vadd.f32 %v128, %v523
  %v658 = vadd.f32 %v129, %v528
  %v659 = vadd.f32 %v130, %v533
  %v660 = vadd.f32 %v131, %v538
  %v661 = vadd.f32 %v132, %v543
  %v662 = vadd.f32 %v133, %v548
  %v663 = vadd.f32 %v134, %v553
  %v664 = vadd.f32 %v135, %v558
  %v665 = vadd.f32 %v136, %v563
  %v666 = vadd.f32 %v137, %v568
  %v667 = vadd.f32 %v138, %v573
  %v668 = vadd.f32 %v139, %v578
  %v669 = vadd.f32 %v140, %v583
  %v670 = vadd.f32 %v141, %v588
  %v671 = vadd.f32 %v142, %v593
  %v672 = vadd.f32 %v143, %v598
  %v673 = vadd.f32 %v144, %v603
  %v674 = vadd.f32 %v145, %v608
  %675 = vst [vmem:[#allocation2] sm:$0xff] %v611
  %676 = vst [vmem:[#allocation2 + $0x8] sm:$0xff] %v612
  %677 = vst [vmem:[#allocation2 + $0x10] sm:$0xff] %v613
  %678 = vst [vmem:[#allocation2 + $0x18] sm:$0xff] %v614
  %679 = vst [vmem:[#allocation2 + $0x20] sm:$0xff] %v615
  %680 = vst [vmem:[#allocation2 + $0x28] sm:$0xff] %v616
  %681 = vst [vmem:[#allocation2 + $0x30] sm:$0xff] %v617
  %682 = vst [vmem:[#allocation2 + $0x38] sm:$0xff] %v618
  %683 = vst [vmem:[#allocation2 + $0x40] sm:$0xff] %v619
  %684 = vst [vmem:[#allocation2 + $0x48] sm:$0xff] %v620
  %685 = vst [vmem:[#allocation2 + $0x50] sm:$0xff] %v621
  %686 = vst [vmem:[#allocation2 + $0x58] sm:$0xff] %v622
  %687 = vst [vmem:[#allocation2 + $0x60] sm:$0xff] %v623
  %688 = vst [vmem:[#allocation2 + $0x68] sm:$0xff] %v624
  %689 = vst [vmem:[#allocation2 + $0x70] sm:$0xff] %v625
  %690 = vst [vmem:[#allocation2 + $0x78] sm:$0xff] %v626
  %691 = vst [vmem:[#allocation2 + $0x80] sm:$0xff] %v627
  %692 = vst [vmem:[#allocation2 + $0x88] sm:$0xff] %v628
  %693 = vst [vmem:[#allocation2 + $0x90] sm:$0xff] %v629
  %694 = vst [vmem:[#allocation2 + $0x98] sm:$0xff] %v630
  %695 = vst [vmem:[#allocation2 + $0xa0] sm:$0xff] %v631
  %696 = vst [vmem:[#allocation2 + $0xa8] sm:$0xff] %v632
  %697 = vst [vmem:[#allocation2 + $0xb0] sm:$0xff] %v633
  %698 = vst [vmem:[#allocation2 + $0xb8] sm:$0xff] %v634
  %699 = vst [vmem:[#allocation2 + $0xc0] sm:$0xff] %v635
  %700 = vst [vmem:[#allocation2 + $0xc8] sm:$0xff] %v636
  %701 = vst [vmem:[#allocation2 + $0xd0] sm:$0xff] %v637
  %702 = vst [vmem:[#allocation2 + $0xd8] sm:$0xff] %v638
  %703 = vst [vmem:[#allocation2 + $0xe0] sm:$0xff] %v639
  %704 = vst [vmem:[#allocation2 + $0xe8] sm:$0xff] %v640
  %705 = vst [vmem:[#allocation2 + $0xf0] sm:$0xff] %v641
  %706 = vst [vmem:[#allocation2 + $0xf8] sm:$0xff] %v642
  %707 = vst [vmem:[#allocation2 + $0x100] sm:$0xff] %v643
  %708 = vst [vmem:[#allocation2 + $0x108] sm:$0xff] %v644
  %709 = vst [vmem:[#allocation2 + $0x110] sm:$0xff] %v645
  %710 = vst [vmem:[#allocation2 + $0x118] sm:$0xff] %v646
  %711 = vst [vmem:[#allocation2 + $0x120] sm:$0xff] %v647
  %712 = vst [vmem:[#allocation2 + $0x128] sm:$0xff] %v648
  %713 = vst [vmem:[#allocation2 + $0x130] sm:$0xff] %v649
  %714 = vst [vmem:[#allocation2 + $0x138] sm:$0xff] %v650
  %715 = vst [vmem:[#allocation2 + $0x140] sm:$0xff] %v651
  %716 = vst [vmem:[#allocation2 + $0x148] sm:$0xff] %v652
  %717 = vst [vmem:[#allocation2 + $0x150] sm:$0xff] %v653
  %718 = vst [vmem:[#allocation2 + $0x158] sm:$0xff] %v654
  %719 = vst [vmem:[#allocation2 + $0x160] sm:$0xff] %v655
  %720 = vst [vmem:[#allocation2 + $0x168] sm:$0xff] %v656
  %721 = vst [vmem:[#allocation2 + $0x170] sm:$0xff] %v657
  %722 = vst [vmem:[#allocation2 + $0x178] sm:$0xff] %v658
  %723 = vst [vmem:[#allocation2 + $0x180] sm:$0xff] %v659
  %724 = vst [vmem:[#allocation2 + $0x188] sm:$0xff] %v660
  %725 = vst [vmem:[#allocation2 + $0x190] sm:$0xff] %v661
  %726 = vst [vmem:[#allocation2 + $0x198] sm:$0xff] %v662
  %727 = vst [vmem:[#allocation2 + $0x1a0] sm:$0xff] %v663
  %728 = vst [vmem:[#allocation2 + $0x1a8] sm:$0xff] %v664
  %729 = vst [vmem:[#allocation2 + $0x1b0] sm:$0xff] %v665
  %730 = vst [vmem:[#allocation2 + $0x1b8] sm:$0xff] %v666
  %731 = vst [vmem:[#allocation2 + $0x1c0] sm:$0xff] %v667
  %732 = vst [vmem:[#allocation2 + $0x1c8] sm:$0xff] %v668
  %733 = vst [vmem:[#allocation2 + $0x1d0] sm:$0xff] %v669
  %734 = vst [vmem:[#allocation2 + $0x1d8] sm:$0xff] %v670
  %735 = vst [vmem:[#allocation2 + $0x1e0] sm:$0xff] %v671
  %736 = vst [vmem:[#allocation2 + $0x1e8] sm:$0xff] %v672
  %737 = vst [vmem:[#allocation2 + $0x1f0] sm:$0xff] %v673
  %738 = vst [vmem:[#allocation2 + $0x1f8] sm:$0xff] %v674
  // Predicated region
  $region18: #{forward_pallas.5} parent=0 // pred_check
    %p739 = pneg %p14
  $region19: #{forward_pallas.5} parent=0 // pred_check_branch
    %741 = sbr.rel (%p739) target = $region21
  $region20: #{forward_pallas.5} parent=0 // pred_region
    %v742 = vld [vmem:[#allocation2] sm:$0xff]
    %v743 = vld [vmem:[#allocation2 + $0x8] sm:$0xff]
    %v744 = vld [vmem:[#allocation2 + $0x10] sm:$0xff]
    %v745 = vld [vmem:[#allocation2 + $0x18] sm:$0xff]
    %v746 = vld [vmem:[#allocation2 + $0x20] sm:$0xff]
    %v747 = vld [vmem:[#allocation2 + $0x28] sm:$0xff]
    %v748 = vld [vmem:[#allocation2 + $0x30] sm:$0xff]
    %v749 = vld [vmem:[#allocation2 + $0x38] sm:$0xff]
    %v750 = vld [vmem:[#allocation2 + $0x40] sm:$0xff]
    %v751 = vld [vmem:[#allocation2 + $0x48] sm:$0xff]
    %v752 = vld [vmem:[#allocation2 + $0x50] sm:$0xff]
    %v753 = vld [vmem:[#allocation2 + $0x58] sm:$0xff]
    %v754 = vld [vmem:[#allocation2 + $0x60] sm:$0xff]
    %v755 = vld [vmem:[#allocation2 + $0x68] sm:$0xff]
    %v756 = vld [vmem:[#allocation2 + $0x70] sm:$0xff]
    %v757 = vld [vmem:[#allocation2 + $0x78] sm:$0xff]
    %v758 = vld [vmem:[#allocation2 + $0x80] sm:$0xff]
    %v759 = vld [vmem:[#allocation2 + $0x88] sm:$0xff]
    %v760 = vld [vmem:[#allocation2 + $0x90] sm:$0xff]
    %v761 = vld [vmem:[#allocation2 + $0x98] sm:$0xff]
    %v762 = vld [vmem:[#allocation2 + $0xa0] sm:$0xff]
    %v763 = vld [vmem:[#allocation2 + $0xa8] sm:$0xff]
    %v764 = vld [vmem:[#allocation2 + $0xb0] sm:$0xff]
    %v765 = vld [vmem:[#allocation2 + $0xb8] sm:$0xff]
    %v766 = vld [vmem:[#allocation2 + $0xc0] sm:$0xff]
    %v767 = vld [vmem:[#allocation2 + $0xc8] sm:$0xff]
    %v768 = vld [vmem:[#allocation2 + $0xd0] sm:$0xff]
    %v769 = vld [vmem:[#allocation2 + $0xd8] sm:$0xff]
    %v770 = vld [vmem:[#allocation2 + $0xe0] sm:$0xff]
    %v771 = vld [vmem:[#allocation2 + $0xe8] sm:$0xff]
    %v772 = vld [vmem:[#allocation2 + $0xf0] sm:$0xff]
    %v773 = vld [vmem:[#allocation2 + $0xf8] sm:$0xff]
    %v774 = vld [vmem:[#allocation2 + $0x100] sm:$0xff]
    %v775 = vld [vmem:[#allocation2 + $0x108] sm:$0xff]
    %v776 = vld [vmem:[#allocation2 + $0x110] sm:$0xff]
    %v777 = vld [vmem:[#allocation2 + $0x118] sm:$0xff]
    %v778 = vld [vmem:[#allocation2 + $0x120] sm:$0xff]
    %v779 = vld [vmem:[#allocation2 + $0x128] sm:$0xff]
    %v780 = vld [vmem:[#allocation2 + $0x130] sm:$0xff]
    %v781 = vld [vmem:[#allocation2 + $0x138] sm:$0xff]
    %v782 = vld [vmem:[#allocation2 + $0x140] sm:$0xff]
    %v783 = vld [vmem:[#allocation2 + $0x148] sm:$0xff]
    %v784 = vld [vmem:[#allocation2 + $0x150] sm:$0xff]
    %v785 = vld [vmem:[#allocation2 + $0x158] sm:$0xff]
    %v786 = vld [vmem:[#allocation2 + $0x160] sm:$0xff]
    %v787 = vld [vmem:[#allocation2 + $0x168] sm:$0xff]
    %v788 = vld [vmem:[#allocation2 + $0x170] sm:$0xff]
    %v789 = vld [vmem:[#allocation2 + $0x178] sm:$0xff]
    %v790 = vld [vmem:[#allocation2 + $0x180] sm:$0xff]
    %v791 = vld [vmem:[#allocation2 + $0x188] sm:$0xff]
    %v792 = vld [vmem:[#allocation2 + $0x190] sm:$0xff]
    %v793 = vld [vmem:[#allocation2 + $0x198] sm:$0xff]
    %v794 = vld [vmem:[#allocation2 + $0x1a0] sm:$0xff]
    %v795 = vld [vmem:[#allocation2 + $0x1a8] sm:$0xff]
    %v796 = vld [vmem:[#allocation2 + $0x1b0] sm:$0xff]
    %v797 = vld [vmem:[#allocation2 + $0x1b8] sm:$0xff]
    %v798 = vld [vmem:[#allocation2 + $0x1c0] sm:$0xff]
    %v799 = vld [vmem:[#allocation2 + $0x1c8] sm:$0xff]
    %v800 = vld [vmem:[#allocation2 + $0x1d0] sm:$0xff]
    %v801 = vld [vmem:[#allocation2 + $0x1d8] sm:$0xff]
    %v802 = vld [vmem:[#allocation2 + $0x1e0] sm:$0xff]
    %v803 = vld [vmem:[#allocation2 + $0x1e8] sm:$0xff]
    %v804 = vld [vmem:[#allocation2 + $0x1f0] sm:$0xff]
    %v805 = vld [vmem:[#allocation2 + $0x1f8] sm:$0xff]
    %v806 = vld [vmem:[%s2] sm:$0x1]
    %v808 = vlaneseq
    %v809 = vshrl.u32 %v808, 7
    %v810 = vsub.s32 0, %v809
    %v811 = vrot.slane %v806, %v810
    %v813 = vadd.f32 %v742, %v811
    %v814 = vadd.f32 %v743, %v811
    %v815 = vadd.f32 %v744, %v811
    %v816 = vadd.f32 %v745, %v811
    %v817 = vadd.f32 %v746, %v811
    %v818 = vadd.f32 %v747, %v811
    %v819 = vadd.f32 %v748, %v811
    %v820 = vadd.f32 %v749, %v811
    %v821 = vadd.f32 %v750, %v811
    %v822 = vadd.f32 %v751, %v811
    %v823 = vadd.f32 %v752, %v811
    %v824 = vadd.f32 %v753, %v811
    %v825 = vadd.f32 %v754, %v811
    %v826 = vadd.f32 %v755, %v811
    %v827 = vadd.f32 %v756, %v811
    %v828 = vadd.f32 %v757, %v811
    %v829 = vadd.f32 %v758, %v811
    %v830 = vadd.f32 %v759, %v811
    %v831 = vadd.f32 %v760, %v811
    %v832 = vadd.f32 %v761, %v811
    %v833 = vadd.f32 %v762, %v811
    %v834 = vadd.f32 %v763, %v811
    %v835 = vadd.f32 %v764, %v811
    %v836 = vadd.f32 %v765, %v811
    %v837 = vadd.f32 %v766, %v811
    %v838 = vadd.f32 %v767, %v811
    %v839 = vadd.f32 %v768, %v811
    %v840 = vadd.f32 %v769, %v811
    %v841 = vadd.f32 %v770, %v811
    %v842 = vadd.f32 %v771, %v811
    %v843 = vadd.f32 %v772, %v811
    %v844 = vadd.f32 %v773, %v811
    %v845 = vadd.f32 %v774, %v811
    %v846 = vadd.f32 %v775, %v811
    %v847 = vadd.f32 %v776, %v811
    %v848 = vadd.f32 %v777, %v811
    %v849 = vadd.f32 %v778, %v811
    %v850 = vadd.f32 %v779, %v811
    %v851 = vadd.f32 %v780, %v811
    %v852 = vadd.f32 %v781, %v811
    %v853 = vadd.f32 %v782, %v811
    %v854 = vadd.f32 %v783, %v811
    %v855 = vadd.f32 %v784, %v811
    %v856 = vadd.f32 %v785, %v811
    %v857 = vadd.f32 %v786, %v811
    %v858 = vadd.f32 %v787, %v811
    %v859 = vadd.f32 %v788, %v811
    %v860 = vadd.f32 %v789, %v811
    %v861 = vadd.f32 %v790, %v811
    %v862 = vadd.f32 %v791, %v811
    %v863 = vadd.f32 %v792, %v811
    %v864 = vadd.f32 %v793, %v811
    %v865 = vadd.f32 %v794, %v811
    %v866 = vadd.f32 %v795, %v811
    %v867 = vadd.f32 %v796, %v811
    %v868 = vadd.f32 %v797, %v811
    %v869 = vadd.f32 %v798, %v811
    %v870 = vadd.f32 %v799, %v811
    %v871 = vadd.f32 %v800, %v811
    %v872 = vadd.f32 %v801, %v811
    %v873 = vadd.f32 %v802, %v811
    %v874 = vadd.f32 %v803, %v811
    %v875 = vadd.f32 %v804, %v811
    %v876 = vadd.f32 %v805, %v811
    %vm877 = vcmp.ge.f32.partialorder %v813, 0.0
    %vm878 = vcmp.ge.f32.partialorder %v814, 0.0
    %vm879 = vcmp.ge.f32.partialorder %v815, 0.0
    %vm880 = vcmp.ge.f32.partialorder %v816, 0.0
    %vm881 = vcmp.ge.f32.partialorder %v817, 0.0
    %vm882 = vcmp.ge.f32.partialorder %v818, 0.0
    %vm883 = vcmp.ge.f32.partialorder %v819, 0.0
    %vm884 = vcmp.ge.f32.partialorder %v820, 0.0
    %vm885 = vcmp.ge.f32.partialorder %v821, 0.0
    %vm886 = vcmp.ge.f32.partialorder %v822, 0.0
    %vm887 = vcmp.ge.f32.partialorder %v823, 0.0
    %vm888 = vcmp.ge.f32.partialorder %v824, 0.0
    %vm889 = vcmp.ge.f32.partialorder %v825, 0.0
    %vm890 = vcmp.ge.f32.partialorder %v826, 0.0
    %vm891 = vcmp.ge.f32.partialorder %v827, 0.0
    %vm892 = vcmp.ge.f32.partialorder %v828, 0.0
    %vm893 = vcmp.ge.f32.partialorder %v829, 0.0
    %vm894 = vcmp.ge.f32.partialorder %v830, 0.0
    %vm895 = vcmp.ge.f32.partialorder %v831, 0.0
    %vm896 = vcmp.ge.f32.partialorder %v832, 0.0
    %vm897 = vcmp.ge.f32.partialorder %v833, 0.0
    %vm898 = vcmp.ge.f32.partialorder %v834, 0.0
    %vm899 = vcmp.ge.f32.partialorder %v835, 0.0
    %vm900 = vcmp.ge.f32.partialorder %v836, 0.0
    %vm901 = vcmp.ge.f32.partialorder %v837, 0.0
    %vm902 = vcmp.ge.f32.partialorder %v838, 0.0
    %vm903 = vcmp.ge.f32.partialorder %v839, 0.0
    %vm904 = vcmp.ge.f32.partialorder %v840, 0.0
    %vm905 = vcmp.ge.f32.partialorder %v841, 0.0
    %vm906 = vcmp.ge.f32.partialorder %v842, 0.0
    %vm907 = vcmp.ge.f32.partialorder %v843, 0.0
    %vm908 = vcmp.ge.f32.partialorder %v844, 0.0
    %vm909 = vcmp.ge.f32.partialorder %v845, 0.0
    %vm910 = vcmp.ge.f32.partialorder %v846, 0.0
    %vm911 = vcmp.ge.f32.partialorder %v847, 0.0
    %vm912 = vcmp.ge.f32.partialorder %v848, 0.0
    %vm913 = vcmp.ge.f32.partialorder %v849, 0.0
    %vm914 = vcmp.ge.f32.partialorder %v850, 0.0
    %vm915 = vcmp.ge.f32.partialorder %v851, 0.0
    %vm916 = vcmp.ge.f32.partialorder %v852, 0.0
    %vm917 = vcmp.ge.f32.partialorder %v853, 0.0
    %vm918 = vcmp.ge.f32.partialorder %v854, 0.0
    %vm919 = vcmp.ge.f32.partialorder %v855, 0.0
    %vm920 = vcmp.ge.f32.partialorder %v856, 0.0
    %vm921 = vcmp.ge.f32.partialorder %v857, 0.0
    %vm922 = vcmp.ge.f32.partialorder %v858, 0.0
    %vm923 = vcmp.ge.f32.partialorder %v859, 0.0
    %vm924 = vcmp.ge.f32.partialorder %v860, 0.0
    %vm925 = vcmp.ge.f32.partialorder %v861, 0.0
    %vm926 = vcmp.ge.f32.partialorder %v862, 0.0
    %vm927 = vcmp.ge.f32.partialorder %v863, 0.0
    %vm928 = vcmp.ge.f32.partialorder %v864, 0.0
    %vm929 = vcmp.ge.f32.partialorder %v865, 0.0
    %vm930 = vcmp.ge.f32.partialorder %v866, 0.0
    %vm931 = vcmp.ge.f32.partialorder %v867, 0.0
    %vm932 = vcmp.ge.f32.partialorder %v868, 0.0
    %vm933 = vcmp.ge.f32.partialorder %v869, 0.0
    %vm934 = vcmp.ge.f32.partialorder %v870, 0.0
    %vm935 = vcmp.ge.f32.partialorder %v871, 0.0
    %vm936 = vcmp.ge.f32.partialorder %v872, 0.0
    %vm937 = vcmp.ge.f32.partialorder %v873, 0.0
    %vm938 = vcmp.ge.f32.partialorder %v874, 0.0
    %vm939 = vcmp.ge.f32.partialorder %v875, 0.0
    %vm940 = vcmp.ge.f32.partialorder %v876, 0.0
    %v941 = vmul.f32 %v813, 0.2
    %v942 = vmul.f32 %v814, 0.2
    %v943 = vmul.f32 %v815, 0.2
    %v944 = vmul.f32 %v816, 0.2
    %v945 = vmul.f32 %v817, 0.2
    %v946 = vmul.f32 %v818, 0.2
    %v947 = vmul.f32 %v819, 0.2
    %v948 = vmul.f32 %v820, 0.2
    %v949 = vmul.f32 %v821, 0.2
    %v950 = vmul.f32 %v822, 0.2
    %v951 = vmul.f32 %v823, 0.2
    %v952 = vmul.f32 %v824, 0.2
    %v953 = vmul.f32 %v825, 0.2
    %v954 = vmul.f32 %v826, 0.2
    %v955 = vmul.f32 %v827, 0.2
    %v956 = vmul.f32 %v828, 0.2
    %v957 = vmul.f32 %v829, 0.2
    %v958 = vmul.f32 %v830, 0.2
    %v959 = vmul.f32 %v831, 0.2
    %v960 = vmul.f32 %v832, 0.2
    %v961 = vmul.f32 %v833, 0.2
    %v962 = vmul.f32 %v834, 0.2
    %v963 = vmul.f32 %v835, 0.2
    %v964 = vmul.f32 %v836, 0.2
    %v965 = vmul.f32 %v837, 0.2
    %v966 = vmul.f32 %v838, 0.2
    %v967 = vmul.f32 %v839, 0.2
    %v968 = vmul.f32 %v840, 0.2
    %v969 = vmul.f32 %v841, 0.2
    %v970 = vmul.f32 %v842, 0.2
    %v971 = vmul.f32 %v843, 0.2
    %v972 = vmul.f32 %v844, 0.2
    %v973 = vmul.f32 %v845, 0.2
    %v974 = vmul.f32 %v846, 0.2
    %v975 = vmul.f32 %v847, 0.2
    %v976 = vmul.f32 %v848, 0.2
    %v977 = vmul.f32 %v849, 0.2
    %v978 = vmul.f32 %v850, 0.2
    %v979 = vmul.f32 %v851, 0.2
    %v980 = vmul.f32 %v852, 0.2
    %v981 = vmul.f32 %v853, 0.2
    %v982 = vmul.f32 %v854, 0.2
    %v983 = vmul.f32 %v855, 0.2
    %v984 = vmul.f32 %v856, 0.2
    %v985 = vmul.f32 %v857, 0.2
    %v986 = vmul.f32 %v858, 0.2
    %v987 = vmul.f32 %v859, 0.2
    %v988 = vmul.f32 %v860, 0.2
    %v989 = vmul.f32 %v861, 0.2
    %v990 = vmul.f32 %v862, 0.2
    %v991 = vmul.f32 %v863, 0.2
    %v992 = vmul.f32 %v864, 0.2
    %v993 = vmul.f32 %v865, 0.2
    %v994 = vmul.f32 %v866, 0.2
    %v995 = vmul.f32 %v867, 0.2
    %v996 = vmul.f32 %v868, 0.2
    %v997 = vmul.f32 %v869, 0.2
    %v998 = vmul.f32 %v870, 0.2
    %v999 = vmul.f32 %v871, 0.2
    %v1000 = vmul.f32 %v872, 0.2
    %v1001 = vmul.f32 %v873, 0.2
    %v1002 = vmul.f32 %v874, 0.2
    %v1003 = vmul.f32 %v875, 0.2
    %v1004 = vmul.f32 %v876, 0.2
    %v1005 = vsel %vm877, %v813, %v941
    %v1006 = vsel %vm878, %v814, %v942
    %v1007 = vsel %vm879, %v815, %v943
    %v1008 = vsel %vm880, %v816, %v944
    %v1009 = vsel %vm881, %v817, %v945
    %v1010 = vsel %vm882, %v818, %v946
    %v1011 = vsel %vm883, %v819, %v947
    %v1012 = vsel %vm884, %v820, %v948
    %v1013 = vsel %vm885, %v821, %v949
    %v1014 = vsel %vm886, %v822, %v950
    %v1015 = vsel %vm887, %v823, %v951
    %v1016 = vsel %vm888, %v824, %v952
    %v1017 = vsel %vm889, %v825, %v953
    %v1018 = vsel %vm890, %v826, %v954
    %v1019 = vsel %vm891, %v827, %v955
    %v1020 = vsel %vm892, %v828, %v956
    %v1021 = vsel %vm893, %v829, %v957
    %v1022 = vsel %vm894, %v830, %v958
    %v1023 = vsel %vm895, %v831, %v959
    %v1024 = vsel %vm896, %v832, %v960
    %v1025 = vsel %vm897, %v833, %v961
    %v1026 = vsel %vm898, %v834, %v962
    %v1027 = vsel %vm899, %v835, %v963
    %v1028 = vsel %vm900, %v836, %v964
    %v1029 = vsel %vm901, %v837, %v965
    %v1030 = vsel %vm902, %v838, %v966
    %v1031 = vsel %vm903, %v839, %v967
    %v1032 = vsel %vm904, %v840, %v968
    %v1033 = vsel %vm905, %v841, %v969
    %v1034 = vsel %vm906, %v842, %v970
    %v1035 = vsel %vm907, %v843, %v971
    %v1036 = vsel %vm908, %v844, %v972
    %v1037 = vsel %vm909, %v845, %v973
    %v1038 = vsel %vm910, %v846, %v974
    %v1039 = vsel %vm911, %v847, %v975
    %v1040 = vsel %vm912, %v848, %v976
    %v1041 = vsel %vm913, %v849, %v977
    %v1042 = vsel %vm914, %v850, %v978
    %v1043 = vsel %vm915, %v851, %v979
    %v1044 = vsel %vm916, %v852, %v980
    %v1045 = vsel %vm917, %v853, %v981
    %v1046 = vsel %vm918, %v854, %v982
    %v1047 = vsel %vm919, %v855, %v983
    %v1048 = vsel %vm920, %v856, %v984
    %v1049 = vsel %vm921, %v857, %v985
    %v1050 = vsel %vm922, %v858, %v986
    %v1051 = vsel %vm923, %v859, %v987
    %v1052 = vsel %vm924, %v860, %v988
    %v1053 = vsel %vm925, %v861, %v989
    %v1054 = vsel %vm926, %v862, %v990
    %v1055 = vsel %vm927, %v863, %v991
    %v1056 = vsel %vm928, %v864, %v992
    %v1057 = vsel %vm929, %v865, %v993
    %v1058 = vsel %vm930, %v866, %v994
    %v1059 = vsel %vm931, %v867, %v995
    %v1060 = vsel %vm932, %v868, %v996
    %v1061 = vsel %vm933, %v869, %v997
    %v1062 = vsel %vm934, %v870, %v998
    %v1063 = vsel %vm935, %v871, %v999
    %v1064 = vsel %vm936, %v872, %v1000
    %v1065 = vsel %vm937, %v873, %v1001
    %v1066 = vsel %vm938, %v874, %v1002
    %v1067 = vsel %vm939, %v875, %v1003
    %v1068 = vsel %vm940, %v876, %v1004
    %1069 = vst [vmem:[%s3] sm:$0xff] %v1005
    %1070 = vst [vmem:[%s3 + $0x8] sm:$0xff] %v1006
    %1071 = vst [vmem:[%s3 + $0x10] sm:$0xff] %v1007
    %1072 = vst [vmem:[%s3 + $0x18] sm:$0xff] %v1008
    %1073 = vst [vmem:[%s3 + $0x20] sm:$0xff] %v1009
    %1074 = vst [vmem:[%s3 + $0x28] sm:$0xff] %v1010
    %1075 = vst [vmem:[%s3 + $0x30] sm:$0xff] %v1011
    %1076 = vst [vmem:[%s3 + $0x38] sm:$0xff] %v1012
    %1077 = vst [vmem:[%s3 + $0x40] sm:$0xff] %v1013
    %1078 = vst [vmem:[%s3 + $0x48] sm:$0xff] %v1014
    %1079 = vst [vmem:[%s3 + $0x50] sm:$0xff] %v1015
    %1080 = vst [vmem:[%s3 + $0x58] sm:$0xff] %v1016
    %1081 = vst [vmem:[%s3 + $0x60] sm:$0xff] %v1017
    %1082 = vst [vmem:[%s3 + $0x68] sm:$0xff] %v1018
    %1083 = vst [vmem:[%s3 + $0x70] sm:$0xff] %v1019
    %1084 = vst [vmem:[%s3 + $0x78] sm:$0xff] %v1020
    %1085 = vst [vmem:[%s3 + $0x80] sm:$0xff] %v1021
    %1086 = vst [vmem:[%s3 + $0x88] sm:$0xff] %v1022
    %1087 = vst [vmem:[%s3 + $0x90] sm:$0xff] %v1023
    %1088 = vst [vmem:[%s3 + $0x98] sm:$0xff] %v1024
    %1089 = vst [vmem:[%s3 + $0xa0] sm:$0xff] %v1025
    %1090 = vst [vmem:[%s3 + $0xa8] sm:$0xff] %v1026
    %1091 = vst [vmem:[%s3 + $0xb0] sm:$0xff] %v1027
    %1092 = vst [vmem:[%s3 + $0xb8] sm:$0xff] %v1028
    %1093 = vst [vmem:[%s3 + $0xc0] sm:$0xff] %v1029
    %1094 = vst [vmem:[%s3 + $0xc8] sm:$0xff] %v1030
    %1095 = vst [vmem:[%s3 + $0xd0] sm:$0xff] %v1031
    %1096 = vst [vmem:[%s3 + $0xd8] sm:$0xff] %v1032
    %1097 = vst [vmem:[%s3 + $0xe0] sm:$0xff] %v1033
    %1098 = vst [vmem:[%s3 + $0xe8] sm:$0xff] %v1034
    %1099 = vst [vmem:[%s3 + $0xf0] sm:$0xff] %v1035
    %1100 = vst [vmem:[%s3 + $0xf8] sm:$0xff] %v1036
    %1101 = vst [vmem:[%s3 + $0x100] sm:$0xff] %v1037
    %1102 = vst [vmem:[%s3 + $0x108] sm:$0xff] %v1038
    %1103 = vst [vmem:[%s3 + $0x110] sm:$0xff] %v1039
    %1104 = vst [vmem:[%s3 + $0x118] sm:$0xff] %v1040
    %1105 = vst [vmem:[%s3 + $0x120] sm:$0xff] %v1041
    %1106 = vst [vmem:[%s3 + $0x128] sm:$0xff] %v1042
    %1107 = vst [vmem:[%s3 + $0x130] sm:$0xff] %v1043
    %1108 = vst [vmem:[%s3 + $0x138] sm:$0xff] %v1044
    %1109 = vst [vmem:[%s3 + $0x140] sm:$0xff] %v1045
    %1110 = vst [vmem:[%s3 + $0x148] sm:$0xff] %v1046
    %1111 = vst [vmem:[%s3 + $0x150] sm:$0xff] %v1047
    %1112 = vst [vmem:[%s3 + $0x158] sm:$0xff] %v1048
    %1113 = vst [vmem:[%s3 + $0x160] sm:$0xff] %v1049
    %1114 = vst [vmem:[%s3 + $0x168] sm:$0xff] %v1050
    %1115 = vst [vmem:[%s3 + $0x170] sm:$0xff] %v1051
    %1116 = vst [vmem:[%s3 + $0x178] sm:$0xff] %v1052
    %1117 = vst [vmem:[%s3 + $0x180] sm:$0xff] %v1053
    %1118 = vst [vmem:[%s3 + $0x188] sm:$0xff] %v1054
    %1119 = vst [vmem:[%s3 + $0x190] sm:$0xff] %v1055
    %1120 = vst [vmem:[%s3 + $0x198] sm:$0xff] %v1056
    %1121 = vst [vmem:[%s3 + $0x1a0] sm:$0xff] %v1057
    %1122 = vst [vmem:[%s3 + $0x1a8] sm:$0xff] %v1058
    %1123 = vst [vmem:[%s3 + $0x1b0] sm:$0xff] %v1059
    %1124 = vst [vmem:[%s3 + $0x1b8] sm:$0xff] %v1060
    %1125 = vst [vmem:[%s3 + $0x1c0] sm:$0xff] %v1061
    %1126 = vst [vmem:[%s3 + $0x1c8] sm:$0xff] %v1062
    %1127 = vst [vmem:[%s3 + $0x1d0] sm:$0xff] %v1063
    %1128 = vst [vmem:[%s3 + $0x1d8] sm:$0xff] %v1064
    %1129 = vst [vmem:[%s3 + $0x1e0] sm:$0xff] %v1065
    %1130 = vst [vmem:[%s3 + $0x1e8] sm:$0xff] %v1066
    %1131 = vst [vmem:[%s3 + $0x1f0] sm:$0xff] %v1067
    %1132 = vst [vmem:[%s3 + $0x1f8] sm:$0xff] %v1068
  $region21: #{forward_pallas.5} parent=0 // pred_fallthru
    _
  // Predicated region
  $region22: #{forward_pallas.5} parent=0 // pred_check
    _
  $region23: #{forward_pallas.5} parent=0 // pred_check_branch
    %1134 = sbr.rel (0) target = $region25
  $region24: #{forward_pallas.5} parent=0 // pred_region
    _
  $region25: #{forward_pallas.5} parent=0 // pred_fallthru
    _
  // Predicated region
  $region26: #{forward_pallas.5} parent=0 // pred_check
    _
  $region27: #{forward_pallas.5} parent=0 // pred_check_branch
    %1136 = sbr.rel (0) target = $region29
  $region28: #{forward_pallas.5} parent=0 // pred_region
    _
  $region29: #{forward_pallas.5} parent=0 // pred_fallthru
    _

// kernel: forward_pallas.6
$region0: #{forward_pallas.6}
  #allocation0 [shape = 'u32[]', space=smem, size = 0x4, offset = 0x4, fixed_abs, tag = 'smem constant byte address 0x4 - core index']
  #allocation1 [shape = 'u32[144,128]{1,0:T(1,128)}', space=vmem, size = 0x12000, scoped, tag = 'internal scratch']
  #allocation2 [shape = 'f32[64,128]{1,0:T(8,128)}', space=vmem, size = 0x8000, scoped, tag = 'scratch operand']
  %s0 = inlined_call_operand.vmem [shape: f32[2,64,1024], index: 0, kind: input, shape index: {}]
  %s1 = inlined_call_operand.vmem [shape: f32[1024,128], index: 1, kind: input, shape index: {}]
  %s2 = inlined_call_operand.vmem [shape: f32[2,64,128], index: 2, kind: output, shape index: {}]
  %s3 = sld [smem:[#allocation0]]
  $region49: #{forward_pallas.6} parent=0
    _
  %s5 = ssub.s32 1, %s3
  %s6 = scalar_select 0, %s5, %s3
  loop: start=0, step=1, limit=4
  $region2: #{forward_pallas.6} parent=0 // loop_pre_header
    _
  $region3: #{forward_pallas.6} parent=0 // loop_header
    %s8 = sphi 0, %s12
    %p9 = scmp.ge.s32.totalorder %s8, 4
    %s15 = sphi 0, %s27
    %s16 = sphi 0, %s23
    %s17 = sphi 0, %s15
    %s18 = sphi 0, %s16
    %s19 = sphi 0, %s17
    %s20 = sphi 0, %s18
    %s32 = sphi 0, %s34
    %s35 = sphi 0, %s32
    %s36 = sphi 0, %s35
    %s52 = sphi 0, %s36
    %s58 = sphi 0, %s60
    %s61 = sphi 0, %s58
    %s62 = sphi 0, %s61
    %s78 = sphi 0, %s62
    %s84 = sphi 0, %s86
    %s87 = sphi 0, %s84
    %s88 = sphi 0, %s87
    %s104 = sphi 0, %s88
  $region4: #{forward_pallas.6} parent=0 // loop_header_branch
    %11 = sbr.rel (%p9) target = $region8
  $region5: #{forward_pallas.6} parent=0 // loop_body
    %s13 = ssub.s32 %s8, 1
    %s14 = ssub.s32 %s8, 2
    %s21 = sadd.s32 1, %s16
    %p22 = scmp.ge.s32.totalorder %s21, 1
    %s23 = scalar_select %p22, 0, %s21
    %s24 = sadd.s32 1, %s15
    %s25 = scalar_select %p22, %s24, %s15
    %p26 = scmp.ge.s32.totalorder %s25, 2
    %s27 = scalar_select %p26, 0, %s25
    %s28 = ssub.s32 %s15, %s27
    %s29 = ssub.s32 %s16, %s23
    %s30 = sor.u32 %s28, %s29
    %p31 = scmp.eq.s32.totalorder %s30, 0
    %s33 = sadd.s32 %s32, 1
    %s34 = scalar_select %p31, %s32, %s33
    %p37 = pneg %p31
    %p38 = scmp.eq.s32.totalorder %s8, 1
    %p39 = por %p37, %p38
    %p40 = scmp.ne.s32.totalorder %s32, %s35
    %p41 = scmp.eq.s32.totalorder %s8, 0
    %p42 = por %p40, %p41
    %p43 = scmp.ne.s32.totalorder %s32, %s35
    %p44 = scmp.eq.s32.totalorder %s13, 1
    %p45 = por %p43, %p44
    %p46 = scmp.ne.s32.totalorder %s35, %s36
    %p47 = scmp.eq.s32.totalorder %s13, 0
    %p48 = por %p46, %p47
    %p49 = scmp.ne.s32.totalorder %s35, %s36
    %p50 = scmp.eq.s32.totalorder %s14, 1
    %p51 = por %p49, %p50
    %p53 = scmp.ne.s32.totalorder %s36, %s52
    %p54 = scmp.eq.s32.totalorder %s14, 0
    %p55 = por %p53, %p54
    %s56 = ssub.s32 %s16, %s23
    %p57 = scmp.eq.s32.totalorder %s56, 0
    %s59 = sadd.s32 %s58, 1
    %s60 = scalar_select %p57, %s58, %s59
    %p63 = pneg %p57
    %p64 = scmp.eq.s32.totalorder %s8, 1
    %p65 = por %p63, %p64
    %p66 = scmp.ne.s32.totalorder %s58, %s61
    %p67 = scmp.eq.s32.totalorder %s8, 0
    %p68 = por %p66, %p67
    %p69 = scmp.ne.s32.totalorder %s58, %s61
    %p70 = scmp.eq.s32.totalorder %s13, 1
    %p71 = por %p69, %p70
    %p72 = scmp.ne.s32.totalorder %s61, %s62
    %p73 = scmp.eq.s32.totalorder %s13, 0
    %p74 = por %p72, %p73
    %p75 = scmp.ne.s32.totalorder %s61, %s62
    %p76 = scmp.eq.s32.totalorder %s14, 1
    %p77 = por %p75, %p76
    %p79 = scmp.ne.s32.totalorder %s62, %s78
    %p80 = scmp.eq.s32.totalorder %s14, 0
    %p81 = por %p79, %p80
    %s82 = ssub.s32 %s15, %s27
    %p83 = scmp.eq.s32.totalorder %s82, 0
    %s85 = sadd.s32 %s84, 1
    %s86 = scalar_select %p83, %s84, %s85
    %p89 = pneg %p83
    %p90 = scmp.eq.s32.totalorder %s8, 1
    %p91 = por %p89, %p90
    %p92 = scmp.ne.s32.totalorder %s84, %s87
    %p93 = scmp.eq.s32.totalorder %s8, 0
    %p94 = por %p92, %p93
    %p95 = scmp.ne.s32.totalorder %s84, %s87
    %p96 = scmp.eq.s32.totalorder %s13, 1
    %p97 = por %p95, %p96
    %p98 = scmp.ne.s32.totalorder %s87, %s88
    %p99 = scmp.eq.s32.totalorder %s13, 0
    %p100 = por %p98, %p99
    %p101 = scmp.ne.s32.totalorder %s87, %s88
    %p102 = scmp.eq.s32.totalorder %s14, 1
    %p103 = por %p101, %p102
    %p105 = scmp.ne.s32.totalorder %s88, %s104
    %p106 = scmp.eq.s32.totalorder %s14, 0
    %p107 = por %p105, %p106
    %p108 = scmp.le.s32.totalorder 1, %s8
    %p109 = scmp.lt.s32.totalorder %s8, 3
    %p110 = pnand %p108, %p109
    %p111 = pneg %p110
    // Predicated region
    $region9: #{forward_pallas.6} parent=5 // pred_check
      _
    $region10: #{forward_pallas.6} parent=5 // pred_check_branch
      %113 = sbr.rel (%p110) target = $region12
    $region11: #{forward_pallas.6} parent=5 // pred_region
      %s114 = ssub.s32 %s8, 1
      // Predicated region
      $region13: #{forward_pallas.6} parent=11 // pred_check
        %p115 = pneg %p74
      $region14: #{forward_pallas.6} parent=11 // pred_check_branch
        %117 = sbr.rel (%p115) target = $region16
      $region15: #{forward_pallas.6} parent=11 // pred_region
        %s118 = smul.u32 128, %s18
        %p119 = scmp.lt.s32.totalorder %s118, 127
        %s120 = scalar_select %p119, %s118, 127
        %s121 = smul.addr %s120, 8
        %s122 = scalar_lea.vmem %s1, %s121
        %s123 = smul.u32 128, %s18
      $region16: #{forward_pallas.6} parent=11 // pred_fallthru
        _
    $region12: #{forward_pallas.6} parent=5 // pred_fallthru
      _
    %p124 = scmp.lt.s32.totalorder %s8, 2
    // Predicated region
    $region17: #{forward_pallas.6} parent=5 // pred_check
      %p125 = pneg %p124
    $region18: #{forward_pallas.6} parent=5 // pred_check_branch
      %127 = sbr.rel (%p125) target = $region20
    $region19: #{forward_pallas.6} parent=5 // pred_region
      // Predicated region
      $region21: #{forward_pallas.6} parent=19 // pred_check
        %p128 = pneg %p42
      $region22: #{forward_pallas.6} parent=19 // pred_check_branch
        %130 = sbr.rel (%p128) target = $region24
      $region23: #{forward_pallas.6} parent=19 // pred_region
        %s131 = smul.u32 8, %s16
        %p132 = scmp.lt.s32.totalorder %s15, 1
        %s133 = scalar_select %p132, %s15, 1
        %p134 = scmp.lt.s32.totalorder %s131, 7
        %s135 = scalar_select %p134, %s131, 7
        %s136 = smul.addr %s133, 64
        %s137 = sadd.s32 %s135, %s136
        %s138 = smul.addr %s137, 8
        %s139 = scalar_lea.vmem %s0, %s138
        %s140 = smul.u32 8, %s16
      $region24: #{forward_pallas.6} parent=19 // pred_fallthru
        _
    $region20: #{forward_pallas.6} parent=5 // pred_fallthru
      _
    %p141 = scmp.le.s32.totalorder 1, %s8
    %p142 = scmp.lt.s32.totalorder %s8, 3
    %p143 = pnand %p141, %p142
    %p144 = pneg %p143
    // Predicated region
    $region25: #{forward_pallas.6} parent=5 // pred_check
      _
    $region26: #{forward_pallas.6} parent=5 // pred_check_branch
      %146 = sbr.rel (%p143) target = $region28
    $region27: #{forward_pallas.6} parent=5 // pred_region
      %s147 = ssub.s32 %s8, 1
      %s148 = smul.u32 8, %s18
      %p149 = scmp.lt.s32.totalorder %s17, 1
      %s150 = scalar_select %p149, %s17, 1
      %p151 = scmp.lt.s32.totalorder %s148, 7
      %s152 = scalar_select %p151, %s148, 7
      %s153 = smul.addr %s150, 64
      %s154 = sadd.s32 %s152, %s153
      %s155 = smul.addr %s154, 8
      %s156 = scalar_lea.vmem %s0, %s155
      %p157 = pneg %p48
      %p158 = pneg %p45
      %s159 = smul.u32 128, %s18
      %p160 = scmp.lt.s32.totalorder %s159, 127
      %s161 = scalar_select %p160, %s159, 127
      %s162 = smul.addr %s161, 8
      %s163 = scalar_lea.vmem %s1, %s162
      %p164 = pneg %p74
      %p165 = pneg %p71
      %p166 = pneg %p100
      %p167 = pneg %p97
      %p168 = scmp.lt.s32.totalorder %s17, 1
      %s169 = scalar_select %p168, %s17, 1
      %s170 = smul.addr %s169, 8
      %s171 = smul.addr %s170, 8
      %s172 = scalar_lea.vmem %s2, %s171
      %s173 = smul.u32 8, %s18
      %p174 = scmp.lt.s32.totalorder %s17, 1
      %s175 = scalar_select %p174, %s17, 1
      %p176 = scmp.lt.s32.totalorder %s173, 7
      %s177 = scalar_select %p176, %s173, 7
      %s178 = smul.addr %s175, 64
      %s179 = sadd.s32 %s177, %s178
      %s180 = smul.addr %s179, 8
      %s181 = scalar_lea.vmem %s0, %s180
      %s182 = smul.u32 8, %s18
      %s183 = smul.u32 128, %s18
      %p184 = scmp.lt.s32.totalorder %s183, 127
      %s185 = scalar_select %p184, %s183, 127
      %s186 = smul.addr %s185, 8
      %s187 = scalar_lea.vmem %s1, %s186
      %s188 = smul.u32 128, %s18
      %p189 = scmp.lt.s32.totalorder %s17, 1
      %s190 = scalar_select %p189, %s17, 1
      %s191 = smul.addr %s190, 8
      %s192 = smul.addr %s191, 8
      %s193 = scalar_lea.vmem %s2, %s192
      %p194 = scmp.eq.s32.totalorder %s18, 0
      // Predicated region
      $region29: #{forward_pallas.6} parent=27 // pred_check
        %p195 = pneg %p194
      $region30: #{forward_pallas.6} parent=27 // pred_check_branch
        %197 = sbr.rel (%p195) target = $region32
      $region31: #{forward_pallas.6} parent=27 // pred_region
        %198 = vst [vmem:[#allocation2] sm:$0xff] 0.0
        %199 = vst [vmem:[#allocation2 + $0x8] sm:$0xff] 0.0
        %200 = vst [vmem:[#allocation2 + $0x10] sm:$0xff] 0.0
        %201 = vst [vmem:[#allocation2 + $0x18] sm:$0xff] 0.0
        %202 = vst [vmem:[#allocation2 + $0x20] sm:$0xff] 0.0
        %203 = vst [vmem:[#allocation2 + $0x28] sm:$0xff] 0.0
        %204 = vst [vmem:[#allocation2 + $0x30] sm:$0xff] 0.0
        %205 = vst [vmem:[#allocation2 + $0x38] sm:$0xff] 0.0
      $region32: #{forward_pallas.6} parent=27 // pred_fallthru
        _
      %v206 = vld [vmem:[#allocation2] sm:$0xff]
      %v207 = vld [vmem:[#allocation2 + $0x8] sm:$0xff]
      %v208 = vld [vmem:[#allocation2 + $0x10] sm:$0xff]
      %v209 = vld [vmem:[#allocation2 + $0x18] sm:$0xff]
      %v210 = vld [vmem:[#allocation2 + $0x20] sm:$0xff]
      %v211 = vld [vmem:[#allocation2 + $0x28] sm:$0xff]
      %v212 = vld [vmem:[#allocation2 + $0x30] sm:$0xff]
      %v213 = vld [vmem:[#allocation2 + $0x38] sm:$0xff]
      %v214 = vld [vmem:[%s181] sm:$0xff]
      %v215 = vld [vmem:[%s181 + $0x8] sm:$0xff]
      %v216 = vld [vmem:[%s181 + $0x10] sm:$0xff]
      %v217 = vld [vmem:[%s181 + $0x18] sm:$0xff]
      %v218 = vld [vmem:[%s181 + $0x20] sm:$0xff]
      %v219 = vld [vmem:[%s181 + $0x28] sm:$0xff]
      %v220 = vld [vmem:[%s181 + $0x30] sm:$0xff]
      %v221 = vld [vmem:[%s181 + $0x38] sm:$0xff]
      %v222 = vld [vmem:[%s181 + $0x40] sm:$0xff]
      %v223 = vld [vmem:[%s181 + $0x48] sm:$0xff]
      %v224 = vld [vmem:[%s181 + $0x50] sm:$0xff]
      %v225 = vld [vmem:[%s181 + $0x58] sm:$0xff]
      %v226 = vld [vmem:[%s181 + $0x60] sm:$0xff]
      %v227 = vld [vmem:[%s181 + $0x68] sm:$0xff]
      %v228 = vld [vmem:[%s181 + $0x70] sm:$0xff]
      %v229 = vld [vmem:[%s181 + $0x78] sm:$0xff]
      %v230 = vld [vmem:[%s181 + $0x80] sm:$0xff]
      %v231 = vld [vmem:[%s181 + $0x88] sm:$0xff]
      %v232 = vld [vmem:[%s181 + $0x90] sm:$0xff]
      %v233 = vld [vmem:[%s181 + $0x98] sm:$0xff]
      %v234 = vld [vmem:[%s181 + $0xa0] sm:$0xff]
      %v235 = vld [vmem:[%s181 + $0xa8] sm:$0xff]
      %v236 = vld [vmem:[%s181 + $0xb0] sm:$0xff]
      %v237 = vld [vmem:[%s181 + $0xb8] sm:$0xff]
      %v238 = vld [vmem:[%s181 + $0xc0] sm:$0xff]
      %v239 = vld [vmem:[%s181 + $0xc8] sm:$0xff]
      %v240 = vld [vmem:[%s181 + $0xd0] sm:$0xff]
      %v241 = vld [vmem:[%s181 + $0xd8] sm:$0xff]
      %v242 = vld [vmem:[%s181 + $0xe0] sm:$0xff]
      %v243 = vld [vmem:[%s181 + $0xe8] sm:$0xff]
      %v244 = vld [vmem:[%s181 + $0xf0] sm:$0xff]
      %v245 = vld [vmem:[%s181 + $0xf8] sm:$0xff]
      %v246 = vld [vmem:[%s181 + $0x100] sm:$0xff]
      %v247 = vld [vmem:[%s181 + $0x108] sm:$0xff]
      %v248 = vld [vmem:[%s181 + $0x110] sm:$0xff]
      %v249 = vld [vmem:[%s181 + $0x118] sm:$0xff]
      %v250 = vld [vmem:[%s181 + $0x120] sm:$0xff]
      %v251 = vld [vmem:[%s181 + $0x128] sm:$0xff]
      %v252 = vld [vmem:[%s181 + $0x130] sm:$0xff]
      %v253 = vld [vmem:[%s181 + $0x138] sm:$0xff]
      %v254 = vld [vmem:[%s181 + $0x140] sm:$0xff]
      %v255 = vld [vmem:[%s181 + $0x148] sm:$0xff]
      %v256 = vld [vmem:[%s181 + $0x150] sm:$0xff]
      %v257 = vld [vmem:[%s181 + $0x158] sm:$0xff]
      %v258 = vld [vmem:[%s181 + $0x160] sm:$0xff]
      %v259 = vld [vmem:[%s181 + $0x168] sm:$0xff]
      %v260 = vld [vmem:[%s181 + $0x170] sm:$0xff]
      %v261 = vld [vmem:[%s181 + $0x178] sm:$0xff]
      %v262 = vld [vmem:[%s181 + $0x180] sm:$0xff]
      %v263 = vld [vmem:[%s181 + $0x188] sm:$0xff]
      %v264 = vld [vmem:[%s181 + $0x190] sm:$0xff]
      %v265 = vld [vmem:[%s181 + $0x198] sm:$0xff]
      %v266 = vld [vmem:[%s181 + $0x1a0] sm:$0xff]
      %v267 = vld [vmem:[%s181 + $0x1a8] sm:$0xff]
      %v268 = vld [vmem:[%s181 + $0x1b0] sm:$0xff]
      %v269 = vld [vmem:[%s181 + $0x1b8] sm:$0xff]
      %v270 = vld [vmem:[%s181 + $0x1c0] sm:$0xff]
      %v271 = vld [vmem:[%s181 + $0x1c8] sm:$0xff]
      %v272 = vld [vmem:[%s181 + $0x1d0] sm:$0xff]
      %v273 = vld [vmem:[%s181 + $0x1d8] sm:$0xff]
      %v274 = vld [vmem:[%s181 + $0x1e0] sm:$0xff]
      %v275 = vld [vmem:[%s181 + $0x1e8] sm:$0xff]
      %v276 = vld [vmem:[%s181 + $0x1f0] sm:$0xff]
      %v277 = vld [vmem:[%s181 + $0x1f8] sm:$0xff]
      %v278 = vld [vmem:[%s187] sm:$0xff]
      %v279 = vld [vmem:[%s187 + $0x8] sm:$0xff]
      %v280 = vld [vmem:[%s187 + $0x10] sm:$0xff]
      %v281 = vld [vmem:[%s187 + $0x18] sm:$0xff]
      %v282 = vld [vmem:[%s187 + $0x20] sm:$0xff]
      %v283 = vld [vmem:[%s187 + $0x28] sm:$0xff]
      %v284 = vld [vmem:[%s187 + $0x30] sm:$0xff]
      %v285 = vld [vmem:[%s187 + $0x38] sm:$0xff]
      %v286 = vld [vmem:[%s187 + $0x40] sm:$0xff]
      %v287 = vld [vmem:[%s187 + $0x48] sm:$0xff]
      %v288 = vld [vmem:[%s187 + $0x50] sm:$0xff]
      %v289 = vld [vmem:[%s187 + $0x58] sm:$0xff]
      %v290 = vld [vmem:[%s187 + $0x60] sm:$0xff]
      %v291 = vld [vmem:[%s187 + $0x68] sm:$0xff]
      %v292 = vld [vmem:[%s187 + $0x70] sm:$0xff]
      %v293 = vld [vmem:[%s187 + $0x78] sm:$0xff]
      %v294 = vld [vmem:[%s187 + $0x80] sm:$0xff]
      %v295 = vld [vmem:[%s187 + $0x88] sm:$0xff]
      %v296 = vld [vmem:[%s187 + $0x90] sm:$0xff]
      %v297 = vld [vmem:[%s187 + $0x98] sm:$0xff]
      %v298 = vld [vmem:[%s187 + $0xa0] sm:$0xff]
      %v299 = vld [vmem:[%s187 + $0xa8] sm:$0xff]
      %v300 = vld [vmem:[%s187 + $0xb0] sm:$0xff]
      %v301 = vld [vmem:[%s187 + $0xb8] sm:$0xff]
      %v302 = vld [vmem:[%s187 + $0xc0] sm:$0xff]
      %v303 = vld [vmem:[%s187 + $0xc8] sm:$0xff]
      %v304 = vld [vmem:[%s187 + $0xd0] sm:$0xff]
      %v305 = vld [vmem:[%s187 + $0xd8] sm:$0xff]
      %v306 = vld [vmem:[%s187 + $0xe0] sm:$0xff]
      %v307 = vld [vmem:[%s187 + $0xe8] sm:$0xff]
      %v308 = vld [vmem:[%s187 + $0xf0] sm:$0xff]
      %v309 = vld [vmem:[%s187 + $0xf8] sm:$0xff]
      %v310 = vld [vmem:[%s187 + $0x100] sm:$0xff]
      %v311 = vld [vmem:[%s187 + $0x108] sm:$0xff]
      %v312 = vld [vmem:[%s187 + $0x110] sm:$0xff]
      %v313 = vld [vmem:[%s187 + $0x118] sm:$0xff]
      %v314 = vld [vmem:[%s187 + $0x120] sm:$0xff]
      %v315 = vld [vmem:[%s187 + $0x128] sm:$0xff]
      %v316 = vld [vmem:[%s187 + $0x130] sm:$0xff]
      %v317 = vld [vmem:[%s187 + $0x138] sm:$0xff]
      %v318 = vld [vmem:[%s187 + $0x140] sm:$0xff]
      %v319 = vld [vmem:[%s187 + $0x148] sm:$0xff]
      %v320 = vld [vmem:[%s187 + $0x150] sm:$0xff]
      %v321 = vld [vmem:[%s187 + $0x158] sm:$0xff]
      %v322 = vld [vmem:[%s187 + $0x160] sm:$0xff]
      %v323 = vld [vmem:[%s187 + $0x168] sm:$0xff]
      %v324 = vld [vmem:[%s187 + $0x170] sm:$0xff]
      %v325 = vld [vmem:[%s187 + $0x178] sm:$0xff]
      %v326 = vld [vmem:[%s187 + $0x180] sm:$0xff]
      %v327 = vld [vmem:[%s187 + $0x188] sm:$0xff]
      %v328 = vld [vmem:[%s187 + $0x190] sm:$0xff]
      %v329 = vld [vmem:[%s187 + $0x198] sm:$0xff]
      %v330 = vld [vmem:[%s187 + $0x1a0] sm:$0xff]
      %v331 = vld [vmem:[%s187 + $0x1a8] sm:$0xff]
      %v332 = vld [vmem:[%s187 + $0x1b0] sm:$0xff]
      %v333 = vld [vmem:[%s187 + $0x1b8] sm:$0xff]
      %v334 = vld [vmem:[%s187 + $0x1c0] sm:$0xff]
      %v335 = vld [vmem:[%s187 + $0x1c8] sm:$0xff]
      %v336 = vld [vmem:[%s187 + $0x1d0] sm:$0xff]
      %v337 = vld [vmem:[%s187 + $0x1d8] sm:$0xff]
      %v338 = vld [vmem:[%s187 + $0x1e0] sm:$0xff]
      %v339 = vld [vmem:[%s187 + $0x1e8] sm:$0xff]
      %v340 = vld [vmem:[%s187 + $0x1f0] sm:$0xff]
      %v341 = vld [vmem:[%s187 + $0x1f8] sm:$0xff]
      %v342 = vld [vmem:[%s187 + $0x200] sm:$0xff]
      %v343 = vld [vmem:[%s187 + $0x208] sm:$0xff]
      %v344 = vld [vmem:[%s187 + $0x210] sm:$0xff]
      %v345 = vld [vmem:[%s187 + $0x218] sm:$0xff]
      %v346 = vld [vmem:[%s187 + $0x220] sm:$0xff]
      %v347 = vld [vmem:[%s187 + $0x228] sm:$0xff]
      %v348 = vld [vmem:[%s187 + $0x230] sm:$0xff]
      %v349 = vld [vmem:[%s187 + $0x238] sm:$0xff]
      %v350 = vld [vmem:[%s187 + $0x240] sm:$0xff]
      %v351 = vld [vmem:[%s187 + $0x248] sm:$0xff]
      %v352 = vld [vmem:[%s187 + $0x250] sm:$0xff]
      %v353 = vld [vmem:[%s187 + $0x258] sm:$0xff]
      %v354 = vld [vmem:[%s187 + $0x260] sm:$0xff]
      %v355 = vld [vmem:[%s187 + $0x268] sm:$0xff]
      %v356 = vld [vmem:[%s187 + $0x270] sm:$0xff]
      %v357 = vld [vmem:[%s187 + $0x278] sm:$0xff]
      %v358 = vld [vmem:[%s187 + $0x280] sm:$0xff]
      %v359 = vld [vmem:[%s187 + $0x288] sm:$0xff]
      %v360 = vld [vmem:[%s187 + $0x290] sm:$0xff]
      %v361 = vld [vmem:[%s187 + $0x298] sm:$0xff]
      %v362 = vld [vmem:[%s187 + $0x2a0] sm:$0xff]
      %v363 = vld [vmem:[%s187 + $0x2a8] sm:$0xff]
      %v364 = vld [vmem:[%s187 + $0x2b0] sm:$0xff]
      %v365 = vld [vmem:[%s187 + $0x2b8] sm:$0xff]
      %v366 = vld [vmem:[%s187 + $0x2c0] sm:$0xff]
      %v367 = vld [vmem:[%s187 + $0x2c8] sm:$0xff]
      %v368 = vld [vmem:[%s187 + $0x2d0] sm:$0xff]
      %v369 = vld [vmem:[%s187 + $0x2d8] sm:$0xff]
      %v370 = vld [vmem:[%s187 + $0x2e0] sm:$0xff]
      %v371 = vld [vmem:[%s187 + $0x2e8] sm:$0xff]
      %v372 = vld [vmem:[%s187 + $0x2f0] sm:$0xff]
      %v373 = vld [vmem:[%s187 + $0x2f8] sm:$0xff]
      %v374 = vld [vmem:[%s187 + $0x300] sm:$0xff]
      %v375 = vld [vmem:[%s187 + $0x308] sm:$0xff]
      %v376 = vld [vmem:[%s187 + $0x310] sm:$0xff]
      %v377 = vld [vmem:[%s187 + $0x318] sm:$0xff]
      %v378 = vld [vmem:[%s187 + $0x320] sm:$0xff]
      %v379 = vld [vmem:[%s187 + $0x328] sm:$0xff]
      %v380 = vld [vmem:[%s187 + $0x330] sm:$0xff]
      %v381 = vld [vmem:[%s187 + $0x338] sm:$0xff]
      %v382 = vld [vmem:[%s187 + $0x340] sm:$0xff]
      %v383 = vld [vmem:[%s187 + $0x348] sm:$0xff]
      %v384 = vld [vmem:[%s187 + $0x350] sm:$0xff]
      %v385 = vld [vmem:[%s187 + $0x358] sm:$0xff]
      %v386 = vld [vmem:[%s187 + $0x360] sm:$0xff]
      %v387 = vld [vmem:[%s187 + $0x368] sm:$0xff]
      %v388 = vld [vmem:[%s187 + $0x370] sm:$0xff]
      %v389 = vld [vmem:[%s187 + $0x378] sm:$0xff]
      %v390 = vld [vmem:[%s187 + $0x380] sm:$0xff]
      %v391 = vld [vmem:[%s187 + $0x388] sm:$0xff]
      %v392 = vld [vmem:[%s187 + $0x390] sm:$0xff]
      %v393 = vld [vmem:[%s187 + $0x398] sm:$0xff]
      %v394 = vld [vmem:[%s187 + $0x3a0] sm:$0xff]
      %v395 = vld [vmem:[%s187 + $0x3a8] sm:$0xff]
      %v396 = vld [vmem:[%s187 + $0x3b0] sm:$0xff]
      %v397 = vld [vmem:[%s187 + $0x3b8] sm:$0xff]
      %v398 = vld [vmem:[%s187 + $0x3c0] sm:$0xff]
      %v399 = vld [vmem:[%s187 + $0x3c8] sm:$0xff]
      %v400 = vld [vmem:[%s187 + $0x3d0] sm:$0xff]
      %v401 = vld [vmem:[%s187 + $0x3d8] sm:$0xff]
      %v402 = vld [vmem:[%s187 + $0x3e0] sm:$0xff]
      %v403 = vld [vmem:[%s187 + $0x3e8] sm:$0xff]
      %v404 = vld [vmem:[%s187 + $0x3f0] sm:$0xff]
      %v405 = vld [vmem:[%s187 + $0x3f8] sm:$0xff]
      %406 = vmatprep.subr.mxu0 0.0
      %407 = vmatpush1.msra.mxu0 %v278
      %408 = vmatprep.subr.mxu0 0.0
      %409 = vmatpush1.msra.mxu0 %v279
      %410 = vmatprep.subr.mxu0 0.0
      %411 = vmatpush1.msra.mxu0 %v280
      %412 = vmatprep.subr.mxu0 0.0
      %413 = vmatpush1.msra.mxu0 %v281
      %414 = vmatprep.subr.mxu0 0.0
      %415 = vmatpush1.msra.mxu0 %v282
      %416 = vmatprep.subr.mxu0 0.0
      %417 = vmatpush1.msra.mxu0 %v283
      %418 = vmatprep.subr.mxu0 0.0
      %419 = vmatpush1.msra.mxu0 %v284
      %420 = vmatprep.subr.mxu0 0.0
      %421 = vmatpush1.msra.mxu0 %v285
      %422 = vmatprep.subr.mxu0 0.0
      %423 = vmatpush1.msra.mxu0 %v286
      %424 = vmatprep.subr.mxu0 0.0
      %425 = vmatpush1.msra.mxu0 %v287
      %426 = vmatprep.subr.mxu0 0.0
      %427 = vmatpush1.msra.mxu0 %v288
      %428 = vmatprep.subr.mxu0 0.0
      %429 = vmatpush1.msra.mxu0 %v289
      %430 = vmatprep.subr.mxu0 0.0
      %431 = vmatpush1.msra.mxu0 %v290
      %432 = vmatprep.subr.mxu0 0.0
      %433 = vmatpush1.msra.mxu0 %v291
      %434 = vmatprep.subr.mxu0 0.0
      %435 = vmatpush1.msra.mxu0 %v292
      %436 = vmatprep.subr.mxu0 0.0
      %437 = vmatpush1.msra.mxu0 %v293
      %438 = vmatprep.subr.mxu0 0.0
      %439 = vmatpush1.msra.mxu0 %v294
      %440 = vmatprep.subr.mxu0 0.0
      %441 = vmatpush1.msra.mxu0 %v295
      %442 = vmatprep.subr.mxu0 0.0
      %443 = vmatpush1.msra.mxu0 %v296
      %444 = vmatprep.subr.mxu0 0.0
      %445 = vmatpush1.msra.mxu0 %v297
      %446 = vmatprep.subr.mxu0 0.0
      %447 = vmatpush1.msra.mxu0 %v298
      %448 = vmatprep.subr.mxu0 0.0
      %449 = vmatpush1.msra.mxu0 %v299
      %450 = vmatprep.subr.mxu0 0.0
      %451 = vmatpush1.msra.mxu0 %v300
      %452 = vmatprep.subr.mxu0 0.0
      %453 = vmatpush1.msra.mxu0 %v301
      %454 = vmatprep.subr.mxu0 0.0
      %455 = vmatpush1.msra.mxu0 %v302
      %456 = vmatprep.subr.mxu0 0.0
      %457 = vmatpush1.msra.mxu0 %v303
      %458 = vmatprep.subr.mxu0 0.0
      %459 = vmatpush1.msra.mxu0 %v304
      %460 = vmatprep.subr.mxu0 0.0
      %461 = vmatpush1.msra.mxu0 %v305
      %462 = vmatprep.subr.mxu0 0.0
      %463 = vmatpush1.msra.mxu0 %v306
      %464 = vmatprep.subr.mxu0 0.0
      %465 = vmatpush1.msra.mxu0 %v307
      %466 = vmatprep.subr.mxu0 0.0
      %467 = vmatpush1.msra.mxu0 %v308
      %468 = vmatprep.subr.mxu0 0.0
      %469 = vmatpush1.msra.mxu0 %v309
      %470 = vmatprep.mubr.f32.mxu0 %v215
      %471 = vmatmul.mubr.f32.gmra.mrb[0].mxu0 %v214
      %v472 = vpop.f32.mrb[0].mxu0
      %v473 = vadd.f32 0.0, %v472
      %v474 = vpop.f32.mrb[0].mxu0
      %475 = vmatprep.mubr.f32.mxu0 %v223
      %476 = vmatmul.mubr.f32.gmra.mrb[0].mxu0 %v222
      %v477 = vpop.f32.mrb[0].mxu0
      %v478 = vadd.f32 0.0, %v477
      %v479 = vpop.f32.mrb[0].mxu0
      %480 = vmatprep.mubr.f32.mxu0 %v231
      %481 = vmatmul.mubr.f32.gmra.mrb[0].mxu0 %v230
      %v482 = vpop.f32.mrb[0].mxu0
      %v483 = vadd.f32 0.0, %v482
      %v484 = vpop.f32.mrb[0].mxu0
      %485 = vmatprep.mubr.f32.mxu0 %v239
      %486 = vmatmul.mubr.f32.gmra.mrb[0].mxu0 %v238
      %v487 = vpop.f32.mrb[0].mxu0
      %v488 = vadd.f32 0.0, %v487
      %v489 = vpop.f32.mrb[0].mxu0
      %490 = vmatprep.mubr.f32.mxu0 %v247
      %491 = vmatmul.mubr.f32.gmra.mrb[0].mxu0 %v246
      %v492 = vpop.f32.mrb[0].mxu0
      %v493 = vadd.f32 0.0, %v492
      %v494 = vpop.f32.mrb[0].mxu0
      %495 = vmatprep.mubr.f32.mxu0 %v255
      %496 = vmatmul.mubr.f32.gmra.mrb[0].mxu0 %v254
      %v497 = vpop.f32.mrb[0].mxu0
      %v498 = vadd.f32 0.0, %v497
      %v499 = vpop.f32.mrb[0].mxu0
      %500 = vmatprep.mubr.f32.mxu0 %v263
      %501 = vmatmul.mubr.f32.gmra.mrb[0].mxu0 %v262
      %v502 = vpop.f32.mrb[0].mxu0
      %v503 = vadd.f32 0.0, %v502
      %v504 = vpop.f32.mrb[0].mxu0
      %505 = vmatprep.mubr.f32.mxu0 %v271
      %506 = vmatmul.mubr.f32.gmra.mrb[0].mxu0 %v270
      %v507 = vpop.f32.mrb[0].mxu0
      %v508 = vadd.f32 0.0, %v507
      %v509 = vpop.f32.mrb[0].mxu0
      %510 = vdwg.mxu0
      %511 = vmatprep.subr.mxu0 0.0
      %512 = vmatpush1.msra.mxu0 %v310
      %513 = vmatprep.subr.mxu0 0.0
      %514 = vmatpush1.msra.mxu0 %v311
      %515 = vmatprep.subr.mxu0 0.0
      %516 = vmatpush1.msra.mxu0 %v312
      %517 = vmatprep.subr.mxu0 0.0
      %518 = vmatpush1.msra.mxu0 %v313
      %519 = vmatprep.subr.mxu0 0.0
      %520 = vmatpush1.msra.mxu0 %v314
      %521 = vmatprep.subr.mxu0 0.0
      %522 = vmatpush1.msra.mxu0 %v315
      %523 = vmatprep.subr.mxu0 0.0
      %524 = vmatpush1.msra.mxu0 %v316
      %525 = vmatprep.subr.mxu0 0.0
      %526 = vmatpush1.msra.mxu0 %v317
      %527 = vmatprep.subr.mxu0 0.0
      %528 = vmatpush1.msra.mxu0 %v318
      %529 = vmatprep.subr.mxu0 0.0
      %530 = vmatpush1.msra.mxu0 %v319
      %531 = vmatprep.subr.mxu0 0.0
      %532 = vmatpush1.msra.mxu0 %v320
      %533 = vmatprep.subr.mxu0 0.0
      %534 = vmatpush1.msra.mxu0 %v321
      %535 = vmatprep.subr.mxu0 0.0
      %536 = vmatpush1.msra.mxu0 %v322
      %537 = vmatprep.subr.mxu0 0.0
      %538 = vmatpush1.msra.mxu0 %v323
      %539 = vmatprep.subr.mxu0 0.0
      %540 = vmatpush1.msra.mxu0 %v324
      %541 = vmatprep.subr.mxu0 0.0
      %542 = vmatpush1.msra.mxu0 %v325
      %543 = vmatprep.subr.mxu0 0.0
      %544 = vmatpush1.msra.mxu0 %v326
      %545 = vmatprep.subr.mxu0 0.0
      %546 = vmatpush1.msra.mxu0 %v327
      %547 = vmatprep.subr.mxu0 0.0
      %548 = vmatpush1.msra.mxu0 %v328
      %549 = vmatprep.subr.mxu0 0.0
      %550 = vmatpush1.msra.mxu0 %v329
      %551 = vmatprep.subr.mxu0 0.0
      %552 = vmatpush1.msra.mxu0 %v330
      %553 = vmatprep.subr.mxu0 0.0
      %554 = vmatpush1.msra.mxu0 %v331
      %555 = vmatprep.subr.mxu0 0.0
      %556 = vmatpush1.msra.mxu0 %v332
      %557 = vmatprep.subr.mxu0 0.0
      %558 = vmatpush1.msra.mxu0 %v333
      %559 = vmatprep.subr.mxu0 0.0
      %560 = vmatpush1.msra.mxu0 %v334
      %561 = vmatprep.subr.mxu0 0.0
      %562 = vmatpush1.msra.mxu0 %v335
      %563 = vmatprep.subr.mxu0 0.0
      %564 = vmatpush1.msra.mxu0 %v336
      %565 = vmatprep.subr.mxu0 0.0
      %566 = vmatpush1.msra.mxu0 %v337
      %567 = vmatprep.subr.mxu0 0.0
      %568 = vmatpush1.msra.mxu0 %v338
      %569 = vmatprep.subr.mxu0 0.0
      %570 = vmatpush1.msra.mxu0 %v339
      %571 = vmatprep.subr.mxu0 0.0
      %572 = vmatpush1.msra.mxu0 %v340
      %573 = vmatprep.subr.mxu0 0.0
      %574 = vmatpush1.msra.mxu0 %v341
      %575 = vmatprep.mubr.f32.mxu0 %v217
      %576 = vmatmul.mubr.f32.gmra.mrb[0].mxu0 %v216
      %v577 = vpop.f32.mrb[0].mxu0
      %v578 = vadd.f32 %v473, %v577
      %v579 = vpop.f32.mrb[0].mxu0
      %580 = vmatprep.mubr.f32.mxu0 %v225
      %581 = vmatmul.mubr.f32.gmra.mrb[0].mxu0 %v224
      %v582 = vpop.f32.mrb[0].mxu0
      %v583 = vadd.f32 %v478, %v582
      %v584 = vpop.f32.mrb[0].mxu0
      %585 = vmatprep.mubr.f32.mxu0 %v233
      %586 = vmatmul.mubr.f32.gmra.mrb[0].mxu0 %v232
      %v587 = vpop.f32.mrb[0].mxu0
      %v588 = vadd.f32 %v483, %v587
      %v589 = vpop.f32.mrb[0].mxu0
      %590 = vmatprep.mubr.f32.mxu0 %v241
      %591 = vmatmul.mubr.f32.gmra.mrb[0].mxu0 %v240
      %v592 = vpop.f32.mrb[0].mxu0
      %v593 = vadd.f32 %v488, %v592
      %v594 = vpop.f32.mrb[0].mxu0
      %595 = vmatprep.mubr.f32.mxu0 %v249
      %596 = vmatmul.mubr.f32.gmra.mrb[0].mxu0 %v248
      %v597 = vpop.f32.mrb[0].mxu0
      %v598 = vadd.f32 %v493, %v597
      %v599 = vpop.f32.mrb[0].mxu0
      %600 = vmatprep.mubr.f32.mxu0 %v257
      %601 = vmatmul.mubr.f32.gmra.mrb[0].mxu0 %v256
      %v602 = vpop.f32.mrb[0].mxu0
      %v603 = vadd.f32 %v498, %v602
      %v604 = vpop.f32.mrb[0].mxu0
      %605 = vmatprep.mubr.f32.mxu0 %v265
      %606 = vmatmul.mubr.f32.gmra.mrb[0].mxu0 %v264
      %v607 = vpop.f32.mrb[0].mxu0
      %v608 = vadd.f32 %v503, %v607
      %v609 = vpop.f32.mrb[0].mxu0
      %610 = vmatprep.mubr.f32.mxu0 %v273
      %611 = vmatmul.mubr.f32.gmra.mrb[0].mxu0 %v272
      %v612 = vpop.f32.mrb[0].mxu0
      %v613 = vadd.f32 %v508, %v612
      %v614 = vpop.f32.mrb[0].mxu0
      %615 = vdwg.mxu0
      %616 = vmatprep.subr.mxu0 0.0
      %617 = vmatpush1.msra.mxu0 %v342
      %618 = vmatprep.subr.mxu0 0.0
      %619 = vmatpush1.msra.mxu0 %v343
      %620 = vmatprep.subr.mxu0 0.0
      %621 = vmatpush1.msra.mxu0 %v344
      %622 = vmatprep.subr.mxu0 0.0
      %623 = vmatpush1.msra.mxu0 %v345
      %624 = vmatprep.subr.mxu0 0.0
      %625 = vmatpush1.msra.mxu0 %v346
      %626 = vmatprep.subr.mxu0 0.0
      %627 = vmatpush1.msra.mxu0 %v347
      %628 = vmatprep.subr.mxu0 0.0
      %629 = vmatpush1.msra.mxu0 %v348
      %630 = vmatprep.subr.mxu0 0.0
      %631 = vmatpush1.msra.mxu0 %v349
      %632 = vmatprep.subr.mxu0 0.0
      %633 = vmatpush1.msra.mxu0 %v350
      %634 = vmatprep.subr.mxu0 0.0
      %635 = vmatpush1.msra.mxu0 %v351
      %636 = vmatprep.subr.mxu0 0.0
      %637 = vmatpush1.msra.mxu0 %v352
      %638 = vmatprep.subr.mxu0 0.0
      %639 = vmatpush1.msra.mxu0 %v353
      %640 = vmatprep.subr.mxu0 0.0
      %641 = vmatpush1.msra.mxu0 %v354
      %642 = vmatprep.subr.mxu0 0.0
      %643 = vmatpush1.msra.mxu0 %v355
      %644 = vmatprep.subr.mxu0 0.0
      %645 = vmatpush1.msra.mxu0 %v356
      %646 = vmatprep.subr.mxu0 0.0
      %647 = vmatpush1.msra.mxu0 %v357
      %648 = vmatprep.subr.mxu0 0.0
      %649 = vmatpush1.msra.mxu0 %v358
      %650 = vmatprep.subr.mxu0 0.0
      %651 = vmatpush1.msra.mxu0 %v359
      %652 = vmatprep.subr.mxu0 0.0
      %653 = vmatpush1.msra.mxu0 %v360
      %654 = vmatprep.subr.mxu0 0.0
      %655 = vmatpush1.msra.mxu0 %v361
      %656 = vmatprep.subr.mxu0 0.0
      %657 = vmatpush1.msra.mxu0 %v362
      %658 = vmatprep.subr.mxu0 0.0
      %659 = vmatpush1.msra.mxu0 %v363
      %660 = vmatprep.subr.mxu0 0.0
      %661 = vmatpush1.msra.mxu0 %v364
      %662 = vmatprep.subr.mxu0 0.0
      %663 = vmatpush1.msra.mxu0 %v365
      %664 = vmatprep.subr.mxu0 0.0
      %665 = vmatpush1.msra.mxu0 %v366
      %666 = vmatprep.subr.mxu0 0.0
      %667 = vmatpush1.msra.mxu0 %v367
      %668 = vmatprep.subr.mxu0 0.0
      %669 = vmatpush1.msra.mxu0 %v368
      %670 = vmatprep.subr.mxu0 0.0
      %671 = vmatpush1.msra.mxu0 %v369
      %672 = vmatprep.subr.mxu0 0.0
      %673 = vmatpush1.msra.mxu0 %v370
      %674 = vmatprep.subr.mxu0 0.0
      %675 = vmatpush1.msra.mxu0 %v371
      %676 = vmatprep.subr.mxu0 0.0
      %677 = vmatpush1.msra.mxu0 %v372
      %678 = vmatprep.subr.mxu0 0.0
      %679 = vmatpush1.msra.mxu0 %v373
      %680 = vmatprep.mubr.f32.mxu0 %v219
      %681 = vmatmul.mubr.f32.gmra.mrb[0].mxu0 %v218
      %v682 = vpop.f32.mrb[0].mxu0
      %v683 = vadd.f32 %v578, %v682
      %v684 = vpop.f32.mrb[0].mxu0
      %685 = vmatprep.mubr.f32.mxu0 %v227
      %686 = vmatmul.mubr.f32.gmra.mrb[0].mxu0 %v226
      %v687 = vpop.f32.mrb[0].mxu0
      %v688 = vadd.f32 %v583, %v687
      %v689 = vpop.f32.mrb[0].mxu0
      %690 = vmatprep.mubr.f32.mxu0 %v235
      %691 = vmatmul.mubr.f32.gmra.mrb[0].mxu0 %v234
      %v692 = vpop.f32.mrb[0].mxu0
      %v693 = vadd.f32 %v588, %v692
      %v694 = vpop.f32.mrb[0].mxu0
      %695 = vmatprep.mubr.f32.mxu0 %v243
      %696 = vmatmul.mubr.f32.gmra.mrb[0].mxu0 %v242
      %v697 = vpop.f32.mrb[0].mxu0
      %v698 = vadd.f32 %v593, %v697
      %v699 = vpop.f32.mrb[0].mxu0
      %700 = vmatprep.mubr.f32.mxu0 %v251
      %701 = vmatmul.mubr.f32.gmra.mrb[0].mxu0 %v250
      %v702 = vpop.f32.mrb[0].mxu0
      %v703 = vadd.f32 %v598, %v702
      %v704 = vpop.f32.mrb[0].mxu0
      %705 = vmatprep.mubr.f32.mxu0 %v259
      %706 = vmatmul.mubr.f32.gmra.mrb[0].mxu0 %v258
      %v707 = vpop.f32.mrb[0].mxu0
      %v708 = vadd.f32 %v603, %v707
      %v709 = vpop.f32.mrb[0].mxu0
      %710 = vmatprep.mubr.f32.mxu0 %v267
      %711 = vmatmul.mubr.f32.gmra.mrb[0].mxu0 %v266
      %v712 = vpop.f32.mrb[0].mxu0
      %v713 = vadd.f32 %v608, %v712
      %v714 = vpop.f32.mrb[0].mxu0
      %715 = vmatprep.mubr.f32.mxu0 %v275
      %716 = vmatmul.mubr.f32.gmra.mrb[0].mxu0 %v274
      %v717 = vpop.f32.mrb[0].mxu0
      %v718 = vadd.f32 %v613, %v717
      %v719 = vpop.f32.mrb[0].mxu0
      %720 = vdwg.mxu0
      %721 = vmatprep.subr.mxu0 0.0
      %722 = vmatpush1.msra.mxu0 %v374
      %723 = vmatprep.subr.mxu0 0.0
      %724 = vmatpush1.msra.mxu0 %v375
      %725 = vmatprep.subr.mxu0 0.0
      %726 = vmatpush1.msra.mxu0 %v376
      %727 = vmatprep.subr.mxu0 0.0
      %728 = vmatpush1.msra.mxu0 %v377
      %729 = vmatprep.subr.mxu0 0.0
      %730 = vmatpush1.msra.mxu0 %v378
      %731 = vmatprep.subr.mxu0 0.0
      %732 = vmatpush1.msra.mxu0 %v379
      %733 = vmatprep.subr.mxu0 0.0
      %734 = vmatpush1.msra.mxu0 %v380
      %735 = vmatprep.subr.mxu0 0.0
      %736 = vmatpush1.msra.mxu0 %v381
      %737 = vmatprep.subr.mxu0 0.0
      %738 = vmatpush1.msra.mxu0 %v382
      %739 = vmatprep.subr.mxu0 0.0
      %740 = vmatpush1.msra.mxu0 %v383
      %741 = vmatprep.subr.mxu0 0.0
      %742 = vmatpush1.msra.mxu0 %v384
      %743 = vmatprep.subr.mxu0 0.0
      %744 = vmatpush1.msra.mxu0 %v385
      %745 = vmatprep.subr.mxu0 0.0
      %746 = vmatpush1.msra.mxu0 %v386
      %747 = vmatprep.subr.mxu0 0.0
      %748 = vmatpush1.msra.mxu0 %v387
      %749 = vmatprep.subr.mxu0 0.0
      %750 = vmatpush1.msra.mxu0 %v388
      %751 = vmatprep.subr.mxu0 0.0
      %752 = vmatpush1.msra.mxu0 %v389
      %753 = vmatprep.subr.mxu0 0.0
      %754 = vmatpush1.msra.mxu0 %v390
      %755 = vmatprep.subr.mxu0 0.0
      %756 = vmatpush1.msra.mxu0 %v391
      %757 = vmatprep.subr.mxu0 0.0
      %758 = vmatpush1.msra.mxu0 %v392
      %759 = vmatprep.subr.mxu0 0.0
      %760 = vmatpush1.msra.mxu0 %v393
      %761 = vmatprep.subr.mxu0 0.0
      %762 = vmatpush1.msra.mxu0 %v394
      %763 = vmatprep.subr.mxu0 0.0
      %764 = vmatpush1.msra.mxu0 %v395
      %765 = vmatprep.subr.mxu0 0.0
      %766 = vmatpush1.msra.mxu0 %v396
      %767 = vmatprep.subr.mxu0 0.0
      %768 = vmatpush1.msra.mxu0 %v397
      %769 = vmatprep.subr.mxu0 0.0
      %770 = vmatpush1.msra.mxu0 %v398
      %771 = vmatprep.subr.mxu0 0.0
      %772 = vmatpush1.msra.mxu0 %v399
      %773 = vmatprep.subr.mxu0 0.0
      %774 = vmatpush1.msra.mxu0 %v400
      %775 = vmatprep.subr.mxu0 0.0
      %776 = vmatpush1.msra.mxu0 %v401
      %777 = vmatprep.subr.mxu0 0.0
      %778 = vmatpush1.msra.mxu0 %v402
      %779 = vmatprep.subr.mxu0 0.0
      %780 = vmatpush1.msra.mxu0 %v403
      %781 = vmatprep.subr.mxu0 0.0
      %782 = vmatpush1.msra.mxu0 %v404
      %783 = vmatprep.subr.mxu0 0.0
      %784 = vmatpush1.msra.mxu0 %v405
      %785 = vmatprep.mubr.f32.mxu0 %v221
      %786 = vmatmul.mubr.f32.gmra.mrb[0].mxu0 %v220
      %v787 = vpop.f32.mrb[0].mxu0
      %v788 = vadd.f32 %v683, %v787
      %v789 = vpop.f32.mrb[0].mxu0
      %790 = vmatprep.mubr.f32.mxu0 %v229
      %791 = vmatmul.mubr.f32.gmra.mrb[0].mxu0 %v228
      %v792 = vpop.f32.mrb[0].mxu0
      %v793 = vadd.f32 %v688, %v792
      %v794 = vpop.f32.mrb[0].mxu0
      %795 = vmatprep.mubr.f32.mxu0 %v237
      %796 = vmatmul.mubr.f32.gmra.mrb[0].mxu0 %v236
      %v797 = vpop.f32.mrb[0].mxu0
      %v798 = vadd.f32 %v693, %v797
      %v799 = vpop.f32.mrb[0].mxu0
      %800 = vmatprep.mubr.f32.mxu0 %v245
      %801 = vmatmul.mubr.f32.gmra.mrb[0].mxu0 %v244
      %v802 = vpop.f32.mrb[0].mxu0
      %v803 = vadd.f32 %v698, %v802
      %v804 = vpop.f32.mrb[0].mxu0
      %805 = vmatprep.mubr.f32.mxu0 %v253
      %806 = vmatmul.mubr.f32.gmra.mrb[0].mxu0 %v252
      %v807 = vpop.f32.mrb[0].mxu0
      %v808 = vadd.f32 %v703, %v807
      %v809 = vpop.f32.mrb[0].mxu0
      %810 = vmatprep.mubr.f32.mxu0 %v261
      %811 = vmatmul.mubr.f32.gmra.mrb[0].mxu0 %v260
      %v812 = vpop.f32.mrb[0].mxu0
      %v813 = vadd.f32 %v708, %v812
      %v814 = vpop.f32.mrb[0].mxu0
      %815 = vmatprep.mubr.f32.mxu0 %v269
      %816 = vmatmul.mubr.f32.gmra.mrb[0].mxu0 %v268
      %v817 = vpop.f32.mrb[0].mxu0
      %v818 = vadd.f32 %v713, %v817
      %v819 = vpop.f32.mrb[0].mxu0
      %820 = vmatprep.mubr.f32.mxu0 %v277
      %821 = vmatmul.mubr.f32.gmra.mrb[0].mxu0 %v276
      %v822 = vpop.f32.mrb[0].mxu0
      %v823 = vadd.f32 %v718, %v822
      %v824 = vpop.f32.mrb[0].mxu0
      %825 = vdwg.mxu0
      %v826 = vadd.f32 %v206, %v788
      %v827 = vadd.f32 %v207, %v793
      %v828 = vadd.f32 %v208, %v798
      %v829 = vadd.f32 %v209, %v803
      %v830 = vadd.f32 %v210, %v808
      %v831 = vadd.f32 %v211, %v813
      %v832 = vadd.f32 %v212, %v818
      %v833 = vadd.f32 %v213, %v823
      %834 = vst [vmem:[#allocation2] sm:$0xff] %v826
      %835 = vst [vmem:[#allocation2 + $0x8] sm:$0xff] %v827
      %836 = vst [vmem:[#allocation2 + $0x10] sm:$0xff] %v828
      %837 = vst [vmem:[#allocation2 + $0x18] sm:$0xff] %v829
      %838 = vst [vmem:[#allocation2 + $0x20] sm:$0xff] %v830
      %839 = vst [vmem:[#allocation2 + $0x28] sm:$0xff] %v831
      %840 = vst [vmem:[#allocation2 + $0x30] sm:$0xff] %v832
      %841 = vst [vmem:[#allocation2 + $0x38] sm:$0xff] %v833
      // Predicated region
      $region33: #{forward_pallas.6} parent=27 // pred_check
        %p842 = pneg %p194
      $region34: #{forward_pallas.6} parent=27 // pred_check_branch
        %844 = sbr.rel (%p842) target = $region36
      $region35: #{forward_pallas.6} parent=27 // pred_region
        %v845 = vld [vmem:[#allocation2] sm:$0xff]
        %v846 = vld [vmem:[#allocation2 + $0x8] sm:$0xff]
        %v847 = vld [vmem:[#allocation2 + $0x10] sm:$0xff]
        %v848 = vld [vmem:[#allocation2 + $0x18] sm:$0xff]
        %v849 = vld [vmem:[#allocation2 + $0x20] sm:$0xff]
        %v850 = vld [vmem:[#allocation2 + $0x28] sm:$0xff]
        %v851 = vld [vmem:[#allocation2 + $0x30] sm:$0xff]
        %v852 = vld [vmem:[#allocation2 + $0x38] sm:$0xff]
        %v853 = vadd.f32 %v845, %v846
        %v854 = vadd.f32 %v853, %v847
        %v855 = vadd.f32 %v854, %v848
        %v856 = vadd.f32 %v855, %v849
        %v857 = vadd.f32 %v856, %v850
        %v858 = vadd.f32 %v857, %v851
        %v859 = vadd.f32 %v858, %v852
        %v860 = vrot.slane %v859, 4
        %v861 = vadd.f32 %v859, %v860
        %v862 = vrot.slane %v861, 2
        %v863 = vadd.f32 %v861, %v862
        %v864 = vrot.slane %v863, 1
        %v865 = vadd.f32 %v863, %v864
        %v866 = vmul.f32 %v865, 0.015625
        %v867 = vsub.f32 %v845, %v866
        %v868 = vsub.f32 %v846, %v866
        %v869 = vsub.f32 %v847, %v866
        %v870 = vsub.f32 %v848, %v866
        %v871 = vsub.f32 %v849, %v866
        %v872 = vsub.f32 %v850, %v866
        %v873 = vsub.f32 %v851, %v866
        %v874 = vsub.f32 %v852, %v866
        %v875 = vmul.f32 %v867, %v867
        %v876 = vmul.f32 %v868, %v868
        %v877 = vmul.f32 %v869, %v869
        %v878 = vmul.f32 %v870, %v870
        %v879 = vmul.f32 %v871, %v871
        %v880 = vmul.f32 %v872, %v872
        %v881 = vmul.f32 %v873, %v873
        %v882 = vmul.f32 %v874, %v874
        %v883 = vadd.f32 %v875, %v876
        %v884 = vadd.f32 %v883, %v877
        %v885 = vadd.f32 %v884, %v878
        %v886 = vadd.f32 %v885, %v879
        %v887 = vadd.f32 %v886, %v880
        %v888 = vadd.f32 %v887, %v881
        %v889 = vadd.f32 %v888, %v882
        %v890 = vrot.slane %v889, 4
        %v891 = vadd.f32 %v889, %v890
        %v892 = vrot.slane %v891, 2
        %v893 = vadd.f32 %v891, %v892
        %v894 = vrot.slane %v893, 1
        %v895 = vadd.f32 %v893, %v894
        %v896 = vmul.f32 %v895, 0.015625
        %v897 = vadd.f32 %v896, 1e-05
        %v898 = vrsqrt.pop %v897
        %v899 = vmul.f32 %v867, %v898
        %v900 = vmul.f32 %v868, %v898
        %v901 = vmul.f32 %v869, %v898
        %v902 = vmul.f32 %v870, %v898
        %v903 = vmul.f32 %v871, %v898
        %v904 = vmul.f32 %v872, %v898
        %v905 = vmul.f32 %v873, %v898
        %v906 = vmul.f32 %v874, %v898
        %vm907 = vcmp.ge.f32.partialorder %v899, 0.0
        %vm908 = vcmp.ge.f32.partialorder %v900, 0.0
        %vm909 = vcmp.ge.f32.partialorder %v901, 0.0
        %vm910 = vcmp.ge.f32.partialorder %v902, 0.0
        %vm911 = vcmp.ge.f32.partialorder %v903, 0.0
        %vm912 = vcmp.ge.f32.partialorder %v904, 0.0
        %vm913 = vcmp.ge.f32.partialorder %v905, 0.0
        %vm914 = vcmp.ge.f32.partialorder %v906, 0.0
        %v915 = vmul.f32 %v899, 0.2
        %v916 = vmul.f32 %v900, 0.2
        %v917 = vmul.f32 %v901, 0.2
        %v918 = vmul.f32 %v902, 0.2
        %v919 = vmul.f32 %v903, 0.2
        %v920 = vmul.f32 %v904, 0.2
        %v921 = vmul.f32 %v905, 0.2
        %v922 = vmul.f32 %v906, 0.2
        %v923 = vsel %vm907, %v899, %v915
        %v924 = vsel %vm908, %v900, %v916
        %v925 = vsel %vm909, %v901, %v917
        %v926 = vsel %vm910, %v902, %v918
        %v927 = vsel %vm911, %v903, %v919
        %v928 = vsel %vm912, %v904, %v920
        %v929 = vsel %vm913, %v905, %v921
        %v930 = vsel %vm914, %v906, %v922
        %931 = vst [vmem:[%s193] sm:$0xff] %v923
        %932 = vst [vmem:[%s193 + $0x8] sm:$0xff] %v924
        %933 = vst [vmem:[%s193 + $0x10] sm:$0xff] %v925
        %934 = vst [vmem:[%s193 + $0x18] sm:$0xff] %v926
        %935 = vst [vmem:[%s193 + $0x20] sm:$0xff] %v927
        %936 = vst [vmem:[%s193 + $0x28] sm:$0xff] %v928
        %937 = vst [vmem:[%s193 + $0x30] sm:$0xff] %v929
        %938 = vst [vmem:[%s193 + $0x38] sm:$0xff] %v930
      $region36: #{forward_pallas.6} parent=27 // pred_fallthru
        _
      %p939 = scmp.lt.s32.totalorder %s17, 1
      %s940 = scalar_select %p939, %s17, 1
      %s941 = smul.addr %s940, 8
      %s942 = smul.addr %s941, 8
      %s943 = scalar_lea.vmem %s2, %s942
      // Predicated region
      $region37: #{forward_pallas.6} parent=27 // pred_check
        %p944 = pneg %p97
      $region38: #{forward_pallas.6} parent=27 // pred_check_branch
        %946 = sbr.rel (%p944) target = $region40
      $region39: #{forward_pallas.6} parent=27 // pred_region
        _
      $region40: #{forward_pallas.6} parent=27 // pred_fallthru
        _
    $region28: #{forward_pallas.6} parent=5 // pred_fallthru
      _
    %p947 = scmp.le.s32.totalorder 2, %s8
    // Predicated region
    $region41: #{forward_pallas.6} parent=5 // pred_check
      %p948 = pneg %p947
    $region42: #{forward_pallas.6} parent=5 // pred_check_branch
      %950 = sbr.rel (%p948) target = $region44
    $region43: #{forward_pallas.6} parent=5 // pred_region
      %s951 = ssub.s32 %s8, 2
      // Predicated region
      $region45: #{forward_pallas.6} parent=43 // pred_check
        %p952 = pneg %p103
      $region46: #{forward_pallas.6} parent=43 // pred_check_branch
        %954 = sbr.rel (%p952) target = $region48
      $region47: #{forward_pallas.6} parent=43 // pred_region
        %p955 = scmp.lt.s32.totalorder %s19, 1
        %s956 = scalar_select %p955, %s19, 1
        %s957 = smul.addr %s956, 8
        %s958 = smul.addr %s957, 8
        %s959 = scalar_lea.vmem %s2, %s958
      $region48: #{forward_pallas.6} parent=43 // pred_fallthru
        _
    $region44: #{forward_pallas.6} parent=5 // pred_fallthru
      _
  $region6: #{forward_pallas.6} parent=0 // loop_footer
    %s12 = sadd.s32 1, %s8
  $region7: #{forward_pallas.6} parent=0 // loop_footer_branch
    %7 = sbr.rel target = $region3
  $region8: #{forward_pallas.6} parent=0 // loop_exit
    _

// kernel: forward_pallas.7
$region0: #{forward_pallas.7}
  #allocation0 [shape = 'u32[]', space=smem, size = 0x4, offset = 0x4, fixed_abs, tag = 'smem constant byte address 0x4 - core index']
  #allocation1 [shape = 'u32[144,128]{1,0:T(1,128)}', space=vmem, size = 0x12000, scoped, tag = 'internal scratch']
  #allocation2 [shape = 'f32[16,256]{1,0:T(8,128)}', space=vmem, size = 0x4000, scoped, tag = 'scratch operand']
  %s0 = inlined_call_operand.vmem [shape: f32[2,16,2048], index: 0, kind: input, shape index: {}]
  %s1 = inlined_call_operand.vmem [shape: f32[2048,256], index: 1, kind: input, shape index: {}]
  %s2 = inlined_call_operand.vmem [shape: f32[2,16,256], index: 2, kind: output, shape index: {}]
  %s3 = sld [smem:[#allocation0]]
  $region72: #{forward_pallas.7} parent=0
    _
  %s5 = ssub.s32 1, %s3
  %s6 = scalar_select 0, %s5, %s3
  $region1: #{forward_pallas.7} parent=0
    #allocation3 [shape = 'u8[131072]{0}', space=vmem, size = 0x20000, scoped, tag = 'input window, operand 0']
    loop: start=0, step=1, limit=6
    $region2: #{forward_pallas.7} parent=1 // loop_pre_header
      _
    $region3: #{forward_pallas.7} parent=1 // loop_header
      %s8 = sphi 0, %s12
      %p9 = scmp.ge.s32.totalorder %s8, 6
      %s15 = sphi 0, %s27
      %s16 = sphi 0, %s23
      %s17 = sphi 0, %s15
      %s18 = sphi 0, %s16
      %s19 = sphi 0, %s17
      %s20 = sphi 0, %s18
      %s32 = sphi 0, %s34
      %s35 = sphi 0, %s32
      %s36 = sphi 0, %s35
      %s52 = sphi 0, %s36
      %s58 = sphi 0, %s60
      %s61 = sphi 0, %s58
      %s62 = sphi 0, %s61
      %s78 = sphi 0, %s62
      %s84 = sphi 0, %s86
      %s87 = sphi 0, %s84
      %s88 = sphi 0, %s87
      %s104 = sphi 0, %s88
    $region4: #{forward_pallas.7} parent=1 // loop_header_branch
      %11 = sbr.rel (%p9) target = $region8
    $region5: #{forward_pallas.7} parent=1 // loop_body
      %s13 = ssub.s32 %s8, 1
      %s14 = ssub.s32 %s8, 2
      %s21 = sadd.s32 1, %s16
      %p22 = scmp.ge.s32.totalorder %s21, 2
      %s23 = scalar_select %p22, 0, %s21
      %s24 = sadd.s32 1, %s15
      %s25 = scalar_select %p22, %s24, %s15
      %p26 = scmp.ge.s32.totalorder %s25, 2
      %s27 = scalar_select %p26, 0, %s25
      %s28 = ssub.s32 %s15, %s27
      %s29 = ssub.s32 %s16, %s23
      %s30 = sor.u32 %s28, %s29
      %p31 = scmp.eq.s32.totalorder %s30, 0
      %s33 = sadd.s32 %s32, 1
      %s34 = scalar_select %p31, %s32, %s33
      %p37 = pneg %p31
      %p38 = scmp.eq.s32.totalorder %s8, 3
      %p39 = por %p37, %p38
      %p40 = scmp.ne.s32.totalorder %s32, %s35
      %p41 = scmp.eq.s32.totalorder %s8, 0
      %p42 = por %p40, %p41
      %p43 = scmp.ne.s32.totalorder %s32, %s35
      %p44 = scmp.eq.s32.totalorder %s13, 3
      %p45 = por %p43, %p44
      %p46 = scmp.ne.s32.totalorder %s35, %s36
      %p47 = scmp.eq.s32.totalorder %s13, 0
      %p48 = por %p46, %p47
      %p49 = scmp.ne.s32.totalorder %s35, %s36
      %p50 = scmp.eq.s32.totalorder %s14, 3
      %p51 = por %p49, %p50
      %p53 = scmp.ne.s32.totalorder %s36, %s52
      %p54 = scmp.eq.s32.totalorder %s14, 0
      %p55 = por %p53, %p54
      %s56 = ssub.s32 %s16, %s23
      %p57 = scmp.eq.s32.totalorder %s56, 0
      %s59 = sadd.s32 %s58, 1
      %s60 = scalar_select %p57, %s58, %s59
      %p63 = pneg %p57
      %p64 = scmp.eq.s32.totalorder %s8, 3
      %p65 = por %p63, %p64
      %p66 = scmp.ne.s32.totalorder %s58, %s61
      %p67 = scmp.eq.s32.totalorder %s8, 0
      %p68 = por %p66, %p67
      %p69 = scmp.ne.s32.totalorder %s58, %s61
      %p70 = scmp.eq.s32.totalorder %s13, 3
      %p71 = por %p69, %p70
      %p72 = scmp.ne.s32.totalorder %s61, %s62
      %p73 = scmp.eq.s32.totalorder %s13, 0
      %p74 = por %p72, %p73
      %p75 = scmp.ne.s32.totalorder %s61, %s62
      %p76 = scmp.eq.s32.totalorder %s14, 3
      %p77 = por %p75, %p76
      %p79 = scmp.ne.s32.totalorder %s62, %s78
      %p80 = scmp.eq.s32.totalorder %s14, 0
      %p81 = por %p79, %p80
      %s82 = ssub.s32 %s15, %s27
      %p83 = scmp.eq.s32.totalorder %s82, 0
      %s85 = sadd.s32 %s84, 1
      %s86 = scalar_select %p83, %s84, %s85
      %p89 = pneg %p83
      %p90 = scmp.eq.s32.totalorder %s8, 3
      %p91 = por %p89, %p90
      %p92 = scmp.ne.s32.totalorder %s84, %s87
      %p93 = scmp.eq.s32.totalorder %s8, 0
      %p94 = por %p92, %p93
      %p95 = scmp.ne.s32.totalorder %s84, %s87
      %p96 = scmp.eq.s32.totalorder %s13, 3
      %p97 = por %p95, %p96
      %p98 = scmp.ne.s32.totalorder %s87, %s88
      %p99 = scmp.eq.s32.totalorder %s13, 0
      %p100 = por %p98, %p99
      %p101 = scmp.ne.s32.totalorder %s87, %s88
      %p102 = scmp.eq.s32.totalorder %s14, 3
      %p103 = por %p101, %p102
      %p105 = scmp.ne.s32.totalorder %s88, %s104
      %p106 = scmp.eq.s32.totalorder %s14, 0
      %p107 = por %p105, %p106
      %p108 = scmp.le.s32.totalorder 1, %s8
      %p109 = scmp.lt.s32.totalorder %s8, 5
      %p110 = pnand %p108, %p109
      %p111 = pneg %p110
      // Predicated region
      $region9: #{forward_pallas.7} parent=5 // pred_check
        _
      $region10: #{forward_pallas.7} parent=5 // pred_check_branch
        %113 = sbr.rel (%p110) target = $region12
      $region11: #{forward_pallas.7} parent=5 // pred_region
        %s114 = ssub.s32 %s8, 1
      $region12: #{forward_pallas.7} parent=5 // pred_fallthru
        _
      %p115 = scmp.lt.s32.totalorder %s8, 4
      // Predicated region
      $region13: #{forward_pallas.7} parent=5 // pred_check
        %p116 = pneg %p115
      $region14: #{forward_pallas.7} parent=5 // pred_check_branch
        %118 = sbr.rel (%p116) target = $region16
      $region15: #{forward_pallas.7} parent=5 // pred_region
        // Predicated region
        $region17: #{forward_pallas.7} parent=15 // pred_check
          %p119 = pneg %p42
        $region18: #{forward_pallas.7} parent=15 // pred_check_branch
          %121 = sbr.rel (%p119) target = $region20
        $region19: #{forward_pallas.7} parent=15 // pred_region
          %s122 = sand.u32 %s32, 1
          %s123 = sand.u32 %s32, 1
          %s124 = smul.addr %s123, 128
          %s125 = scalar_lea.vmem [#allocation3], %s124
          %s126 = smul.u32 8, %s16
          %s127 = smul.addr %s15, 32
          %s128 = sadd.s32 %s126, %s127
          %s129 = smul.addr %s128, 8
          %s130 = scalar_lea.vmem %s0, %s129
          // Predicated region
          $region21: #{forward_pallas.7} parent=19 // pred_check
            _
          $region22: #{forward_pallas.7} parent=19 // pred_check_branch
            %132 = sbr.rel (0) target = $region24
          $region23: #{forward_pallas.7} parent=19 // pred_region
            // Predicated region
            $region25: #{forward_pallas.7} parent=23 // pred_check
              _
            $region26: #{forward_pallas.7} parent=23 // pred_check_branch
              %134 = sbr.rel (0) target = $region28
            $region27: #{forward_pallas.7} parent=23 // pred_region
              loop: start=0, step=1, limit=1
              $region29: #{forward_pallas.7} parent=27 // loop_pre_header
                _
              $region30: #{forward_pallas.7} parent=27 // loop_header
                %s136 = sphi 0, %s140
                %p137 = scmp.ge.s32.totalorder %s136, 1
                %s141 = sphi %s130, %s130
                %s142 = sphi %s125, %s125
              $region31: #{forward_pallas.7} parent=27 // loop_header_branch
                %139 = sbr.rel (%p137) target = $region35
              $region32: #{forward_pallas.7} parent=27 // loop_body
                %v143 = vld [vmem:[%s141] sm:$0xff]
                %144 = vst [vmem:[%s142] sm:$0xff] %v143
                %v145 = vld [vmem:[%s141 + $0x8] sm:$0xff]
                %146 = vst [vmem:[%s142 + $0x8] sm:$0xff] %v145
                %v147 = vld [vmem:[%s141 + $0x10] sm:$0xff]
                %148 = vst [vmem:[%s142 + $0x10] sm:$0xff] %v147
                %v149 = vld [vmem:[%s141 + $0x18] sm:$0xff]
                %150 = vst [vmem:[%s142 + $0x18] sm:$0xff] %v149
                %v151 = vld [vmem:[%s141 + $0x20] sm:$0xff]
                %152 = vst [vmem:[%s142 + $0x20] sm:$0xff] %v151
                %v153 = vld [vmem:[%s141 + $0x28] sm:$0xff]
                %154 = vst [vmem:[%s142 + $0x28] sm:$0xff] %v153
                %v155 = vld [vmem:[%s141 + $0x30] sm:$0xff]
                %156 = vst [vmem:[%s142 + $0x30] sm:$0xff] %v155
                %v157 = vld [vmem:[%s141 + $0x38] sm:$0xff]
                %158 = vst [vmem:[%s142 + $0x38] sm:$0xff] %v157
                %v159 = vld [vmem:[%s141 + $0x80] sm:$0xff]
                %160 = vst [vmem:[%s142 + $0x40] sm:$0xff] %v159
                %v161 = vld [vmem:[%s141 + $0x88] sm:$0xff]
                %162 = vst [vmem:[%s142 + $0x48] sm:$0xff] %v161
                %v163 = vld [vmem:[%s141 + $0x90] sm:$0xff]
                %164 = vst [vmem:[%s142 + $0x50] sm:$0xff] %v163
                %v165 = vld [vmem:[%s141 + $0x98] sm:$0xff]
                %166 = vst [vmem:[%s142 + $0x58] sm:$0xff] %v165
                %v167 = vld [vmem:[%s141 + $0xa0] sm:$0xff]
                %168 = vst [vmem:[%s142 + $0x60] sm:$0xff] %v167
                %v169 = vld [vmem:[%s141 + $0xa8] sm:$0xff]
                %170 = vst [vmem:[%s142 + $0x68] sm:$0xff] %v169
                %v171 = vld [vmem:[%s141 + $0xb0] sm:$0xff]
                %172 = vst [vmem:[%s142 + $0x70] sm:$0xff] %v171
                %v173 = vld [vmem:[%s141 + $0xb8] sm:$0xff]
                %174 = vst [vmem:[%s142 + $0x78] sm:$0xff] %v173
              $region33: #{forward_pallas.7} parent=27 // loop_footer
                %s140 = sadd.s32 1, %s136
              $region34: #{forward_pallas.7} parent=27 // loop_footer_branch
                %135 = sbr.rel target = $region30
              $region35: #{forward_pallas.7} parent=27 // loop_exit
                _
            $region28: #{forward_pallas.7} parent=23 // pred_fallthru
              _
            // Predicated region
            $region36: #{forward_pallas.7} parent=23 // pred_check
              _
            $region37: #{forward_pallas.7} parent=23 // pred_check_branch
              %176 = sbr.rel target = $region39
            $region38: #{forward_pallas.7} parent=23 // pred_region
              _
            $region39: #{forward_pallas.7} parent=23 // pred_fallthru
              _
          $region24: #{forward_pallas.7} parent=19 // pred_fallthru
            _
          %177 = vnop
        $region20: #{forward_pallas.7} parent=15 // pred_fallthru
          _
        // Predicated region
        $region40: #{forward_pallas.7} parent=15 // pred_check
          %p178 = pneg %p68
        $region41: #{forward_pallas.7} parent=15 // pred_check_branch
          %180 = sbr.rel (%p178) target = $region43
        $region42: #{forward_pallas.7} parent=15 // pred_region
          %s181 = smul.u32 128, %s16
          %p182 = scmp.lt.s32.totalorder %s181, 255
          %s183 = scalar_select %p182, %s181, 255
          %s184 = smul.addr %s183, 2
          %s185 = smul.addr %s184, 8
          %s186 = scalar_lea.vmem %s1, %s185
          %s187 = smul.u32 128, %s16
        $region43: #{forward_pallas.7} parent=15 // pred_fallthru
          _
      $region16: #{forward_pallas.7} parent=5 // pred_fallthru
        _
      %p188 = scmp.le.s32.totalorder 1, %s8
      %p189 = scmp.lt.s32.totalorder %s8, 5
      %p190 = pnand %p188, %p189
      %p191 = pneg %p190
      // Predicated region
      $region44: #{forward_pallas.7} parent=5 // pred_check
        _
      $region45: #{forward_pallas.7} parent=5 // pred_check_branch
        %193 = sbr.rel (%p190) target = $region47
      $region46: #{forward_pallas.7} parent=5 // pred_region
        %s194 = ssub.s32 %s8, 1
        %s195 = sand.u32 %s35, 1
        %s196 = sand.u32 %s35, 1
        %s197 = smul.addr %s196, 128
        %s198 = scalar_lea.vmem [#allocation3], %s197
        // Predicated region
        $region48: #{forward_pallas.7} parent=46 // pred_check
          %p199 = pneg %p48
        $region49: #{forward_pallas.7} parent=46 // pred_check_branch
          %201 = sbr.rel (%p199) target = $region51
        $region50: #{forward_pallas.7} parent=46 // pred_region
          _
        $region51: #{forward_pallas.7} parent=46 // pred_fallthru
          _
        %s202 = sand.u32 %s35, 1
        %s203 = sand.u32 %s35, 1
        %s204 = smul.addr %s203, 128
        %s205 = scalar_lea.vmem [#allocation3], %s204
        %p206 = pneg %p48
        %p207 = pneg %p45
        %s208 = smul.u32 128, %s18
        %p209 = scmp.lt.s32.totalorder %s208, 255
        %s210 = scalar_select %p209, %s208, 255
        %s211 = smul.addr %s210, 2
        %s212 = smul.addr %s211, 8
        %s213 = scalar_lea.vmem %s1, %s212
        %p214 = pneg %p74
        %p215 = pneg %p71
        %p216 = pneg %p100
        %p217 = pneg %p97
        %p218 = scmp.lt.s32.totalorder %s17, 1
        %s219 = scalar_select %p218, %s17, 1
        %s220 = smul.addr %s219, 4
        %s221 = smul.addr %s220, 8
        %s222 = scalar_lea.vmem %s2, %s221
        %s223 = smul.u32 8, %s18
        %s224 = smul.u32 128, %s18
        %p225 = scmp.lt.s32.totalorder %s224, 255
        %s226 = scalar_select %p225, %s224, 255
        %s227 = smul.addr %s226, 2
        %s228 = smul.addr %s227, 8
        %s229 = scalar_lea.vmem %s1, %s228
        %s230 = smul.u32 128, %s18
        %p231 = scmp.lt.s32.totalorder %s17, 1
        %s232 = scalar_select %p231, %s17, 1
        %s233 = smul.addr %s232, 4
        %s234 = smul.addr %s233, 8
        %s235 = scalar_lea.vmem %s2, %s234
        %p236 = scmp.eq.s32.totalorder %s18, 0
        // Predicated region
        $region52: #{forward_pallas.7} parent=46 // pred_check
          %p237 = pneg %p236
        $region53: #{forward_pallas.7} parent=46 // pred_check_branch
          %239 = sbr.rel (%p237) target = $region55
        $region54: #{forward_pallas.7} parent=46 // pred_region
          %240 = vst [vmem:[#allocation2] sm:$0xff] 0.0
          %241 = vst [vmem:[#allocation2 + $0x8] sm:$0xff] 0.0
          %242 = vst [vmem:[#allocation2 + $0x10] sm:$0xff] 0.0
          %243 = vst [vmem:[#allocation2 + $0x18] sm:$0xff] 0.0
        $region55: #{forward_pallas.7} parent=46 // pred_fallthru
          _
        %v244 = vld [vmem:[#allocation2] sm:$0xff]
        %v245 = vld [vmem:[#allocation2 + $0x8] sm:$0xff]
        %v246 = vld [vmem:[#allocation2 + $0x10] sm:$0xff]
        %v247 = vld [vmem:[#allocation2 + $0x18] sm:$0xff]
        %v248 = vld [vmem:[%s198] sm:$0xff]
        %v249 = vld [vmem:[%s198 + $0x8] sm:$0xff]
        %v250 = vld [vmem:[%s198 + $0x10] sm:$0xff]
        %v251 = vld [vmem:[%s198 + $0x18] sm:$0xff]
        %v252 = vld [vmem:[%s198 + $0x20] sm:$0xff]
        %v253 = vld [vmem:[%s198 + $0x28] sm:$0xff]
        %v254 = vld [vmem:[%s198 + $0x30] sm:$0xff]
        %v255 = vld [vmem:[%s198 + $0x38] sm:$0xff]
        %v256 = vld [vmem:[%s198 + $0x40] sm:$0xff]
        %v257 = vld [vmem:[%s198 + $0x48] sm:$0xff]
        %v258 = vld [vmem:[%s198 + $0x50] sm:$0xff]
        %v259 = vld [vmem:[%s198 + $0x58] sm:$0xff]
        %v260 = vld [vmem:[%s198 + $0x60] sm:$0xff]
        %v261 = vld [vmem:[%s198 + $0x68] sm:$0xff]
        %v262 = vld [vmem:[%s198 + $0x70] sm:$0xff]
        %v263 = vld [vmem:[%s198 + $0x78] sm:$0xff]
        %v264 = vld [vmem:[%s229] sm:$0xff]
        %v265 = vld [vmem:[%s229 + $0x8] sm:$0xff]
        %v266 = vld [vmem:[%s229 + $0x10] sm:$0xff]
        %v267 = vld [vmem:[%s229 + $0x18] sm:$0xff]
        %v268 = vld [vmem:[%s229 + $0x20] sm:$0xff]
        %v269 = vld [vmem:[%s229 + $0x28] sm:$0xff]
        %v270 = vld [vmem:[%s229 + $0x30] sm:$0xff]
        %v271 = vld [vmem:[%s229 + $0x38] sm:$0xff]
        %v272 = vld [vmem:[%s229 + $0x40] sm:$0xff]
        %v273 = vld [vmem:[%s229 + $0x48] sm:$0xff]
        %v274 = vld [vmem:[%s229 + $0x50] sm:$0xff]
        %v275 = vld [vmem:[%s229 + $0x58] sm:$0xff]
        %v276 = vld [vmem:[%s229 + $0x60] sm:$0xff]
        %v277 = vld [vmem:[%s229 + $0x68] sm:$0xff]
        %v278 = vld [vmem:[%s229 + $0x70] sm:$0xff]
        %v279 = vld [vmem:[%s229 + $0x78] sm:$0xff]
        %v280 = vld [vmem:[%s229 + $0x80] sm:$0xff]
        %v281 = vld [vmem:[%s229 + $0x88] sm:$0xff]
        %v282 = vld [vmem:[%s229 + $0x90] sm:$0xff]
        %v283 = vld [vmem:[%s229 + $0x98] sm:$0xff]
        %v284 = vld [vmem:[%s229 + $0xa0] sm:$0xff]
        %v285 = vld [vmem:[%s229 + $0xa8] sm:$0xff]
        %v286 = vld [vmem:[%s229 + $0xb0] sm:$0xff]
        %v287 = vld [vmem:[%s229 + $0xb8] sm:$0xff]
        %v288 = vld [vmem:[%s229 + $0xc0] sm:$0xff]
        %v289 = vld [vmem:[%s229 + $0xc8] sm:$0xff]
        %v290 = vld [vmem:[%s229 + $0xd0] sm:$0xff]
        %v291 = vld [vmem:[%s229 + $0xd8] sm:$0xff]
        %v292 = vld [vmem:[%s229 + $0xe0] sm:$0xff]
        %v293 = vld [vmem:[%s229 + $0xe8] sm:$0xff]
        %v294 = vld [vmem:[%s229 + $0xf0] sm:$0xff]
        %v295 = vld [vmem:[%s229 + $0xf8] sm:$0xff]
        %v296 = vld [vmem:[%s229 + $0x100] sm:$0xff]
        %v297 = vld [vmem:[%s229 + $0x108] sm:$0xff]
        %v298 = vld [vmem:[%s229 + $0x110] sm:$0xff]
        %v299 = vld [vmem:[%s229 + $0x118] sm:$0xff]
        %v300 = vld [vmem:[%s229 + $0x120] sm:$0xff]
        %v301 = vld [vmem:[%s229 + $0x128] sm:$0xff]
        %v302 = vld [vmem:[%s229 + $0x130] sm:$0xff]
        %v303 = vld [vmem:[%s229 + $0x138] sm:$0xff]
        %v304 = vld [vmem:[%s229 + $0x140] sm:$0xff]
        %v305 = vld [vmem:[%s229 + $0x148] sm:$0xff]
        %v306 = vld [vmem:[%s229 + $0x150] sm:$0xff]
        %v307 = vld [vmem:[%s229 + $0x158] sm:$0xff]
        %v308 = vld [vmem:[%s229 + $0x160] sm:$0xff]
        %v309 = vld [vmem:[%s229 + $0x168] sm:$0xff]
        %v310 = vld [vmem:[%s229 + $0x170] sm:$0xff]
        %v311 = vld [vmem:[%s229 + $0x178] sm:$0xff]
        %v312 = vld [vmem:[%s229 + $0x180] sm:$0xff]
        %v313 = vld [vmem:[%s229 + $0x188] sm:$0xff]
        %v314 = vld [vmem:[%s229 + $0x190] sm:$0xff]
        %v315 = vld [vmem:[%s229 + $0x198] sm:$0xff]
        %v316 = vld [vmem:[%s229 + $0x1a0] sm:$0xff]
        %v317 = vld [vmem:[%s229 + $0x1a8] sm:$0xff]
        %v318 = vld [vmem:[%s229 + $0x1b0] sm:$0xff]
        %v319 = vld [vmem:[%s229 + $0x1b8] sm:$0xff]
        %v320 = vld [vmem:[%s229 + $0x1c0] sm:$0xff]
        %v321 = vld [vmem:[%s229 + $0x1c8] sm:$0xff]
        %v322 = vld [vmem:[%s229 + $0x1d0] sm:$0xff]
        %v323 = vld [vmem:[%s229 + $0x1d8] sm:$0xff]
        %v324 = vld [vmem:[%s229 + $0x1e0] sm:$0xff]
        %v325 = vld [vmem:[%s229 + $0x1e8] sm:$0xff]
        %v326 = vld [vmem:[%s229 + $0x1f0] sm:$0xff]
        %v327 = vld [vmem:[%s229 + $0x1f8] sm:$0xff]
        %v328 = vld [vmem:[%s229 + $0x200] sm:$0xff]
        %v329 = vld [vmem:[%s229 + $0x208] sm:$0xff]
        %v330 = vld [vmem:[%s229 + $0x210] sm:$0xff]
        %v331 = vld [vmem:[%s229 + $0x218] sm:$0xff]
        %v332 = vld [vmem:[%s229 + $0x220] sm:$0xff]
        %v333 = vld [vmem:[%s229 + $0x228] sm:$0xff]
        %v334 = vld [vmem:[%s229 + $0x230] sm:$0xff]
        %v335 = vld [vmem:[%s229 + $0x238] sm:$0xff]
        %v336 = vld [vmem:[%s229 + $0x240] sm:$0xff]
        %v337 = vld [vmem:[%s229 + $0x248] sm:$0xff]
        %v338 = vld [vmem:[%s229 + $0x250] sm:$0xff]
        %v339 = vld [vmem:[%s229 + $0x258] sm:$0xff]
        %v340 = vld [vmem:[%s229 + $0x260] sm:$0xff]
        %v341 = vld [vmem:[%s229 + $0x268] sm:$0xff]
        %v342 = vld [vmem:[%s229 + $0x270] sm:$0xff]
        %v343 = vld [vmem:[%s229 + $0x278] sm:$0xff]
        %v344 = vld [vmem:[%s229 + $0x280] sm:$0xff]
        %v345 = vld [vmem:[%s229 + $0x288] sm:$0xff]
        %v346 = vld [vmem:[%s229 + $0x290] sm:$0xff]
        %v347 = vld [vmem:[%s229 + $0x298] sm:$0xff]
        %v348 = vld [vmem:[%s229 + $0x2a0] sm:$0xff]
        %v349 = vld [vmem:[%s229 + $0x2a8] sm:$0xff]
        %v350 = vld [vmem:[%s229 + $0x2b0] sm:$0xff]
        %v351 = vld [vmem:[%s229 + $0x2b8] sm:$0xff]
        %v352 = vld [vmem:[%s229 + $0x2c0] sm:$0xff]
        %v353 = vld [vmem:[%s229 + $0x2c8] sm:$0xff]
        %v354 = vld [vmem:[%s229 + $0x2d0] sm:$0xff]
        %v355 = vld [vmem:[%s229 + $0x2d8] sm:$0xff]
        %v356 = vld [vmem:[%s229 + $0x2e0] sm:$0xff]
        %v357 = vld [vmem:[%s229 + $0x2e8] sm:$0xff]
        %v358 = vld [vmem:[%s229 + $0x2f0] sm:$0xff]
        %v359 = vld [vmem:[%s229 + $0x2f8] sm:$0xff]
        %v360 = vld [vmem:[%s229 + $0x300] sm:$0xff]
        %v361 = vld [vmem:[%s229 + $0x308] sm:$0xff]
        %v362 = vld [vmem:[%s229 + $0x310] sm:$0xff]
        %v363 = vld [vmem:[%s229 + $0x318] sm:$0xff]
        %v364 = vld [vmem:[%s229 + $0x320] sm:$0xff]
        %v365 = vld [vmem:[%s229 + $0x328] sm:$0xff]
        %v366 = vld [vmem:[%s229 + $0x330] sm:$0xff]
        %v367 = vld [vmem:[%s229 + $0x338] sm:$0xff]
        %v368 = vld [vmem:[%s229 + $0x340] sm:$0xff]
        %v369 = vld [vmem:[%s229 + $0x348] sm:$0xff]
        %v370 = vld [vmem:[%s229 + $0x350] sm:$0xff]
        %v371 = vld [vmem:[%s229 + $0x358] sm:$0xff]
        %v372 = vld [vmem:[%s229 + $0x360] sm:$0xff]
        %v373 = vld [vmem:[%s229 + $0x368] sm:$0xff]
        %v374 = vld [vmem:[%s229 + $0x370] sm:$0xff]
        %v375 = vld [vmem:[%s229 + $0x378] sm:$0xff]
        %v376 = vld [vmem:[%s229 + $0x380] sm:$0xff]
        %v377 = vld [vmem:[%s229 + $0x388] sm:$0xff]
        %v378 = vld [vmem:[%s229 + $0x390] sm:$0xff]
        %v379 = vld [vmem:[%s229 + $0x398] sm:$0xff]
        %v380 = vld [vmem:[%s229 + $0x3a0] sm:$0xff]
        %v381 = vld [vmem:[%s229 + $0x3a8] sm:$0xff]
        %v382 = vld [vmem:[%s229 + $0x3b0] sm:$0xff]
        %v383 = vld [vmem:[%s229 + $0x3b8] sm:$0xff]
        %v384 = vld [vmem:[%s229 + $0x3c0] sm:$0xff]
        %v385 = vld [vmem:[%s229 + $0x3c8] sm:$0xff]
        %v386 = vld [vmem:[%s229 + $0x3d0] sm:$0xff]
        %v387 = vld [vmem:[%s229 + $0x3d8] sm:$0xff]
        %v388 = vld [vmem:[%s229 + $0x3e0] sm:$0xff]
        %v389 = vld [vmem:[%s229 + $0x3e8] sm:$0xff]
        %v390 = vld [vmem:[%s229 + $0x3f0] sm:$0xff]
        %v391 = vld [vmem:[%s229 + $0x3f8] sm:$0xff]
        %v392 = vld [vmem:[%s229 + $0x400] sm:$0xff]
        %v393 = vld [vmem:[%s229 + $0x408] sm:$0xff]
        %v394 = vld [vmem:[%s229 + $0x410] sm:$0xff]
        %v395 = vld [vmem:[%s229 + $0x418] sm:$0xff]
        %v396 = vld [vmem:[%s229 + $0x420] sm:$0xff]
        %v397 = vld [vmem:[%s229 + $0x428] sm:$0xff]
        %v398 = vld [vmem:[%s229 + $0x430] sm:$0xff]
        %v399 = vld [vmem:[%s229 + $0x438] sm:$0xff]
        %v400 = vld [vmem:[%s229 + $0x440] sm:$0xff]
        %v401 = vld [vmem:[%s229 + $0x448] sm:$0xff]
        %v402 = vld [vmem:[%s229 + $0x450] sm:$0xff]
        %v403 = vld [vmem:[%s229 + $0x458] sm:$0xff]
        %v404 = vld [vmem:[%s229 + $0x460] sm:$0xff]
        %v405 = vld [vmem:[%s229 + $0x468] sm:$0xff]
        %v406 = vld [vmem:[%s229 + $0x470] sm:$0xff]
        %v407 = vld [vmem:[%s229 + $0x478] sm:$0xff]
        %v408 = vld [vmem:[%s229 + $0x480] sm:$0xff]
        %v409 = vld [vmem:[%s229 + $0x488] sm:$0xff]
        %v410 = vld [vmem:[%s229 + $0x490] sm:$0xff]
        %v411 = vld [vmem:[%s229 + $0x498] sm:$0xff]
        %v412 = vld [vmem:[%s229 + $0x4a0] sm:$0xff]
        %v413 = vld [vmem:[%s229 + $0x4a8] sm:$0xff]
        %v414 = vld [vmem:[%s229 + $0x4b0] sm:$0xff]
        %v415 = vld [vmem:[%s229 + $0x4b8] sm:$0xff]
        %v416 = vld [vmem:[%s229 + $0x4c0] sm:$0xff]
        %v417 = vld [vmem:[%s229 + $0x4c8] sm:$0xff]
        %v418 = vld [vmem:[%s229 + $0x4d0] sm:$0xff]
        %v419 = vld [vmem:[%s229 + $0x4d8] sm:$0xff]
        %v420 = vld [vmem:[%s229 + $0x4e0] sm:$0xff]
        %v421 = vld [vmem:[%s229 + $0x4e8] sm:$0xff]
        %v422 = vld [vmem:[%s229 + $0x4f0] sm:$0xff]
        %v423 = vld [vmem:[%s229 + $0x4f8] sm:$0xff]
        %v424 = vld [vmem:[%s229 + $0x500] sm:$0xff]
        %v425 = vld [vmem:[%s229 + $0x508] sm:$0xff]
        %v426 = vld [vmem:[%s229 + $0x510] sm:$0xff]
        %v427 = vld [vmem:[%s229 + $0x518] sm:$0xff]
        %v428 = vld [vmem:[%s229 + $0x520] sm:$0xff]
        %v429 = vld [vmem:[%s229 + $0x528] sm:$0xff]
        %v430 = vld [vmem:[%s229 + $0x530] sm:$0xff]
        %v431 = vld [vmem:[%s229 + $0x538] sm:$0xff]
        %v432 = vld [vmem:[%s229 + $0x540] sm:$0xff]
        %v433 = vld [vmem:[%s229 + $0x548] sm:$0xff]
        %v434 = vld [vmem:[%s229 + $0x550] sm:$0xff]
        %v435 = vld [vmem:[%s229 + $0x558] sm:$0xff]
        %v436 = vld [vmem:[%s229 + $0x560] sm:$0xff]
        %v437 = vld [vmem:[%s229 + $0x568] sm:$0xff]
        %v438 = vld [vmem:[%s229 + $0x570] sm:$0xff]
        %v439 = vld [vmem:[%s229 + $0x578] sm:$0xff]
        %v440 = vld [vmem:[%s229 + $0x580] sm:$0xff]
        %v441 = vld [vmem:[%s229 + $0x588] sm:$0xff]
        %v442 = vld [vmem:[%s229 + $0x590] sm:$0xff]
        %v443 = vld [vmem:[%s229 + $0x598] sm:$0xff]
        %v444 = vld [vmem:[%s229 + $0x5a0] sm:$0xff]
        %v445 = vld [vmem:[%s229 + $0x5a8] sm:$0xff]
        %v446 = vld [vmem:[%s229 + $0x5b0] sm:$0xff]
        %v447 = vld [vmem:[%s229 + $0x5b8] sm:$0xff]
        %v448 = vld [vmem:[%s229 + $0x5c0] sm:$0xff]
        %v449 = vld [vmem:[%s229 + $0x5c8] sm:$0xff]
        %v450 = vld [vmem:[%s229 + $0x5d0] sm:$0xff]
        %v451 = vld [vmem:[%s229 + $0x5d8] sm:$0xff]
        %v452 = vld [vmem:[%s229 + $0x5e0] sm:$0xff]
        %v453 = vld [vmem:[%s229 + $0x5e8] sm:$0xff]
        %v454 = vld [vmem:[%s229 + $0x5f0] sm:$0xff]
        %v455 = vld [vmem:[%s229 + $0x5f8] sm:$0xff]
        %v456 = vld [vmem:[%s229 + $0x600] sm:$0xff]
        %v457 = vld [vmem:[%s229 + $0x608] sm:$0xff]
        %v458 = vld [vmem:[%s229 + $0x610] sm:$0xff]
        %v459 = vld [vmem:[%s229 + $0x618] sm:$0xff]
        %v460 = vld [vmem:[%s229 + $0x620] sm:$0xff]
        %v461 = vld [vmem:[%s229 + $0x628] sm:$0xff]
        %v462 = vld [vmem:[%s229 + $0x630] sm:$0xff]
        %v463 = vld [vmem:[%s229 + $0x638] sm:$0xff]
        %v464 = vld [vmem:[%s229 + $0x640] sm:$0xff]
        %v465 = vld [vmem:[%s229 + $0x648] sm:$0xff]
        %v466 = vld [vmem:[%s229 + $0x650] sm:$0xff]
        %v467 = vld [vmem:[%s229 + $0x658] sm:$0xff]
        %v468 = vld [vmem:[%s229 + $0x660] sm:$0xff]
        %v469 = vld [vmem:[%s229 + $0x668] sm:$0xff]
        %v470 = vld [vmem:[%s229 + $0x670] sm:$0xff]
        %v471 = vld [vmem:[%s229 + $0x678] sm:$0xff]
        %v472 = vld [vmem:[%s229 + $0x680] sm:$0xff]
        %v473 = vld [vmem:[%s229 + $0x688] sm:$0xff]
        %v474 = vld [vmem:[%s229 + $0x690] sm:$0xff]
        %v475 = vld [vmem:[%s229 + $0x698] sm:$0xff]
        %v476 = vld [vmem:[%s229 + $0x6a0] sm:$0xff]
        %v477 = vld [vmem:[%s229 + $0x6a8] sm:$0xff]
        %v478 = vld [vmem:[%s229 + $0x6b0] sm:$0xff]
        %v479 = vld [vmem:[%s229 + $0x6b8] sm:$0xff]
        %v480 = vld [vmem:[%s229 + $0x6c0] sm:$0xff]
        %v481 = vld [vmem:[%s229 + $0x6c8] sm:$0xff]
        %v482 = vld [vmem:[%s229 + $0x6d0] sm:$0xff]
        %v483 = vld [vmem:[%s229 + $0x6d8] sm:$0xff]
        %v484 = vld [vmem:[%s229 + $0x6e0] sm:$0xff]
        %v485 = vld [vmem:[%s229 + $0x6e8] sm:$0xff]
        %v486 = vld [vmem:[%s229 + $0x6f0] sm:$0xff]
        %v487 = vld [vmem:[%s229 + $0x6f8] sm:$0xff]
        %v488 = vld [vmem:[%s229 + $0x700] sm:$0xff]
        %v489 = vld [vmem:[%s229 + $0x708] sm:$0xff]
        %v490 = vld [vmem:[%s229 + $0x710] sm:$0xff]
        %v491 = vld [vmem:[%s229 + $0x718] sm:$0xff]
        %v492 = vld [vmem:[%s229 + $0x720] sm:$0xff]
        %v493 = vld [vmem:[%s229 + $0x728] sm:$0xff]
        %v494 = vld [vmem:[%s229 + $0x730] sm:$0xff]
        %v495 = vld [vmem:[%s229 + $0x738] sm:$0xff]
        %v496 = vld [vmem:[%s229 + $0x740] sm:$0xff]
        %v497 = vld [vmem:[%s229 + $0x748] sm:$0xff]
        %v498 = vld [vmem:[%s229 + $0x750] sm:$0xff]
        %v499 = vld [vmem:[%s229 + $0x758] sm:$0xff]
        %v500 = vld [vmem:[%s229 + $0x760] sm:$0xff]
        %v501 = vld [vmem:[%s229 + $0x768] sm:$0xff]
        %v502 = vld [vmem:[%s229 + $0x770] sm:$0xff]
        %v503 = vld [vmem:[%s229 + $0x778] sm:$0xff]
        %v504 = vld [vmem:[%s229 + $0x780] sm:$0xff]
        %v505 = vld [vmem:[%s229 + $0x788] sm:$0xff]
        %v506 = vld [vmem:[%s229 + $0x790] sm:$0xff]
        %v507 = vld [vmem:[%s229 + $0x798] sm:$0xff]
        %v508 = vld [vmem:[%s229 + $0x7a0] sm:$0xff]
        %v509 = vld [vmem:[%s229 + $0x7a8] sm:$0xff]
        %v510 = vld [vmem:[%s229 + $0x7b0] sm:$0xff]
        %v511 = vld [vmem:[%s229 + $0x7b8] sm:$0xff]
        %v512 = vld [vmem:[%s229 + $0x7c0] sm:$0xff]
        %v513 = vld [vmem:[%s229 + $0x7c8] sm:$0xff]
        %v514 = vld [vmem:[%s229 + $0x7d0] sm:$0xff]
        %v515 = vld [vmem:[%s229 + $0x7d8] sm:$0xff]
        %v516 = vld [vmem:[%s229 + $0x7e0] sm:$0xff]
        %v517 = vld [vmem:[%s229 + $0x7e8] sm:$0xff]
        %v518 = vld [vmem:[%s229 + $0x7f0] sm:$0xff]
        %v519 = vld [vmem:[%s229 + $0x7f8] sm:$0xff]
        %520 = vmatprep.subr.mxu0 %v265
        %521 = vmatpush1.msra.mxu0 %v264
        %522 = vmatprep.subr.mxu0 %v267
        %523 = vmatpush1.msra.mxu0 %v266
        %524 = vmatprep.subr.mxu0 %v269
        %525 = vmatpush1.msra.mxu0 %v268
        %526 = vmatprep.subr.mxu0 %v271
        %527 = vmatpush1.msra.mxu0 %v270
        %528 = vmatprep.subr.mxu0 %v273
        %529 = vmatpush1.msra.mxu0 %v272
        %530 = vmatprep.subr.mxu0 %v275
        %531 = vmatpush1.msra.mxu0 %v274
        %532 = vmatprep.subr.mxu0 %v277
        %533 = vmatpush1.msra.mxu0 %v276
        %534 = vmatprep.subr.mxu0 %v279
        %535 = vmatpush1.msra.mxu0 %v278
        %536 = vmatprep.subr.mxu0 %v281
        %537 = vmatpush1.msra.mxu0 %v280
        %538 = vmatprep.subr.mxu0 %v283
        %539 = vmatpush1.msra.mxu0 %v282
        %540 = vmatprep.subr.mxu0 %v285
        %541 = vmatpush1.msra.mxu0 %v284
        %542 = vmatprep.subr.mxu0 %v287
        %543 = vmatpush1.msra.mxu0 %v286
        %544 = vmatprep.subr.mxu0 %v289
        %545 = vmatpush1.msra.mxu0 %v288
        %546 = vmatprep.subr.mxu0 %v291
        %547 = vmatpush1.msra.mxu0 %v290
        %548 = vmatprep.subr.mxu0 %v293
        %549 = vmatpush1.msra.mxu0 %v292
        %550 = vmatprep.subr.mxu0 %v295
        %551 = vmatpush1.msra.mxu0 %v294
        %552 = vmatprep.subr.mxu0 %v297
        %553 = vmatpush1.msra.mxu0 %v296
        %554 = vmatprep.subr.mxu0 %v299
        %555 = vmatpush1.msra.mxu0 %v298
        %556 = vmatprep.subr.mxu0 %v301
        %557 = vmatpush1.msra.mxu0 %v300
        %558 = vmatprep.subr.mxu0 %v303
        %559 = vmatpush1.msra.mxu0 %v302
        %560 = vmatprep.subr.mxu0 %v305
        %561 = vmatpush1.msra.mxu0 %v304
        %562 = vmatprep.subr.mxu0 %v307
        %563 = vmatpush1.msra.mxu0 %v306
        %564 = vmatprep.subr.mxu0 %v309
        %565 = vmatpush1.msra.mxu0 %v308
        %566 = vmatprep.subr.mxu0 %v311
        %567 = vmatpush1.msra.mxu0 %v310
        %568 = vmatprep.subr.mxu0 %v313
        %569 = vmatpush1.msra.mxu0 %v312
        %570 = vmatprep.subr.mxu0 %v315
        %571 = vmatpush1.msra.mxu0 %v314
        %572 = vmatprep.subr.mxu0 %v317
        %573 = vmatpush1.msra.mxu0 %v316
        %574 = vmatprep.subr.mxu0 %v319
        %575 = vmatpush1.msra.mxu0 %v318
        %576 = vmatprep.subr.mxu0 %v321
        %577 = vmatpush1.msra.mxu0 %v320
        %578 = vmatprep.subr.mxu0 %v323
        %579 = vmatpush1.msra.mxu0 %v322
        %580 = vmatprep.subr.mxu0 %v325
        %581 = vmatpush1.msra.mxu0 %v324
        %582 = vmatprep.subr.mxu0 %v327
        %583 = vmatpush1.msra.mxu0 %v326
        %584 = vmatprep.mubr.f32.mxu0 %v249
        %585 = vmatmul.mubr.f32.gmra.mrb[0].mxu0 %v248
        %v586 = vpop.f32.mrb[0].mxu0
        %v587 = vadd.f32 0.0, %v586
        %v588 = vpop.f32.mrb[0].mxu0
        %v589 = vadd.f32 0.0, %v588
        %590 = vmatprep.mubr.f32.mxu0 %v257
        %591 = vmatmul.mubr.f32.gmra.mrb[0].mxu0 %v256
        %v592 = vpop.f32.mrb[0].mxu0
        %v593 = vadd.f32 0.0, %v592
        %v594 = vpop.f32.mrb[0].mxu0
        %v595 = vadd.f32 0.0, %v594
        %596 = vdwg.mxu0
        %597 = vmatprep.subr.mxu0 %v329
        %598 = vmatpush1.msra.mxu0 %v328
        %599 = vmatprep.subr.mxu0 %v331
        %600 = vmatpush1.msra.mxu0 %v330
        %601 = vmatprep.subr.mxu0 %v333
        %602 = vmatpush1.msra.mxu0 %v332
        %603 = vmatprep.subr.mxu0 %v335
        %604 = vmatpush1.msra.mxu0 %v334
        %605 = vmatprep.subr.mxu0 %v337
        %606 = vmatpush1.msra.mxu0 %v336
        %607 = vmatprep.subr.mxu0 %v339
        %608 = vmatpush1.msra.mxu0 %v338
        %609 = vmatprep.subr.mxu0 %v341
        %610 = vmatpush1.msra.mxu0 %v340
        %611 = vmatprep.subr.mxu0 %v343
        %612 = vmatpush1.msra.mxu0 %v342
        %613 = vmatprep.subr.mxu0 %v345
        %614 = vmatpush1.msra.mxu0 %v344
        %615 = vmatprep.subr.mxu0 %v347
        %616 = vmatpush1.msra.mxu0 %v346
        %617 = vmatprep.subr.mxu0 %v349
        %618 = vmatpush1.msra.mxu0 %v348
        %619 = vmatprep.subr.mxu0 %v351
        %620 = vmatpush1.msra.mxu0 %v350
        %621 = vmatprep.subr.mxu0 %v353
        %622 = vmatpush1.msra.mxu0 %v352
        %623 = vmatprep.subr.mxu0 %v355
        %624 = vmatpush1.msra.mxu0 %v354
        %625 = vmatprep.subr.mxu0 %v357
        %626 = vmatpush1.msra.mxu0 %v356
        %627 = vmatprep.subr.mxu0 %v359
        %628 = vmatpush1.msra.mxu0 %v358
        %629 = vmatprep.subr.mxu0 %v361
        %630 = vmatpush1.msra.mxu0 %v360
        %631 = vmatprep.subr.mxu0 %v363
        %632 = vmatpush1.msra.mxu0 %v362
        %633 = vmatprep.subr.mxu0 %v365
        %634 = vmatpush1.msra.mxu0 %v364
        %635 = vmatprep.subr.mxu0 %v367
        %636 = vmatpush1.msra.mxu0 %v366
        %637 = vmatprep.subr.mxu0 %v369
        %638 = vmatpush1.msra.mxu0 %v368
        %639 = vmatprep.subr.mxu0 %v371
        %640 = vmatpush1.msra.mxu0 %v370
        %641 = vmatprep.subr.mxu0 %v373
        %642 = vmatpush1.msra.mxu0 %v372
        %643 = vmatprep.subr.mxu0 %v375
        %644 = vmatpush1.msra.mxu0 %v374
        %645 = vmatprep.subr.mxu0 %v377
        %646 = vmatpush1.msra.mxu0 %v376
        %647 = vmatprep.subr.mxu0 %v379
        %648 = vmatpush1.msra.mxu0 %v378
        %649 = vmatprep.subr.mxu0 %v381
        %650 = vmatpush1.msra.mxu0 %v380
        %651 = vmatprep.subr.mxu0 %v383
        %652 = vmatpush1.msra.mxu0 %v382
        %653 = vmatprep.subr.mxu0 %v385
        %654 = vmatpush1.msra.mxu0 %v384
        %655 = vmatprep.subr.mxu0 %v387
        %656 = vmatpush1.msra.mxu0 %v386
        %657 = vmatprep.subr.mxu0 %v389
        %658 = vmatpush1.msra.mxu0 %v388
        %659 = vmatprep.subr.mxu0 %v391
        %660 = vmatpush1.msra.mxu0 %v390
        %661 = vmatprep.mubr.f32.mxu0 %v251
        %662 = vmatmul.mubr.f32.gmra.mrb[0].mxu0 %v250
        %v663 = vpop.f32.mrb[0].mxu0
        %v664 = vadd.f32 %v587, %v663
        %v665 = vpop.f32.mrb[0].mxu0
        %v666 = vadd.f32 %v589, %v665
        %667 = vmatprep.mubr.f32.mxu0 %v259
        %668 = vmatmul.mubr.f32.gmra.mrb[0].mxu0 %v258
        %v669 = vpop.f32.mrb[0].mxu0
        %v670 = vadd.f32 %v593, %v669
        %v671 = vpop.f32.mrb[0].mxu0
        %v672 = vadd.f32 %v595, %v671
        %673 = vdwg.mxu0
        %674 = vmatprep.subr.mxu0 %v393
        %675 = vmatpush1.msra.mxu0 %v392
        %676 = vmatprep.subr.mxu0 %v395
        %677 = vmatpush1.msra.mxu0 %v394
        %678 = vmatprep.subr.mxu0 %v397
        %679 = vmatpush1.msra.mxu0 %v396
        %680 = vmatprep.subr.mxu0 %v399
        %681 = vmatpush1.msra.mxu0 %v398
        %682 = vmatprep.subr.mxu0 %v401
        %683 = vmatpush1.msra.mxu0 %v400
        %684 = vmatprep.subr.mxu0 %v403
        %685 = vmatpush1.msra.mxu0 %v402
        %686 = vmatprep.subr.mxu0 %v405
        %687 = vmatpush1.msra.mxu0 %v404
        %688 = vmatprep.subr.mxu0 %v407
        %689 = vmatpush1.msra.mxu0 %v406
        %690 = vmatprep.subr.mxu0 %v409
        %691 = vmatpush1.msra.mxu0 %v408
        %692 = vmatprep.subr.mxu0 %v411
        %693 = vmatpush1.msra.mxu0 %v410
        %694 = vmatprep.subr.mxu0 %v413
        %695 = vmatpush1.msra.mxu0 %v412
        %696 = vmatprep.subr.mxu0 %v415
        %697 = vmatpush1.msra.mxu0 %v414
        %698 = vmatprep.subr.mxu0 %v417
        %699 = vmatpush1.msra.mxu0 %v416
        %700 = vmatprep.subr.mxu0 %v419
        %701 = vmatpush1.msra.mxu0 %v418
        %702 = vmatprep.subr.mxu0 %v421
        %703 = vmatpush1.msra.mxu0 %v420
        %704 = vmatprep.subr.mxu0 %v423
        %705 = vmatpush1.msra.mxu0 %v422
        %706 = vmatprep.subr.mxu0 %v425
        %707 = vmatpush1.msra.mxu0 %v424
        %708 = vmatprep.subr.mxu0 %v427
        %709 = vmatpush1.msra.mxu0 %v426
        %710 = vmatprep.subr.mxu0 %v429
        %711 = vmatpush1.msra.mxu0 %v428
        %712 = vmatprep.subr.mxu0 %v431
        %713 = vmatpush1.msra.mxu0 %v430
        %714 = vmatprep.subr.mxu0 %v433
        %715 = vmatpush1.msra.mxu0 %v432
        %716 = vmatprep.subr.mxu0 %v435
        %717 = vmatpush1.msra.mxu0 %v434
        %718 = vmatprep.subr.mxu0 %v437
        %719 = vmatpush1.msra.mxu0 %v436
        %720 = vmatprep.subr.mxu0 %v439
        %721 = vmatpush1.msra.mxu0 %v438
        %722 = vmatprep.subr.mxu0 %v441
        %723 = vmatpush1.msra.mxu0 %v440
        %724 = vmatprep.subr.mxu0 %v443
        %725 = vmatpush1.msra.mxu0 %v442
        %726 = vmatprep.subr.mxu0 %v445
        %727 = vmatpush1.msra.mxu0 %v444
        %728 = vmatprep.subr.mxu0 %v447
        %729 = vmatpush1.msra.mxu0 %v446
        %730 = vmatprep.subr.mxu0 %v449
        %731 = vmatpush1.msra.mxu0 %v448
        %732 = vmatprep.subr.mxu0 %v451
        %733 = vmatpush1.msra.mxu0 %v450
        %734 = vmatprep.subr.mxu0 %v453
        %735 = vmatpush1.msra.mxu0 %v452
        %736 = vmatprep.subr.mxu0 %v455
        %737 = vmatpush1.msra.mxu0 %v454
        %738 = vmatprep.mubr.f32.mxu0 %v253
        %739 = vmatmul.mubr.f32.gmra.mrb[0].mxu0 %v252
        %v740 = vpop.f32.mrb[0].mxu0
        %v741 = vadd.f32 %v664, %v740
        %v742 = vpop.f32.mrb[0].mxu0
        %v743 = vadd.f32 %v666, %v742
        %744 = vmatprep.mubr.f32.mxu0 %v261
        %745 = vmatmul.mubr.f32.gmra.mrb[0].mxu0 %v260
        %v746 = vpop.f32.mrb[0].mxu0
        %v747 = vadd.f32 %v670, %v746
        %v748 = vpop.f32.mrb[0].mxu0
        %v749 = vadd.f32 %v672, %v748
        %750 = vdwg.mxu0
        %751 = vmatprep.subr.mxu0 %v457
        %752 = vmatpush1.msra.mxu0 %v456
        %753 = vmatprep.subr.mxu0 %v459
        %754 = vmatpush1.msra.mxu0 %v458
        %755 = vmatprep.subr.mxu0 %v461
        %756 = vmatpush1.msra.mxu0 %v460
        %757 = vmatprep.subr.mxu0 %v463
        %758 = vmatpush1.msra.mxu0 %v462
        %759 = vmatprep.subr.mxu0 %v465
        %760 = vmatpush1.msra.mxu0 %v464
        %761 = vmatprep.subr.mxu0 %v467
        %762 = vmatpush1.msra.mxu0 %v466
        %763 = vmatprep.subr.mxu0 %v469
        %764 = vmatpush1.msra.mxu0 %v468
        %765 = vmatprep.subr.mxu0 %v471
        %766 = vmatpush1.msra.mxu0 %v470
        %767 = vmatprep.subr.mxu0 %v473
        %768 = vmatpush1.msra.mxu0 %v472
        %769 = vmatprep.subr.mxu0 %v475
        %770 = vmatpush1.msra.mxu0 %v474
        %771 = vmatprep.subr.mxu0 %v477
        %772 = vmatpush1.msra.mxu0 %v476
        %773 = vmatprep.subr.mxu0 %v479
        %774 = vmatpush1.msra.mxu0 %v478
        %775 = vmatprep.subr.mxu0 %v481
        %776 = vmatpush1.msra.mxu0 %v480
        %777 = vmatprep.subr.mxu0 %v483
        %778 = vmatpush1.msra.mxu0 %v482
        %779 = vmatprep.subr.mxu0 %v485
        %780 = vmatpush1.msra.mxu0 %v484
        %781 = vmatprep.subr.mxu0 %v487
        %782 = vmatpush1.msra.mxu0 %v486
        %783 = vmatprep.subr.mxu0 %v489
        %784 = vmatpush1.msra.mxu0 %v488
        %785 = vmatprep.subr.mxu0 %v491
        %786 = vmatpush1.msra.mxu0 %v490
        %787 = vmatprep.subr.mxu0 %v493
        %788 = vmatpush1.msra.mxu0 %v492
        %789 = vmatprep.subr.mxu0 %v495
        %790 = vmatpush1.msra.mxu0 %v494
        %791 = vmatprep.subr.mxu0 %v497
        %792 = vmatpush1.msra.mxu0 %v496
        %793 = vmatprep.subr.mxu0 %v499
        %794 = vmatpush1.msra.mxu0 %v498
        %795 = vmatprep.subr.mxu0 %v501
        %796 = vmatpush1.msra.mxu0 %v500
        %797 = vmatprep.subr.mxu0 %v503
        %798 = vmatpush1.msra.mxu0 %v502
        %799 = vmatprep.subr.mxu0 %v505
        %800 = vmatpush1.msra.mxu0 %v504
        %801 = vmatprep.subr.mxu0 %v507
        %802 = vmatpush1.msra.mxu0 %v506
        %803 = vmatprep.subr.mxu0 %v509
        %804 = vmatpush1.msra.mxu0 %v508
        %805 = vmatprep.subr.mxu0 %v511
        %806 = vmatpush1.msra.mxu0 %v510
        %807 = vmatprep.subr.mxu0 %v513
        %808 = vmatpush1.msra.mxu0 %v512
        %809 = vmatprep.subr.mxu0 %v515
        %810 = vmatpush1.msra.mxu0 %v514
        %811 = vmatprep.subr.mxu0 %v517
        %812 = vmatpush1.msra.mxu0 %v516
        %813 = vmatprep.subr.mxu0 %v519
        %814 = vmatpush1.msra.mxu0 %v518
        %815 = vmatprep.mubr.f32.mxu0 %v255
        %816 = vmatmul.mubr.f32.gmra.mrb[0].mxu0 %v254
        %v817 = vpop.f32.mrb[0].mxu0
        %v818 = vadd.f32 %v741, %v817
        %v819 = vpop.f32.mrb[0].mxu0
        %v820 = vadd.f32 %v743, %v819
        %821 = vmatprep.mubr.f32.mxu0 %v263
        %822 = vmatmul.mubr.f32.gmra.mrb[0].mxu0 %v262
        %v823 = vpop.f32.mrb[0].mxu0
        %v824 = vadd.f32 %v747, %v823
        %v825 = vpop.f32.mrb[0].mxu0
        %v826 = vadd.f32 %v749, %v825
        %827 = vdwg.mxu0
        %v828 = vadd.f32 %v244, %v818
        %v829 = vadd.f32 %v245, %v820
        %v830 = vadd.f32 %v246, %v824
        %v831 = vadd.f32 %v247, %v826
        %832 = vst [vmem:[#allocation2] sm:$0xff] %v828
        %833 = vst [vmem:[#allocation2 + $0x8] sm:$0xff] %v829
        %834 = vst [vmem:[#allocation2 + $0x10] sm:$0xff] %v830
        %835 = vst [vmem:[#allocation2 + $0x18] sm:$0xff] %v831
        %p836 = scmp.eq.s32.totalorder %s18, 1
        // Predicated region
        $region56: #{forward_pallas.7} parent=46 // pred_check
          %p837 = pneg %p836
        $region57: #{forward_pallas.7} parent=46 // pred_check_branch
          %839 = sbr.rel (%p837) target = $region59
        $region58: #{forward_pallas.7} parent=46 // pred_region
          %v840 = vld [vmem:[#allocation2] sm:$0xff]
          %v841 = vld [vmem:[#allocation2 + $0x8] sm:$0xff]
          %v842 = vld [vmem:[#allocation2 + $0x10] sm:$0xff]
          %v843 = vld [vmem:[#allocation2 + $0x18] sm:$0xff]
          %v844 = vadd.f32 %v840, %v842
          %v845 = vrot.slane %v844, 4
          %v846 = vadd.f32 %v844, %v845
          %v847 = vrot.slane %v846, 2
          %v848 = vadd.f32 %v846, %v847
          %v849 = vrot.slane %v848, 1
          %v850 = vadd.f32 %v848, %v849
          %v851 = vadd.f32 %v841, %v843
          %v852 = vrot.slane %v851, 4
          %v853 = vadd.f32 %v851, %v852
          %v854 = vrot.slane %v853, 2
          %v855 = vadd.f32 %v853, %v854
          %v856 = vrot.slane %v855, 1
          %v857 = vadd.f32 %v855, %v856
          %v858 = vmul.f32 %v850, 0.0625
          %v859 = vmul.f32 %v857, 0.0625
          %v860 = vsub.f32 %v840, %v858
          %v861 = vsub.f32 %v841, %v859
          %v862 = vsub.f32 %v842, %v858
          %v863 = vsub.f32 %v843, %v859
          %v864 = vmul.f32 %v860, %v860
          %v865 = vmul.f32 %v861, %v861
          %v866 = vmul.f32 %v862, %v862
          %v867 = vmul.f32 %v863, %v863
          %v868 = vadd.f32 %v864, %v866
          %v869 = vrot.slane %v868, 4
          %v870 = vadd.f32 %v868, %v869
          %v871 = vrot.slane %v870, 2
          %v872 = vadd.f32 %v870, %v871
          %v873 = vrot.slane %v872, 1
          %v874 = vadd.f32 %v872, %v873
          %v875 = vadd.f32 %v865, %v867
          %v876 = vrot.slane %v875, 4
          %v877 = vadd.f32 %v875, %v876
          %v878 = vrot.slane %v877, 2
          %v879 = vadd.f32 %v877, %v878
          %v880 = vrot.slane %v879, 1
          %v881 = vadd.f32 %v879, %v880
          %v882 = vmul.f32 %v874, 0.0625
          %v883 = vmul.f32 %v881, 0.0625
          %v884 = vadd.f32 %v882, 1e-05
          %v885 = vadd.f32 %v883, 1e-05
          %v886 = vrsqrt.pop %v884
          %v887 = vrsqrt.pop %v885
          %v888 = vmul.f32 %v860, %v886
          %v889 = vmul.f32 %v861, %v887
          %v890 = vmul.f32 %v862, %v886
          %v891 = vmul.f32 %v863, %v887
          %vm892 = vcmp.ge.f32.partialorder %v888, 0.0
          %vm893 = vcmp.ge.f32.partialorder %v889, 0.0
          %vm894 = vcmp.ge.f32.partialorder %v890, 0.0
          %vm895 = vcmp.ge.f32.partialorder %v891, 0.0
          %v896 = vmul.f32 %v888, 0.2
          %v897 = vmul.f32 %v889, 0.2
          %v898 = vmul.f32 %v890, 0.2
          %v899 = vmul.f32 %v891, 0.2
          %v900 = vsel %vm892, %v888, %v896
          %v901 = vsel %vm893, %v889, %v897
          %v902 = vsel %vm894, %v890, %v898
          %v903 = vsel %vm895, %v891, %v899
          %904 = vst [vmem:[%s235] sm:$0xff] %v900
          %905 = vst [vmem:[%s235 + $0x8] sm:$0xff] %v901
          %906 = vst [vmem:[%s235 + $0x10] sm:$0xff] %v902
          %907 = vst [vmem:[%s235 + $0x18] sm:$0xff] %v903
        $region59: #{forward_pallas.7} parent=46 // pred_fallthru
          _
        %p908 = scmp.lt.s32.totalorder %s17, 1
        %s909 = scalar_select %p908, %s17, 1
        %s910 = smul.addr %s909, 4
        %s911 = smul.addr %s910, 8
        %s912 = scalar_lea.vmem %s2, %s911
        // Predicated region
        $region60: #{forward_pallas.7} parent=46 // pred_check
          %p913 = pneg %p97
        $region61: #{forward_pallas.7} parent=46 // pred_check_branch
          %915 = sbr.rel (%p913) target = $region63
        $region62: #{forward_pallas.7} parent=46 // pred_region
          _
        $region63: #{forward_pallas.7} parent=46 // pred_fallthru
          _
      $region47: #{forward_pallas.7} parent=5 // pred_fallthru
        _
      %p916 = scmp.le.s32.totalorder 2, %s8
      // Predicated region
      $region64: #{forward_pallas.7} parent=5 // pred_check
        %p917 = pneg %p916
      $region65: #{forward_pallas.7} parent=5 // pred_check_branch
        %919 = sbr.rel (%p917) target = $region67
      $region66: #{forward_pallas.7} parent=5 // pred_region
        %s920 = ssub.s32 %s8, 2
        // Predicated region
        $region68: #{forward_pallas.7} parent=66 // pred_check
          %p921 = pneg %p103
        $region69: #{forward_pallas.7} parent=66 // pred_check_branch
          %923 = sbr.rel (%p921) target = $region71
        $region70: #{forward_pallas.7} parent=66 // pred_region
          %p924 = scmp.lt.s32.totalorder %s19, 1
          %s925 = scalar_select %p924, %s19, 1
          %s926 = smul.addr %s925, 4
          %s927 = smul.addr %s926, 8
          %s928 = scalar_lea.vmem %s2, %s927
        $region71: #{forward_pallas.7} parent=66 // pred_fallthru
          _
      $region67: #{forward_pallas.7} parent=5 // pred_fallthru
        _
    $region6: #{forward_pallas.7} parent=1 // loop_footer
      %s12 = sadd.s32 1, %s8
    $region7: #{forward_pallas.7} parent=1 // loop_footer_branch
      %7 = sbr.rel target = $region3
    $region8: #{forward_pallas.7} parent=1 // loop_exit
      _

// kernel: forward_pallas.8
$region0: #{forward_pallas.8}
  #allocation0 [shape = 'u32[]', space=smem, size = 0x4, offset = 0x4, fixed_abs, tag = 'smem constant byte address 0x4 - core index']
  #allocation1 [shape = 'u32[144,128]{1,0:T(1,128)}', space=vmem, size = 0x12000, scoped, tag = 'internal scratch']
  #allocation2 [shape = 'f32[8,512]{1,0:T(8,128)}', space=vmem, size = 0x4000, scoped, tag = 'scratch operand']
  %s0 = inlined_call_operand.vmem [shape: f32[2,8,4096], index: 0, kind: input, shape index: {}]
  %s1 = inlined_call_operand.vmem [shape: f32[4096,512], index: 1, kind: input, shape index: {}]
  %s2 = inlined_call_operand.vmem [shape: f32[2,8,512], index: 2, kind: output, shape index: {}]
  %s3 = sld [smem:[#allocation0]]
  $region49: #{forward_pallas.8} parent=0
    _
  %s5 = ssub.s32 1, %s3
  %s6 = scalar_select 0, %s5, %s3
  loop: start=0, step=1, limit=10
  $region2: #{forward_pallas.8} parent=0 // loop_pre_header
    _
  $region3: #{forward_pallas.8} parent=0 // loop_header
    %s8 = sphi 0, %s12
    %p9 = scmp.ge.s32.totalorder %s8, 10
    %s15 = sphi 0, %s27
    %s16 = sphi 0, %s23
    %s17 = sphi 0, %s15
    %s18 = sphi 0, %s16
    %s19 = sphi 0, %s17
    %s20 = sphi 0, %s18
    %s32 = sphi 0, %s34
    %s35 = sphi 0, %s32
    %s36 = sphi 0, %s35
    %s52 = sphi 0, %s36
    %s58 = sphi 0, %s60
    %s61 = sphi 0, %s58
    %s62 = sphi 0, %s61
    %s78 = sphi 0, %s62
    %s84 = sphi 0, %s86
    %s87 = sphi 0, %s84
    %s88 = sphi 0, %s87
    %s104 = sphi 0, %s88
  $region4: #{forward_pallas.8} parent=0 // loop_header_branch
    %11 = sbr.rel (%p9) target = $region8
  $region5: #{forward_pallas.8} parent=0 // loop_body
    %s13 = ssub.s32 %s8, 1
    %s14 = ssub.s32 %s8, 2
    %s21 = sadd.s32 1, %s16
    %p22 = scmp.ge.s32.totalorder %s21, 4
    %s23 = scalar_select %p22, 0, %s21
    %s24 = sadd.s32 1, %s15
    %s25 = scalar_select %p22, %s24, %s15
    %p26 = scmp.ge.s32.totalorder %s25, 2
    %s27 = scalar_select %p26, 0, %s25
    %s28 = ssub.s32 %s15, %s27
    %s29 = ssub.s32 %s16, %s23
    %s30 = sor.u32 %s28, %s29
    %p31 = scmp.eq.s32.totalorder %s30, 0
    %s33 = sadd.s32 %s32, 1
    %s34 = scalar_select %p31, %s32, %s33
    %p37 = pneg %p31
    %p38 = scmp.eq.s32.totalorder %s8, 7
    %p39 = por %p37, %p38
    %p40 = scmp.ne.s32.totalorder %s32, %s35
    %p41 = scmp.eq.s32.totalorder %s8, 0
    %p42 = por %p40, %p41
    %p43 = scmp.ne.s32.totalorder %s32, %s35
    %p44 = scmp.eq.s32.totalorder %s13, 7
    %p45 = por %p43, %p44
    %p46 = scmp.ne.s32.totalorder %s35, %s36
    %p47 = scmp.eq.s32.totalorder %s13, 0
    %p48 = por %p46, %p47
    %p49 = scmp.ne.s32.totalorder %s35, %s36
    %p50 = scmp.eq.s32.totalorder %s14, 7
    %p51 = por %p49, %p50
    %p53 = scmp.ne.s32.totalorder %s36, %s52
    %p54 = scmp.eq.s32.totalorder %s14, 0
    %p55 = por %p53, %p54
    %s56 = ssub.s32 %s16, %s23
    %p57 = scmp.eq.s32.totalorder %s56, 0
    %s59 = sadd.s32 %s58, 1
    %s60 = scalar_select %p57, %s58, %s59
    %p63 = pneg %p57
    %p64 = scmp.eq.s32.totalorder %s8, 7
    %p65 = por %p63, %p64
    %p66 = scmp.ne.s32.totalorder %s58, %s61
    %p67 = scmp.eq.s32.totalorder %s8, 0
    %p68 = por %p66, %p67
    %p69 = scmp.ne.s32.totalorder %s58, %s61
    %p70 = scmp.eq.s32.totalorder %s13, 7
    %p71 = por %p69, %p70
    %p72 = scmp.ne.s32.totalorder %s61, %s62
    %p73 = scmp.eq.s32.totalorder %s13, 0
    %p74 = por %p72, %p73
    %p75 = scmp.ne.s32.totalorder %s61, %s62
    %p76 = scmp.eq.s32.totalorder %s14, 7
    %p77 = por %p75, %p76
    %p79 = scmp.ne.s32.totalorder %s62, %s78
    %p80 = scmp.eq.s32.totalorder %s14, 0
    %p81 = por %p79, %p80
    %s82 = ssub.s32 %s15, %s27
    %p83 = scmp.eq.s32.totalorder %s82, 0
    %s85 = sadd.s32 %s84, 1
    %s86 = scalar_select %p83, %s84, %s85
    %p89 = pneg %p83
    %p90 = scmp.eq.s32.totalorder %s8, 7
    %p91 = por %p89, %p90
    %p92 = scmp.ne.s32.totalorder %s84, %s87
    %p93 = scmp.eq.s32.totalorder %s8, 0
    %p94 = por %p92, %p93
    %p95 = scmp.ne.s32.totalorder %s84, %s87
    %p96 = scmp.eq.s32.totalorder %s13, 7
    %p97 = por %p95, %p96
    %p98 = scmp.ne.s32.totalorder %s87, %s88
    %p99 = scmp.eq.s32.totalorder %s13, 0
    %p100 = por %p98, %p99
    %p101 = scmp.ne.s32.totalorder %s87, %s88
    %p102 = scmp.eq.s32.totalorder %s14, 7
    %p103 = por %p101, %p102
    %p105 = scmp.ne.s32.totalorder %s88, %s104
    %p106 = scmp.eq.s32.totalorder %s14, 0
    %p107 = por %p105, %p106
    %p108 = scmp.le.s32.totalorder 1, %s8
    %p109 = scmp.lt.s32.totalorder %s8, 9
    %p110 = pnand %p108, %p109
    %p111 = pneg %p110
    // Predicated region
    $region9: #{forward_pallas.8} parent=5 // pred_check
      _
    $region10: #{forward_pallas.8} parent=5 // pred_check_branch
      %113 = sbr.rel (%p110) target = $region12
    $region11: #{forward_pallas.8} parent=5 // pred_region
      %s114 = ssub.s32 %s8, 1
    $region12: #{forward_pallas.8} parent=5 // pred_fallthru
      _
    %p115 = scmp.lt.s32.totalorder %s8, 8
    // Predicated region
    $region13: #{forward_pallas.8} parent=5 // pred_check
      %p116 = pneg %p115
    $region14: #{forward_pallas.8} parent=5 // pred_check_branch
      %118 = sbr.rel (%p116) target = $region16
    $region15: #{forward_pallas.8} parent=5 // pred_region
      // Predicated region
      $region17: #{forward_pallas.8} parent=15 // pred_check
        %p119 = pneg %p42
      $region18: #{forward_pallas.8} parent=15 // pred_check_branch
        %121 = sbr.rel (%p119) target = $region20
      $region19: #{forward_pallas.8} parent=15 // pred_region
        %s122 = smul.u32 8, %s16
        %p123 = scmp.lt.s32.totalorder %s15, 1
        %s124 = scalar_select %p123, %s15, 1
        %p125 = scmp.lt.s32.totalorder %s122, 31
        %s126 = scalar_select %p125, %s122, 31
        %s127 = smul.addr %s124, 32
        %s128 = sadd.s32 %s126, %s127
        %s129 = smul.addr %s128, 8
        %s130 = scalar_lea.vmem %s0, %s129
        %s131 = smul.u32 8, %s16
      $region20: #{forward_pallas.8} parent=15 // pred_fallthru
        _
      // Predicated region
      $region21: #{forward_pallas.8} parent=15 // pred_check
        %p132 = pneg %p68
      $region22: #{forward_pallas.8} parent=15 // pred_check_branch
        %134 = sbr.rel (%p132) target = $region24
      $region23: #{forward_pallas.8} parent=15 // pred_region
        %s135 = smul.u32 128, %s16
        %p136 = scmp.lt.s32.totalorder %s135, 511
        %s137 = scalar_select %p136, %s135, 511
        %s138 = smul.addr %s137, 4
        %s139 = smul.addr %s138, 8
        %s140 = scalar_lea.vmem %s1, %s139
        %s141 = smul.u32 128, %s16
      $region24: #{forward_pallas.8} parent=15 // pred_fallthru
        _
    $region16: #{forward_pallas.8} parent=5 // pred_fallthru
      _
    %p142 = scmp.le.s32.totalorder 1, %s8
    %p143 = scmp.lt.s32.totalorder %s8, 9
    %p144 = pnand %p142, %p143
    %p145 = pneg %p144
    // Predicated region
    $region25: #{forward_pallas.8} parent=5 // pred_check
      _
    $region26: #{forward_pallas.8} parent=5 // pred_check_branch
      %147 = sbr.rel (%p144) target = $region28
    $region27: #{forward_pallas.8} parent=5 // pred_region
      %s148 = ssub.s32 %s8, 1
      %s149 = smul.u32 8, %s18
      %p150 = scmp.lt.s32.totalorder %s17, 1
      %s151 = scalar_select %p150, %s17, 1
      %p152 = scmp.lt.s32.totalorder %s149, 31
      %s153 = scalar_select %p152, %s149, 31
      %s154 = smul.addr %s151, 32
      %s155 = sadd.s32 %s153, %s154
      %s156 = smul.addr %s155, 8
      %s157 = scalar_lea.vmem %s0, %s156
      %p158 = pneg %p48
      %p159 = pneg %p45
      %s160 = smul.u32 128, %s18
      %p161 = scmp.lt.s32.totalorder %s160, 511
      %s162 = scalar_select %p161, %s160, 511
      %s163 = smul.addr %s162, 4
      %s164 = smul.addr %s163, 8
      %s165 = scalar_lea.vmem %s1, %s164
      %p166 = pneg %p74
      %p167 = pneg %p71
      %p168 = pneg %p100
      %p169 = pneg %p97
      %p170 = scmp.lt.s32.totalorder %s17, 1
      %s171 = scalar_select %p170, %s17, 1
      %s172 = smul.addr %s171, 4
      %s173 = smul.addr %s172, 8
      %s174 = scalar_lea.vmem %s2, %s173
      %s175 = smul.u32 8, %s18
      %p176 = scmp.lt.s32.totalorder %s17, 1
      %s177 = scalar_select %p176, %s17, 1
      %p178 = scmp.lt.s32.totalorder %s175, 31
      %s179 = scalar_select %p178, %s175, 31
      %s180 = smul.addr %s177, 32
      %s181 = sadd.s32 %s179, %s180
      %s182 = smul.addr %s181, 8
      %s183 = scalar_lea.vmem %s0, %s182
      %s184 = smul.u32 8, %s18
      %s185 = smul.u32 128, %s18
      %p186 = scmp.lt.s32.totalorder %s185, 511
      %s187 = scalar_select %p186, %s185, 511
      %s188 = smul.addr %s187, 4
      %s189 = smul.addr %s188, 8
      %s190 = scalar_lea.vmem %s1, %s189
      %s191 = smul.u32 128, %s18
      %p192 = scmp.lt.s32.totalorder %s17, 1
      %s193 = scalar_select %p192, %s17, 1
      %s194 = smul.addr %s193, 4
      %s195 = smul.addr %s194, 8
      %s196 = scalar_lea.vmem %s2, %s195
      %p197 = scmp.eq.s32.totalorder %s18, 0
      // Predicated region
      $region29: #{forward_pallas.8} parent=27 // pred_check
        %p198 = pneg %p197
      $region30: #{forward_pallas.8} parent=27 // pred_check_branch
        %200 = sbr.rel (%p198) target = $region32
      $region31: #{forward_pallas.8} parent=27 // pred_region
        %201 = vst [vmem:[#allocation2] sm:$0xff] 0.0
        %202 = vst [vmem:[#allocation2 + $0x8] sm:$0xff] 0.0
        %203 = vst [vmem:[#allocation2 + $0x10] sm:$0xff] 0.0
        %204 = vst [vmem:[#allocation2 + $0x18] sm:$0xff] 0.0
      $region32: #{forward_pallas.8} parent=27 // pred_fallthru
        _
      %v205 = vld [vmem:[#allocation2] sm:$0xff]
      %v206 = vld [vmem:[#allocation2 + $0x8] sm:$0xff]
      %v207 = vld [vmem:[#allocation2 + $0x10] sm:$0xff]
      %v208 = vld [vmem:[#allocation2 + $0x18] sm:$0xff]
      %v209 = vld [vmem:[%s183] sm:$0xff]
      %v210 = vld [vmem:[%s183 + $0x8] sm:$0xff]
      %v211 = vld [vmem:[%s183 + $0x10] sm:$0xff]
      %v212 = vld [vmem:[%s183 + $0x18] sm:$0xff]
      %v213 = vld [vmem:[%s183 + $0x20] sm:$0xff]
      %v214 = vld [vmem:[%s183 + $0x28] sm:$0xff]
      %v215 = vld [vmem:[%s183 + $0x30] sm:$0xff]
      %v216 = vld [vmem:[%s183 + $0x38] sm:$0xff]
      %v217 = vld [vmem:[%s190] sm:$0xff]
      %v218 = vld [vmem:[%s190 + $0x8] sm:$0xff]
      %v219 = vld [vmem:[%s190 + $0x10] sm:$0xff]
      %v220 = vld [vmem:[%s190 + $0x18] sm:$0xff]
      %v221 = vld [vmem:[%s190 + $0x20] sm:$0xff]
      %v222 = vld [vmem:[%s190 + $0x28] sm:$0xff]
      %v223 = vld [vmem:[%s190 + $0x30] sm:$0xff]
      %v224 = vld [vmem:[%s190 + $0x38] sm:$0xff]
      %v225 = vld [vmem:[%s190 + $0x40] sm:$0xff]
      %v226 = vld [vmem:[%s190 + $0x48] sm:$0xff]
      %v227 = vld [vmem:[%s190 + $0x50] sm:$0xff]
      %v228 = vld [vmem:[%s190 + $0x58] sm:$0xff]
      %v229 = vld [vmem:[%s190 + $0x60] sm:$0xff]
      %v230 = vld [vmem:[%s190 + $0x68] sm:$0xff]
      %v231 = vld [vmem:[%s190 + $0x70] sm:$0xff]
      %v232 = vld [vmem:[%s190 + $0x78] sm:$0xff]
      %v233 = vld [vmem:[%s190 + $0x80] sm:$0xff]
      %v234 = vld [vmem:[%s190 + $0x88] sm:$0xff]
      %v235 = vld [vmem:[%s190 + $0x90] sm:$0xff]
      %v236 = vld [vmem:[%s190 + $0x98] sm:$0xff]
      %v237 = vld [vmem:[%s190 + $0xa0] sm:$0xff]
      %v238 = vld [vmem:[%s190 + $0xa8] sm:$0xff]
      %v239 = vld [vmem:[%s190 + $0xb0] sm:$0xff]
      %v240 = vld [vmem:[%s190 + $0xb8] sm:$0xff]
      %v241 = vld [vmem:[%s190 + $0xc0] sm:$0xff]
      %v242 = vld [vmem:[%s190 + $0xc8] sm:$0xff]
      %v243 = vld [vmem:[%s190 + $0xd0] sm:$0xff]
      %v244 = vld [vmem:[%s190 + $0xd8] sm:$0xff]
      %v245 = vld [vmem:[%s190 + $0xe0] sm:$0xff]
      %v246 = vld [vmem:[%s190 + $0xe8] sm:$0xff]
      %v247 = vld [vmem:[%s190 + $0xf0] sm:$0xff]
      %v248 = vld [vmem:[%s190 + $0xf8] sm:$0xff]
      %v249 = vld [vmem:[%s190 + $0x100] sm:$0xff]
      %v250 = vld [vmem:[%s190 + $0x108] sm:$0xff]
      %v251 = vld [vmem:[%s190 + $0x110] sm:$0xff]
      %v252 = vld [vmem:[%s190 + $0x118] sm:$0xff]
      %v253 = vld [vmem:[%s190 + $0x120] sm:$0xff]
      %v254 = vld [vmem:[%s190 + $0x128] sm:$0xff]
      %v255 = vld [vmem:[%s190 + $0x130] sm:$0xff]
      %v256 = vld [vmem:[%s190 + $0x138] sm:$0xff]
      %v257 = vld [vmem:[%s190 + $0x140] sm:$0xff]
      %v258 = vld [vmem:[%s190 + $0x148] sm:$0xff]
      %v259 = vld [vmem:[%s190 + $0x150] sm:$0xff]
      %v260 = vld [vmem:[%s190 + $0x158] sm:$0xff]
      %v261 = vld [vmem:[%s190 + $0x160] sm:$0xff]
      %v262 = vld [vmem:[%s190 + $0x168] sm:$0xff]
      %v263 = vld [vmem:[%s190 + $0x170] sm:$0xff]
      %v264 = vld [vmem:[%s190 + $0x178] sm:$0xff]
      %v265 = vld [vmem:[%s190 + $0x180] sm:$0xff]
      %v266 = vld [vmem:[%s190 + $0x188] sm:$0xff]
      %v267 = vld [vmem:[%s190 + $0x190] sm:$0xff]
      %v268 = vld [vmem:[%s190 + $0x198] sm:$0xff]
      %v269 = vld [vmem:[%s190 + $0x1a0] sm:$0xff]
      %v270 = vld [vmem:[%s190 + $0x1a8] sm:$0xff]
      %v271 = vld [vmem:[%s190 + $0x1b0] sm:$0xff]
      %v272 = vld [vmem:[%s190 + $0x1b8] sm:$0xff]
      %v273 = vld [vmem:[%s190 + $0x1c0] sm:$0xff]
      %v274 = vld [vmem:[%s190 + $0x1c8] sm:$0xff]
      %v275 = vld [vmem:[%s190 + $0x1d0] sm:$0xff]
      %v276 = vld [vmem:[%s190 + $0x1d8] sm:$0xff]
      %v277 = vld [vmem:[%s190 + $0x1e0] sm:$0xff]
      %v278 = vld [vmem:[%s190 + $0x1e8] sm:$0xff]
      %v279 = vld [vmem:[%s190 + $0x1f0] sm:$0xff]
      %v280 = vld [vmem:[%s190 + $0x1f8] sm:$0xff]
      %v281 = vld [vmem:[%s190 + $0x200] sm:$0xff]
      %v282 = vld [vmem:[%s190 + $0x208] sm:$0xff]
      %v283 = vld [vmem:[%s190 + $0x210] sm:$0xff]
      %v284 = vld [vmem:[%s190 + $0x218] sm:$0xff]
      %v285 = vld [vmem:[%s190 + $0x220] sm:$0xff]
      %v286 = vld [vmem:[%s190 + $0x228] sm:$0xff]
      %v287 = vld [vmem:[%s190 + $0x230] sm:$0xff]
      %v288 = vld [vmem:[%s190 + $0x238] sm:$0xff]
      %v289 = vld [vmem:[%s190 + $0x240] sm:$0xff]
      %v290 = vld [vmem:[%s190 + $0x248] sm:$0xff]
      %v291 = vld [vmem:[%s190 + $0x250] sm:$0xff]
      %v292 = vld [vmem:[%s190 + $0x258] sm:$0xff]
      %v293 = vld [vmem:[%s190 + $0x260] sm:$0xff]
      %v294 = vld [vmem:[%s190 + $0x268] sm:$0xff]
      %v295 = vld [vmem:[%s190 + $0x270] sm:$0xff]
      %v296 = vld [vmem:[%s190 + $0x278] sm:$0xff]
      %v297 = vld [vmem:[%s190 + $0x280] sm:$0xff]
      %v298 = vld [vmem:[%s190 + $0x288] sm:$0xff]
      %v299 = vld [vmem:[%s190 + $0x290] sm:$0xff]
      %v300 = vld [vmem:[%s190 + $0x298] sm:$0xff]
      %v301 = vld [vmem:[%s190 + $0x2a0] sm:$0xff]
      %v302 = vld [vmem:[%s190 + $0x2a8] sm:$0xff]
      %v303 = vld [vmem:[%s190 + $0x2b0] sm:$0xff]
      %v304 = vld [vmem:[%s190 + $0x2b8] sm:$0xff]
      %v305 = vld [vmem:[%s190 + $0x2c0] sm:$0xff]
      %v306 = vld [vmem:[%s190 + $0x2c8] sm:$0xff]
      %v307 = vld [vmem:[%s190 + $0x2d0] sm:$0xff]
      %v308 = vld [vmem:[%s190 + $0x2d8] sm:$0xff]
      %v309 = vld [vmem:[%s190 + $0x2e0] sm:$0xff]
      %v310 = vld [vmem:[%s190 + $0x2e8] sm:$0xff]
      %v311 = vld [vmem:[%s190 + $0x2f0] sm:$0xff]
      %v312 = vld [vmem:[%s190 + $0x2f8] sm:$0xff]
      %v313 = vld [vmem:[%s190 + $0x300] sm:$0xff]
      %v314 = vld [vmem:[%s190 + $0x308] sm:$0xff]
      %v315 = vld [vmem:[%s190 + $0x310] sm:$0xff]
      %v316 = vld [vmem:[%s190 + $0x318] sm:$0xff]
      %v317 = vld [vmem:[%s190 + $0x320] sm:$0xff]
      %v318 = vld [vmem:[%s190 + $0x328] sm:$0xff]
      %v319 = vld [vmem:[%s190 + $0x330] sm:$0xff]
      %v320 = vld [vmem:[%s190 + $0x338] sm:$0xff]
      %v321 = vld [vmem:[%s190 + $0x340] sm:$0xff]
      %v322 = vld [vmem:[%s190 + $0x348] sm:$0xff]
      %v323 = vld [vmem:[%s190 + $0x350] sm:$0xff]
      %v324 = vld [vmem:[%s190 + $0x358] sm:$0xff]
      %v325 = vld [vmem:[%s190 + $0x360] sm:$0xff]
      %v326 = vld [vmem:[%s190 + $0x368] sm:$0xff]
      %v327 = vld [vmem:[%s190 + $0x370] sm:$0xff]
      %v328 = vld [vmem:[%s190 + $0x378] sm:$0xff]
      %v329 = vld [vmem:[%s190 + $0x380] sm:$0xff]
      %v330 = vld [vmem:[%s190 + $0x388] sm:$0xff]
      %v331 = vld [vmem:[%s190 + $0x390] sm:$0xff]
      %v332 = vld [vmem:[%s190 + $0x398] sm:$0xff]
      %v333 = vld [vmem:[%s190 + $0x3a0] sm:$0xff]
      %v334 = vld [vmem:[%s190 + $0x3a8] sm:$0xff]
      %v335 = vld [vmem:[%s190 + $0x3b0] sm:$0xff]
      %v336 = vld [vmem:[%s190 + $0x3b8] sm:$0xff]
      %v337 = vld [vmem:[%s190 + $0x3c0] sm:$0xff]
      %v338 = vld [vmem:[%s190 + $0x3c8] sm:$0xff]
      %v339 = vld [vmem:[%s190 + $0x3d0] sm:$0xff]
      %v340 = vld [vmem:[%s190 + $0x3d8] sm:$0xff]
      %v341 = vld [vmem:[%s190 + $0x3e0] sm:$0xff]
      %v342 = vld [vmem:[%s190 + $0x3e8] sm:$0xff]
      %v343 = vld [vmem:[%s190 + $0x3f0] sm:$0xff]
      %v344 = vld [vmem:[%s190 + $0x3f8] sm:$0xff]
      %v345 = vld [vmem:[%s190 + $0x400] sm:$0xff]
      %v346 = vld [vmem:[%s190 + $0x408] sm:$0xff]
      %v347 = vld [vmem:[%s190 + $0x410] sm:$0xff]
      %v348 = vld [vmem:[%s190 + $0x418] sm:$0xff]
      %v349 = vld [vmem:[%s190 + $0x420] sm:$0xff]
      %v350 = vld [vmem:[%s190 + $0x428] sm:$0xff]
      %v351 = vld [vmem:[%s190 + $0x430] sm:$0xff]
      %v352 = vld [vmem:[%s190 + $0x438] sm:$0xff]
      %v353 = vld [vmem:[%s190 + $0x440] sm:$0xff]
      %v354 = vld [vmem:[%s190 + $0x448] sm:$0xff]
      %v355 = vld [vmem:[%s190 + $0x450] sm:$0xff]
      %v356 = vld [vmem:[%s190 + $0x458] sm:$0xff]
      %v357 = vld [vmem:[%s190 + $0x460] sm:$0xff]
      %v358 = vld [vmem:[%s190 + $0x468] sm:$0xff]
      %v359 = vld [vmem:[%s190 + $0x470] sm:$0xff]
      %v360 = vld [vmem:[%s190 + $0x478] sm:$0xff]
      %v361 = vld [vmem:[%s190 + $0x480] sm:$0xff]
      %v362 = vld [vmem:[%s190 + $0x488] sm:$0xff]
      %v363 = vld [vmem:[%s190 + $0x490] sm:$0xff]
      %v364 = vld [vmem:[%s190 + $0x498] sm:$0xff]
      %v365 = vld [vmem:[%s190 + $0x4a0] sm:$0xff]
      %v366 = vld [vmem:[%s190 + $0x4a8] sm:$0xff]
      %v367 = vld [vmem:[%s190 + $0x4b0] sm:$0xff]
      %v368 = vld [vmem:[%s190 + $0x4b8] sm:$0xff]
      %v369 = vld [vmem:[%s190 + $0x4c0] sm:$0xff]
      %v370 = vld [vmem:[%s190 + $0x4c8] sm:$0xff]
      %v371 = vld [vmem:[%s190 + $0x4d0] sm:$0xff]
      %v372 = vld [vmem:[%s190 + $0x4d8] sm:$0xff]
      %v373 = vld [vmem:[%s190 + $0x4e0] sm:$0xff]
      %v374 = vld [vmem:[%s190 + $0x4e8] sm:$0xff]
      %v375 = vld [vmem:[%s190 + $0x4f0] sm:$0xff]
      %v376 = vld [vmem:[%s190 + $0x4f8] sm:$0xff]
      %v377 = vld [vmem:[%s190 + $0x500] sm:$0xff]
      %v378 = vld [vmem:[%s190 + $0x508] sm:$0xff]
      %v379 = vld [vmem:[%s190 + $0x510] sm:$0xff]
      %v380 = vld [vmem:[%s190 + $0x518] sm:$0xff]
      %v381 = vld [vmem:[%s190 + $0x520] sm:$0xff]
      %v382 = vld [vmem:[%s190 + $0x528] sm:$0xff]
      %v383 = vld [vmem:[%s190 + $0x530] sm:$0xff]
      %v384 = vld [vmem:[%s190 + $0x538] sm:$0xff]
      %v385 = vld [vmem:[%s190 + $0x540] sm:$0xff]
      %v386 = vld [vmem:[%s190 + $0x548] sm:$0xff]
      %v387 = vld [vmem:[%s190 + $0x550] sm:$0xff]
      %v388 = vld [vmem:[%s190 + $0x558] sm:$0xff]
      %v389 = vld [vmem:[%s190 + $0x560] sm:$0xff]
      %v390 = vld [vmem:[%s190 + $0x568] sm:$0xff]
      %v391 = vld [vmem:[%s190 + $0x570] sm:$0xff]
      %v392 = vld [vmem:[%s190 + $0x578] sm:$0xff]
      %v393 = vld [vmem:[%s190 + $0x580] sm:$0xff]
      %v394 = vld [vmem:[%s190 + $0x588] sm:$0xff]
      %v395 = vld [vmem:[%s190 + $0x590] sm:$0xff]
      %v396 = vld [vmem:[%s190 + $0x598] sm:$0xff]
      %v397 = vld [vmem:[%s190 + $0x5a0] sm:$0xff]
      %v398 = vld [vmem:[%s190 + $0x5a8] sm:$0xff]
      %v399 = vld [vmem:[%s190 + $0x5b0] sm:$0xff]
      %v400 = vld [vmem:[%s190 + $0x5b8] sm:$0xff]
      %v401 = vld [vmem:[%s190 + $0x5c0] sm:$0xff]
      %v402 = vld [vmem:[%s190 + $0x5c8] sm:$0xff]
      %v403 = vld [vmem:[%s190 + $0x5d0] sm:$0xff]
      %v404 = vld [vmem:[%s190 + $0x5d8] sm:$0xff]
      %v405 = vld [vmem:[%s190 + $0x5e0] sm:$0xff]
      %v406 = vld [vmem:[%s190 + $0x5e8] sm:$0xff]
      %v407 = vld [vmem:[%s190 + $0x5f0] sm:$0xff]
      %v408 = vld [vmem:[%s190 + $0x5f8] sm:$0xff]
      %v409 = vld [vmem:[%s190 + $0x600] sm:$0xff]
      %v410 = vld [vmem:[%s190 + $0x608] sm:$0xff]
      %v411 = vld [vmem:[%s190 + $0x610] sm:$0xff]
      %v412 = vld [vmem:[%s190 + $0x618] sm:$0xff]
      %v413 = vld [vmem:[%s190 + $0x620] sm:$0xff]
      %v414 = vld [vmem:[%s190 + $0x628] sm:$0xff]
      %v415 = vld [vmem:[%s190 + $0x630] sm:$0xff]
      %v416 = vld [vmem:[%s190 + $0x638] sm:$0xff]
      %v417 = vld [vmem:[%s190 + $0x640] sm:$0xff]
      %v418 = vld [vmem:[%s190 + $0x648] sm:$0xff]
      %v419 = vld [vmem:[%s190 + $0x650] sm:$0xff]
      %v420 = vld [vmem:[%s190 + $0x658] sm:$0xff]
      %v421 = vld [vmem:[%s190 + $0x660] sm:$0xff]
      %v422 = vld [vmem:[%s190 + $0x668] sm:$0xff]
      %v423 = vld [vmem:[%s190 + $0x670] sm:$0xff]
      %v424 = vld [vmem:[%s190 + $0x678] sm:$0xff]
      %v425 = vld [vmem:[%s190 + $0x680] sm:$0xff]
      %v426 = vld [vmem:[%s190 + $0x688] sm:$0xff]
      %v427 = vld [vmem:[%s190 + $0x690] sm:$0xff]
      %v428 = vld [vmem:[%s190 + $0x698] sm:$0xff]
      %v429 = vld [vmem:[%s190 + $0x6a0] sm:$0xff]
      %v430 = vld [vmem:[%s190 + $0x6a8] sm:$0xff]
      %v431 = vld [vmem:[%s190 + $0x6b0] sm:$0xff]
      %v432 = vld [vmem:[%s190 + $0x6b8] sm:$0xff]
      %v433 = vld [vmem:[%s190 + $0x6c0] sm:$0xff]
      %v434 = vld [vmem:[%s190 + $0x6c8] sm:$0xff]
      %v435 = vld [vmem:[%s190 + $0x6d0] sm:$0xff]
      %v436 = vld [vmem:[%s190 + $0x6d8] sm:$0xff]
      %v437 = vld [vmem:[%s190 + $0x6e0] sm:$0xff]
      %v438 = vld [vmem:[%s190 + $0x6e8] sm:$0xff]
      %v439 = vld [vmem:[%s190 + $0x6f0] sm:$0xff]
      %v440 = vld [vmem:[%s190 + $0x6f8] sm:$0xff]
      %v441 = vld [vmem:[%s190 + $0x700] sm:$0xff]
      %v442 = vld [vmem:[%s190 + $0x708] sm:$0xff]
      %v443 = vld [vmem:[%s190 + $0x710] sm:$0xff]
      %v444 = vld [vmem:[%s190 + $0x718] sm:$0xff]
      %v445 = vld [vmem:[%s190 + $0x720] sm:$0xff]
      %v446 = vld [vmem:[%s190 + $0x728] sm:$0xff]
      %v447 = vld [vmem:[%s190 + $0x730] sm:$0xff]
      %v448 = vld [vmem:[%s190 + $0x738] sm:$0xff]
      %v449 = vld [vmem:[%s190 + $0x740] sm:$0xff]
      %v450 = vld [vmem:[%s190 + $0x748] sm:$0xff]
      %v451 = vld [vmem:[%s190 + $0x750] sm:$0xff]
      %v452 = vld [vmem:[%s190 + $0x758] sm:$0xff]
      %v453 = vld [vmem:[%s190 + $0x760] sm:$0xff]
      %v454 = vld [vmem:[%s190 + $0x768] sm:$0xff]
      %v455 = vld [vmem:[%s190 + $0x770] sm:$0xff]
      %v456 = vld [vmem:[%s190 + $0x778] sm:$0xff]
      %v457 = vld [vmem:[%s190 + $0x780] sm:$0xff]
      %v458 = vld [vmem:[%s190 + $0x788] sm:$0xff]
      %v459 = vld [vmem:[%s190 + $0x790] sm:$0xff]
      %v460 = vld [vmem:[%s190 + $0x798] sm:$0xff]
      %v461 = vld [vmem:[%s190 + $0x7a0] sm:$0xff]
      %v462 = vld [vmem:[%s190 + $0x7a8] sm:$0xff]
      %v463 = vld [vmem:[%s190 + $0x7b0] sm:$0xff]
      %v464 = vld [vmem:[%s190 + $0x7b8] sm:$0xff]
      %v465 = vld [vmem:[%s190 + $0x7c0] sm:$0xff]
      %v466 = vld [vmem:[%s190 + $0x7c8] sm:$0xff]
      %v467 = vld [vmem:[%s190 + $0x7d0] sm:$0xff]
      %v468 = vld [vmem:[%s190 + $0x7d8] sm:$0xff]
      %v469 = vld [vmem:[%s190 + $0x7e0] sm:$0xff]
      %v470 = vld [vmem:[%s190 + $0x7e8] sm:$0xff]
      %v471 = vld [vmem:[%s190 + $0x7f0] sm:$0xff]
      %v472 = vld [vmem:[%s190 + $0x7f8] sm:$0xff]
      %v473 = vld [vmem:[%s190 + $0x800] sm:$0xff]
      %v474 = vld [vmem:[%s190 + $0x808] sm:$0xff]
      %v475 = vld [vmem:[%s190 + $0x810] sm:$0xff]
      %v476 = vld [vmem:[%s190 + $0x818] sm:$0xff]
      %v477 = vld [vmem:[%s190 + $0x820] sm:$0xff]
      %v478 = vld [vmem:[%s190 + $0x828] sm:$0xff]
      %v479 = vld [vmem:[%s190 + $0x830] sm:$0xff]
      %v480 = vld [vmem:[%s190 + $0x838] sm:$0xff]
      %v481 = vld [vmem:[%s190 + $0x840] sm:$0xff]
      %v482 = vld [vmem:[%s190 + $0x848] sm:$0xff]
      %v483 = vld [vmem:[%s190 + $0x850] sm:$0xff]
      %v484 = vld [vmem:[%s190 + $0x858] sm:$0xff]
      %v485 = vld [vmem:[%s190 + $0x860] sm:$0xff]
      %v486 = vld [vmem:[%s190 + $0x868] sm:$0xff]
      %v487 = vld [vmem:[%s190 + $0x870] sm:$0xff]
      %v488 = vld [vmem:[%s190 + $0x878] sm:$0xff]
      %v489 = vld [vmem:[%s190 + $0x880] sm:$0xff]
      %v490 = vld [vmem:[%s190 + $0x888] sm:$0xff]
      %v491 = vld [vmem:[%s190 + $0x890] sm:$0xff]
      %v492 = vld [vmem:[%s190 + $0x898] sm:$0xff]
      %v493 = vld [vmem:[%s190 + $0x8a0] sm:$0xff]
      %v494 = vld [vmem:[%s190 + $0x8a8] sm:$0xff]
      %v495 = vld [vmem:[%s190 + $0x8b0] sm:$0xff]
      %v496 = vld [vmem:[%s190 + $0x8b8] sm:$0xff]
      %v497 = vld [vmem:[%s190 + $0x8c0] sm:$0xff]
      %v498 = vld [vmem:[%s190 + $0x8c8] sm:$0xff]
      %v499 = vld [vmem:[%s190 + $0x8d0] sm:$0xff]
      %v500 = vld [vmem:[%s190 + $0x8d8] sm:$0xff]
      %v501 = vld [vmem:[%s190 + $0x8e0] sm:$0xff]
      %v502 = vld [vmem:[%s190 + $0x8e8] sm:$0xff]
      %v503 = vld [vmem:[%s190 + $0x8f0] sm:$0xff]
      %v504 = vld [vmem:[%s190 + $0x8f8] sm:$0xff]
      %v505 = vld [vmem:[%s190 + $0x900] sm:$0xff]
      %v506 = vld [vmem:[%s190 + $0x908] sm:$0xff]
      %v507 = vld [vmem:[%s190 + $0x910] sm:$0xff]
      %v508 = vld [vmem:[%s190 + $0x918] sm:$0xff]
      %v509 = vld [vmem:[%s190 + $0x920] sm:$0xff]
      %v510 = vld [vmem:[%s190 + $0x928] sm:$0xff]
      %v511 = vld [vmem:[%s190 + $0x930] sm:$0xff]
      %v512 = vld [vmem:[%s190 + $0x938] sm:$0xff]
      %v513 = vld [vmem:[%s190 + $0x940] sm:$0xff]
      %v514 = vld [vmem:[%s190 + $0x948] sm:$0xff]
      %v515 = vld [vmem:[%s190 + $0x950] sm:$0xff]
      %v516 = vld [vmem:[%s190 + $0x958] sm:$0xff]
      %v517 = vld [vmem:[%s190 + $0x960] sm:$0xff]
      %v518 = vld [vmem:[%s190 + $0x968] sm:$0xff]
      %v519 = vld [vmem:[%s190 + $0x970] sm:$0xff]
      %v520 = vld [vmem:[%s190 + $0x978] sm:$0xff]
      %v521 = vld [vmem:[%s190 + $0x980] sm:$0xff]
      %v522 = vld [vmem:[%s190 + $0x988] sm:$0xff]
      %v523 = vld [vmem:[%s190 + $0x990] sm:$0xff]
      %v524 = vld [vmem:[%s190 + $0x998] sm:$0xff]
      %v525 = vld [vmem:[%s190 + $0x9a0] sm:$0xff]
      %v526 = vld [vmem:[%s190 + $0x9a8] sm:$0xff]
      %v527 = vld [vmem:[%s190 + $0x9b0] sm:$0xff]
      %v528 = vld [vmem:[%s190 + $0x9b8] sm:$0xff]
      %v529 = vld [vmem:[%s190 + $0x9c0] sm:$0xff]
      %v530 = vld [vmem:[%s190 + $0x9c8] sm:$0xff]
      %v531 = vld [vmem:[%s190 + $0x9d0] sm:$0xff]
      %v532 = vld [vmem:[%s190 + $0x9d8] sm:$0xff]
      %v533 = vld [vmem:[%s190 + $0x9e0] sm:$0xff]
      %v534 = vld [vmem:[%s190 + $0x9e8] sm:$0xff]
      %v535 = vld [vmem:[%s190 + $0x9f0] sm:$0xff]
      %v536 = vld [vmem:[%s190 + $0x9f8] sm:$0xff]
      %v537 = vld [vmem:[%s190 + $0xa00] sm:$0xff]
      %v538 = vld [vmem:[%s190 + $0xa08] sm:$0xff]
      %v539 = vld [vmem:[%s190 + $0xa10] sm:$0xff]
      %v540 = vld [vmem:[%s190 + $0xa18] sm:$0xff]
      %v541 = vld [vmem:[%s190 + $0xa20] sm:$0xff]
      %v542 = vld [vmem:[%s190 + $0xa28] sm:$0xff]
      %v543 = vld [vmem:[%s190 + $0xa30] sm:$0xff]
      %v544 = vld [vmem:[%s190 + $0xa38] sm:$0xff]
      %v545 = vld [vmem:[%s190 + $0xa40] sm:$0xff]
      %v546 = vld [vmem:[%s190 + $0xa48] sm:$0xff]
      %v547 = vld [vmem:[%s190 + $0xa50] sm:$0xff]
      %v548 = vld [vmem:[%s190 + $0xa58] sm:$0xff]
      %v549 = vld [vmem:[%s190 + $0xa60] sm:$0xff]
      %v550 = vld [vmem:[%s190 + $0xa68] sm:$0xff]
      %v551 = vld [vmem:[%s190 + $0xa70] sm:$0xff]
      %v552 = vld [vmem:[%s190 + $0xa78] sm:$0xff]
      %v553 = vld [vmem:[%s190 + $0xa80] sm:$0xff]
      %v554 = vld [vmem:[%s190 + $0xa88] sm:$0xff]
      %v555 = vld [vmem:[%s190 + $0xa90] sm:$0xff]
      %v556 = vld [vmem:[%s190 + $0xa98] sm:$0xff]
      %v557 = vld [vmem:[%s190 + $0xaa0] sm:$0xff]
      %v558 = vld [vmem:[%s190 + $0xaa8] sm:$0xff]
      %v559 = vld [vmem:[%s190 + $0xab0] sm:$0xff]
      %v560 = vld [vmem:[%s190 + $0xab8] sm:$0xff]
      %v561 = vld [vmem:[%s190 + $0xac0] sm:$0xff]
      %v562 = vld [vmem:[%s190 + $0xac8] sm:$0xff]
      %v563 = vld [vmem:[%s190 + $0xad0] sm:$0xff]
      %v564 = vld [vmem:[%s190 + $0xad8] sm:$0xff]
      %v565 = vld [vmem:[%s190 + $0xae0] sm:$0xff]
      %v566 = vld [vmem:[%s190 + $0xae8] sm:$0xff]
      %v567 = vld [vmem:[%s190 + $0xaf0] sm:$0xff]
      %v568 = vld [vmem:[%s190 + $0xaf8] sm:$0xff]
      %v569 = vld [vmem:[%s190 + $0xb00] sm:$0xff]
      %v570 = vld [vmem:[%s190 + $0xb08] sm:$0xff]
      %v571 = vld [vmem:[%s190 + $0xb10] sm:$0xff]
      %v572 = vld [vmem:[%s190 + $0xb18] sm:$0xff]
      %v573 = vld [vmem:[%s190 + $0xb20] sm:$0xff]
      %v574 = vld [vmem:[%s190 + $0xb28] sm:$0xff]
      %v575 = vld [vmem:[%s190 + $0xb30] sm:$0xff]
      %v576 = vld [vmem:[%s190 + $0xb38] sm:$0xff]
      %v577 = vld [vmem:[%s190 + $0xb40] sm:$0xff]
      %v578 = vld [vmem:[%s190 + $0xb48] sm:$0xff]
      %v579 = vld [vmem:[%s190 + $0xb50] sm:$0xff]
      %v580 = vld [vmem:[%s190 + $0xb58] sm:$0xff]
      %v581 = vld [vmem:[%s190 + $0xb60] sm:$0xff]
      %v582 = vld [vmem:[%s190 + $0xb68] sm:$0xff]
      %v583 = vld [vmem:[%s190 + $0xb70] sm:$0xff]
      %v584 = vld [vmem:[%s190 + $0xb78] sm:$0xff]
      %v585 = vld [vmem:[%s190 + $0xb80] sm:$0xff]
      %v586 = vld [vmem:[%s190 + $0xb88] sm:$0xff]
      %v587 = vld [vmem:[%s190 + $0xb90] sm:$0xff]
      %v588 = vld [vmem:[%s190 + $0xb98] sm:$0xff]
      %v589 = vld [vmem:[%s190 + $0xba0] sm:$0xff]
      %v590 = vld [vmem:[%s190 + $0xba8] sm:$0xff]
      %v591 = vld [vmem:[%s190 + $0xbb0] sm:$0xff]
      %v592 = vld [vmem:[%s190 + $0xbb8] sm:$0xff]
      %v593 = vld [vmem:[%s190 + $0xbc0] sm:$0xff]
      %v594 = vld [vmem:[%s190 + $0xbc8] sm:$0xff]
      %v595 = vld [vmem:[%s190 + $0xbd0] sm:$0xff]
      %v596 = vld [vmem:[%s190 + $0xbd8] sm:$0xff]
      %v597 = vld [vmem:[%s190 + $0xbe0] sm:$0xff]
      %v598 = vld [vmem:[%s190 + $0xbe8] sm:$0xff]
      %v599 = vld [vmem:[%s190 + $0xbf0] sm:$0xff]
      %v600 = vld [vmem:[%s190 + $0xbf8] sm:$0xff]
      %v601 = vld [vmem:[%s190 + $0xc00] sm:$0xff]
      %v602 = vld [vmem:[%s190 + $0xc08] sm:$0xff]
      %v603 = vld [vmem:[%s190 + $0xc10] sm:$0xff]
      %v604 = vld [vmem:[%s190 + $0xc18] sm:$0xff]
      %v605 = vld [vmem:[%s190 + $0xc20] sm:$0xff]
      %v606 = vld [vmem:[%s190 + $0xc28] sm:$0xff]
      %v607 = vld [vmem:[%s190 + $0xc30] sm:$0xff]
      %v608 = vld [vmem:[%s190 + $0xc38] sm:$0xff]
      %v609 = vld [vmem:[%s190 + $0xc40] sm:$0xff]
      %v610 = vld [vmem:[%s190 + $0xc48] sm:$0xff]
      %v611 = vld [vmem:[%s190 + $0xc50] sm:$0xff]
      %v612 = vld [vmem:[%s190 + $0xc58] sm:$0xff]
      %v613 = vld [vmem:[%s190 + $0xc60] sm:$0xff]
      %v614 = vld [vmem:[%s190 + $0xc68] sm:$0xff]
      %v615 = vld [vmem:[%s190 + $0xc70] sm:$0xff]
      %v616 = vld [vmem:[%s190 + $0xc78] sm:$0xff]
      %v617 = vld [vmem:[%s190 + $0xc80] sm:$0xff]
      %v618 = vld [vmem:[%s190 + $0xc88] sm:$0xff]
      %v619 = vld [vmem:[%s190 + $0xc90] sm:$0xff]
      %v620 = vld [vmem:[%s190 + $0xc98] sm:$0xff]
      %v621 = vld [vmem:[%s190 + $0xca0] sm:$0xff]
      %v622 = vld [vmem:[%s190 + $0xca8] sm:$0xff]
      %v623 = vld [vmem:[%s190 + $0xcb0] sm:$0xff]
      %v624 = vld [vmem:[%s190 + $0xcb8] sm:$0xff]
      %v625 = vld [vmem:[%s190 + $0xcc0] sm:$0xff]
      %v626 = vld [vmem:[%s190 + $0xcc8] sm:$0xff]
      %v627 = vld [vmem:[%s190 + $0xcd0] sm:$0xff]
      %v628 = vld [vmem:[%s190 + $0xcd8] sm:$0xff]
      %v629 = vld [vmem:[%s190 + $0xce0] sm:$0xff]
      %v630 = vld [vmem:[%s190 + $0xce8] sm:$0xff]
      %v631 = vld [vmem:[%s190 + $0xcf0] sm:$0xff]
      %v632 = vld [vmem:[%s190 + $0xcf8] sm:$0xff]
      %v633 = vld [vmem:[%s190 + $0xd00] sm:$0xff]
      %v634 = vld [vmem:[%s190 + $0xd08] sm:$0xff]
      %v635 = vld [vmem:[%s190 + $0xd10] sm:$0xff]
      %v636 = vld [vmem:[%s190 + $0xd18] sm:$0xff]
      %v637 = vld [vmem:[%s190 + $0xd20] sm:$0xff]
      %v638 = vld [vmem:[%s190 + $0xd28] sm:$0xff]
      %v639 = vld [vmem:[%s190 + $0xd30] sm:$0xff]
      %v640 = vld [vmem:[%s190 + $0xd38] sm:$0xff]
      %v641 = vld [vmem:[%s190 + $0xd40] sm:$0xff]
      %v642 = vld [vmem:[%s190 + $0xd48] sm:$0xff]
      %v643 = vld [vmem:[%s190 + $0xd50] sm:$0xff]
      %v644 = vld [vmem:[%s190 + $0xd58] sm:$0xff]
      %v645 = vld [vmem:[%s190 + $0xd60] sm:$0xff]
      %v646 = vld [vmem:[%s190 + $0xd68] sm:$0xff]
      %v647 = vld [vmem:[%s190 + $0xd70] sm:$0xff]
      %v648 = vld [vmem:[%s190 + $0xd78] sm:$0xff]
      %v649 = vld [vmem:[%s190 + $0xd80] sm:$0xff]
      %v650 = vld [vmem:[%s190 + $0xd88] sm:$0xff]
      %v651 = vld [vmem:[%s190 + $0xd90] sm:$0xff]
      %v652 = vld [vmem:[%s190 + $0xd98] sm:$0xff]
      %v653 = vld [vmem:[%s190 + $0xda0] sm:$0xff]
      %v654 = vld [vmem:[%s190 + $0xda8] sm:$0xff]
      %v655 = vld [vmem:[%s190 + $0xdb0] sm:$0xff]
      %v656 = vld [vmem:[%s190 + $0xdb8] sm:$0xff]
      %v657 = vld [vmem:[%s190 + $0xdc0] sm:$0xff]
      %v658 = vld [vmem:[%s190 + $0xdc8] sm:$0xff]
      %v659 = vld [vmem:[%s190 + $0xdd0] sm:$0xff]
      %v660 = vld [vmem:[%s190 + $0xdd8] sm:$0xff]
      %v661 = vld [vmem:[%s190 + $0xde0] sm:$0xff]
      %v662 = vld [vmem:[%s190 + $0xde8] sm:$0xff]
      %v663 = vld [vmem:[%s190 + $0xdf0] sm:$0xff]
      %v664 = vld [vmem:[%s190 + $0xdf8] sm:$0xff]
      %v665 = vld [vmem:[%s190 + $0xe00] sm:$0xff]
      %v666 = vld [vmem:[%s190 + $0xe08] sm:$0xff]
      %v667 = vld [vmem:[%s190 + $0xe10] sm:$0xff]
      %v668 = vld [vmem:[%s190 + $0xe18] sm:$0xff]
      %v669 = vld [vmem:[%s190 + $0xe20] sm:$0xff]
      %v670 = vld [vmem:[%s190 + $0xe28] sm:$0xff]
      %v671 = vld [vmem:[%s190 + $0xe30] sm:$0xff]
      %v672 = vld [vmem:[%s190 + $0xe38] sm:$0xff]
      %v673 = vld [vmem:[%s190 + $0xe40] sm:$0xff]
      %v674 = vld [vmem:[%s190 + $0xe48] sm:$0xff]
      %v675 = vld [vmem:[%s190 + $0xe50] sm:$0xff]
      %v676 = vld [vmem:[%s190 + $0xe58] sm:$0xff]
      %v677 = vld [vmem:[%s190 + $0xe60] sm:$0xff]
      %v678 = vld [vmem:[%s190 + $0xe68] sm:$0xff]
      %v679 = vld [vmem:[%s190 + $0xe70] sm:$0xff]
      %v680 = vld [vmem:[%s190 + $0xe78] sm:$0xff]
      %v681 = vld [vmem:[%s190 + $0xe80] sm:$0xff]
      %v682 = vld [vmem:[%s190 + $0xe88] sm:$0xff]
      %v683 = vld [vmem:[%s190 + $0xe90] sm:$0xff]
      %v684 = vld [vmem:[%s190 + $0xe98] sm:$0xff]
      %v685 = vld [vmem:[%s190 + $0xea0] sm:$0xff]
      %v686 = vld [vmem:[%s190 + $0xea8] sm:$0xff]
      %v687 = vld [vmem:[%s190 + $0xeb0] sm:$0xff]
      %v688 = vld [vmem:[%s190 + $0xeb8] sm:$0xff]
      %v689 = vld [vmem:[%s190 + $0xec0] sm:$0xff]
      %v690 = vld [vmem:[%s190 + $0xec8] sm:$0xff]
      %v691 = vld [vmem:[%s190 + $0xed0] sm:$0xff]
      %v692 = vld [vmem:[%s190 + $0xed8] sm:$0xff]
      %v693 = vld [vmem:[%s190 + $0xee0] sm:$0xff]
      %v694 = vld [vmem:[%s190 + $0xee8] sm:$0xff]
      %v695 = vld [vmem:[%s190 + $0xef0] sm:$0xff]
      %v696 = vld [vmem:[%s190 + $0xef8] sm:$0xff]
      %v697 = vld [vmem:[%s190 + $0xf00] sm:$0xff]
      %v698 = vld [vmem:[%s190 + $0xf08] sm:$0xff]
      %v699 = vld [vmem:[%s190 + $0xf10] sm:$0xff]
      %v700 = vld [vmem:[%s190 + $0xf18] sm:$0xff]
      %v701 = vld [vmem:[%s190 + $0xf20] sm:$0xff]
      %v702 = vld [vmem:[%s190 + $0xf28] sm:$0xff]
      %v703 = vld [vmem:[%s190 + $0xf30] sm:$0xff]
      %v704 = vld [vmem:[%s190 + $0xf38] sm:$0xff]
      %v705 = vld [vmem:[%s190 + $0xf40] sm:$0xff]
      %v706 = vld [vmem:[%s190 + $0xf48] sm:$0xff]
      %v707 = vld [vmem:[%s190 + $0xf50] sm:$0xff]
      %v708 = vld [vmem:[%s190 + $0xf58] sm:$0xff]
      %v709 = vld [vmem:[%s190 + $0xf60] sm:$0xff]
      %v710 = vld [vmem:[%s190 + $0xf68] sm:$0xff]
      %v711 = vld [vmem:[%s190 + $0xf70] sm:$0xff]
      %v712 = vld [vmem:[%s190 + $0xf78] sm:$0xff]
      %v713 = vld [vmem:[%s190 + $0xf80] sm:$0xff]
      %v714 = vld [vmem:[%s190 + $0xf88] sm:$0xff]
      %v715 = vld [vmem:[%s190 + $0xf90] sm:$0xff]
      %v716 = vld [vmem:[%s190 + $0xf98] sm:$0xff]
      %v717 = vld [vmem:[%s190 + $0xfa0] sm:$0xff]
      %v718 = vld [vmem:[%s190 + $0xfa8] sm:$0xff]
      %v719 = vld [vmem:[%s190 + $0xfb0] sm:$0xff]
      %v720 = vld [vmem:[%s190 + $0xfb8] sm:$0xff]
      %v721 = vld [vmem:[%s190 + $0xfc0] sm:$0xff]
      %v722 = vld [vmem:[%s190 + $0xfc8] sm:$0xff]
      %v723 = vld [vmem:[%s190 + $0xfd0] sm:$0xff]
      %v724 = vld [vmem:[%s190 + $0xfd8] sm:$0xff]
      %v725 = vld [vmem:[%s190 + $0xfe0] sm:$0xff]
      %v726 = vld [vmem:[%s190 + $0xfe8] sm:$0xff]
      %v727 = vld [vmem:[%s190 + $0xff0] sm:$0xff]
      %v728 = vld [vmem:[%s190 + $0xff8] sm:$0xff]
      %729 = vmatprep.subr.mxu0 %v218
      %730 = vmatpush1.msra.mxu0 %v217
      %731 = vmatprep.subr.mxu0 %v222
      %732 = vmatpush1.msra.mxu0 %v221
      %733 = vmatprep.subr.mxu0 %v226
      %734 = vmatpush1.msra.mxu0 %v225
      %735 = vmatprep.subr.mxu0 %v230
      %736 = vmatpush1.msra.mxu0 %v229
      %737 = vmatprep.subr.mxu0 %v234
      %738 = vmatpush1.msra.mxu0 %v233
      %739 = vmatprep.subr.mxu0 %v238
      %740 = vmatpush1.msra.mxu0 %v237
      %741 = vmatprep.subr.mxu0 %v242
      %742 = vmatpush1.msra.mxu0 %v241
      %743 = vmatprep.subr.mxu0 %v246
      %744 = vmatpush1.msra.mxu0 %v245
      %745 = vmatprep.subr.mxu0 %v250
      %746 = vmatpush1.msra.mxu0 %v249
      %747 = vmatprep.subr.mxu0 %v254
      %748 = vmatpush1.msra.mxu0 %v253
      %749 = vmatprep.subr.mxu0 %v258
      %750 = vmatpush1.msra.mxu0 %v257
      %751 = vmatprep.subr.mxu0 %v262
      %752 = vmatpush1.msra.mxu0 %v261
      %753 = vmatprep.subr.mxu0 %v266
      %754 = vmatpush1.msra.mxu0 %v265
      %755 = vmatprep.subr.mxu0 %v270
      %756 = vmatpush1.msra.mxu0 %v269
      %757 = vmatprep.subr.mxu0 %v274
      %758 = vmatpush1.msra.mxu0 %v273
      %759 = vmatprep.subr.mxu0 %v278
      %760 = vmatpush1.msra.mxu0 %v277
      %761 = vmatprep.subr.mxu0 %v282
      %762 = vmatpush1.msra.mxu0 %v281
      %763 = vmatprep.subr.mxu0 %v286
      %764 = vmatpush1.msra.mxu0 %v285
      %765 = vmatprep.subr.mxu0 %v290
      %766 = vmatpush1.msra.mxu0 %v289
      %767 = vmatprep.subr.mxu0 %v294
      %768 = vmatpush1.msra.mxu0 %v293
      %769 = vmatprep.subr.mxu0 %v298
      %770 = vmatpush1.msra.mxu0 %v297
      %771 = vmatprep.subr.mxu0 %v302
      %772 = vmatpush1.msra.mxu0 %v301
      %773 = vmatprep.subr.mxu0 %v306
      %774 = vmatpush1.msra.mxu0 %v305
      %775 = vmatprep.subr.mxu0 %v310
      %776 = vmatpush1.msra.mxu0 %v309
      %777 = vmatprep.subr.mxu0 %v314
      %778 = vmatpush1.msra.mxu0 %v313
      %779 = vmatprep.subr.mxu0 %v318
      %780 = vmatpush1.msra.mxu0 %v317
      %781 = vmatprep.subr.mxu0 %v322
      %782 = vmatpush1.msra.mxu0 %v321
      %783 = vmatprep.subr.mxu0 %v326
      %784 = vmatpush1.msra.mxu0 %v325
      %785 = vmatprep.subr.mxu0 %v330
      %786 = vmatpush1.msra.mxu0 %v329
      %787 = vmatprep.subr.mxu0 %v334
      %788 = vmatpush1.msra.mxu0 %v333
      %789 = vmatprep.subr.mxu0 %v338
      %790 = vmatpush1.msra.mxu0 %v337
      %791 = vmatprep.subr.mxu0 %v342
      %792 = vmatpush1.msra.mxu0 %v341
      %793 = vmatprep.mubr.f32.mxu0 %v210
      %794 = vmatmul.mubr.f32.gmra.mrb[0].mxu0 %v209
      %v795 = vpop.f32.mrb[0].mxu0
      %v796 = vadd.f32 0.0, %v795
      %v797 = vpop.f32.mrb[0].mxu0
      %v798 = vadd.f32 0.0, %v797
      %799 = vdwg.mxu0
      %800 = vmatprep.subr.mxu0 %v346
      %801 = vmatpush1.msra.mxu0 %v345
      %802 = vmatprep.subr.mxu0 %v350
      %803 = vmatpush1.msra.mxu0 %v349
      %804 = vmatprep.subr.mxu0 %v354
      %805 = vmatpush1.msra.mxu0 %v353
      %806 = vmatprep.subr.mxu0 %v358
      %807 = vmatpush1.msra.mxu0 %v357
      %808 = vmatprep.subr.mxu0 %v362
      %809 = vmatpush1.msra.mxu0 %v361
      %810 = vmatprep.subr.mxu0 %v366
      %811 = vmatpush1.msra.mxu0 %v365
      %812 = vmatprep.subr.mxu0 %v370
      %813 = vmatpush1.msra.mxu0 %v369
      %814 = vmatprep.subr.mxu0 %v374
      %815 = vmatpush1.msra.mxu0 %v373
      %816 = vmatprep.subr.mxu0 %v378
      %817 = vmatpush1.msra.mxu0 %v377
      %818 = vmatprep.subr.mxu0 %v382
      %819 = vmatpush1.msra.mxu0 %v381
      %820 = vmatprep.subr.mxu0 %v386
      %821 = vmatpush1.msra.mxu0 %v385
      %822 = vmatprep.subr.mxu0 %v390
      %823 = vmatpush1.msra.mxu0 %v389
      %824 = vmatprep.subr.mxu0 %v394
      %825 = vmatpush1.msra.mxu0 %v393
      %826 = vmatprep.subr.mxu0 %v398
      %827 = vmatpush1.msra.mxu0 %v397
      %828 = vmatprep.subr.mxu0 %v402
      %829 = vmatpush1.msra.mxu0 %v401
      %830 = vmatprep.subr.mxu0 %v406
      %831 = vmatpush1.msra.mxu0 %v405
      %832 = vmatprep.subr.mxu0 %v410
      %833 = vmatpush1.msra.mxu0 %v409
      %834 = vmatprep.subr.mxu0 %v414
      %835 = vmatpush1.msra.mxu0 %v413
      %836 = vmatprep.subr.mxu0 %v418
      %837 = vmatpush1.msra.mxu0 %v417
      %838 = vmatprep.subr.mxu0 %v422
      %839 = vmatpush1.msra.mxu0 %v421
      %840 = vmatprep.subr.mxu0 %v426
      %841 = vmatpush1.msra.mxu0 %v425
      %842 = vmatprep.subr.mxu0 %v430
      %843 = vmatpush1.msra.mxu0 %v429
      %844 = vmatprep.subr.mxu0 %v434
      %845 = vmatpush1.msra.mxu0 %v433
      %846 = vmatprep.subr.mxu0 %v438
      %847 = vmatpush1.msra.mxu0 %v437
      %848 = vmatprep.subr.mxu0 %v442
      %849 = vmatpush1.msra.mxu0 %v441
      %850 = vmatprep.subr.mxu0 %v446
      %851 = vmatpush1.msra.mxu0 %v445
      %852 = vmatprep.subr.mxu0 %v450
      %853 = vmatpush1.msra.mxu0 %v449
      %854 = vmatprep.subr.mxu0 %v454
      %855 = vmatpush1.msra.mxu0 %v453
      %856 = vmatprep.subr.mxu0 %v458
      %857 = vmatpush1.msra.mxu0 %v457
      %858 = vmatprep.subr.mxu0 %v462
      %859 = vmatpush1.msra.mxu0 %v461
      %860 = vmatprep.subr.mxu0 %v466
      %861 = vmatpush1.msra.mxu0 %v465
      %862 = vmatprep.subr.mxu0 %v470
      %863 = vmatpush1.msra.mxu0 %v469
      %864 = vmatprep.mubr.f32.mxu0 %v212
      %865 = vmatmul.mubr.f32.gmra.mrb[0].mxu0 %v211
      %v866 = vpop.f32.mrb[0].mxu0
      %v867 = vadd.f32 %v796, %v866
      %v868 = vpop.f32.mrb[0].mxu0
      %v869 = vadd.f32 %v798, %v868
      %870 = vdwg.mxu0
      %871 = vmatprep.subr.mxu0 %v474
      %872 = vmatpush1.msra.mxu0 %v473
      %873 = vmatprep.subr.mxu0 %v478
      %874 = vmatpush1.msra.mxu0 %v477
      %875 = vmatprep.subr.mxu0 %v482
      %876 = vmatpush1.msra.mxu0 %v481
      %877 = vmatprep.subr.mxu0 %v486
      %878 = vmatpush1.msra.mxu0 %v485
      %879 = vmatprep.subr.mxu0 %v490
      %880 = vmatpush1.msra.mxu0 %v489
      %881 = vmatprep.subr.mxu0 %v494
      %882 = vmatpush1.msra.mxu0 %v493
      %883 = vmatprep.subr.mxu0 %v498
      %884 = vmatpush1.msra.mxu0 %v497
      %885 = vmatprep.subr.mxu0 %v502
      %886 = vmatpush1.msra.mxu0 %v501
      %887 = vmatprep.subr.mxu0 %v506
      %888 = vmatpush1.msra.mxu0 %v505
      %889 = vmatprep.subr.mxu0 %v510
      %890 = vmatpush1.msra.mxu0 %v509
      %891 = vmatprep.subr.mxu0 %v514
      %892 = vmatpush1.msra.mxu0 %v513
      %893 = vmatprep.subr.mxu0 %v518
      %894 = vmatpush1.msra.mxu0 %v517
      %895 = vmatprep.subr.mxu0 %v522
      %896 = vmatpush1.msra.mxu0 %v521
      %897 = vmatprep.subr.mxu0 %v526
      %898 = vmatpush1.msra.mxu0 %v525
      %899 = vmatprep.subr.mxu0 %v530
      %900 = vmatpush1.msra.mxu0 %v529
      %901 = vmatprep.subr.mxu0 %v534
      %902 = vmatpush1.msra.mxu0 %v533
      %903 = vmatprep.subr.mxu0 %v538
      %904 = vmatpush1.msra.mxu0 %v537
      %905 = vmatprep.subr.mxu0 %v542
      %906 = vmatpush1.msra.mxu0 %v541
      %907 = vmatprep.subr.mxu0 %v546
      %908 = vmatpush1.msra.mxu0 %v545
      %909 = vmatprep.subr.mxu0 %v550
      %910 = vmatpush1.msra.mxu0 %v549
      %911 = vmatprep.subr.mxu0 %v554
      %912 = vmatpush1.msra.mxu0 %v553
      %913 = vmatprep.subr.mxu0 %v558
      %914 = vmatpush1.msra.mxu0 %v557
      %915 = vmatprep.subr.mxu0 %v562
      %916 = vmatpush1.msra.mxu0 %v561
      %917 = vmatprep.subr.mxu0 %v566
      %918 = vmatpush1.msra.mxu0 %v565
      %919 = vmatprep.subr.mxu0 %v570
      %920 = vmatpush1.msra.mxu0 %v569
      %921 = vmatprep.subr.mxu0 %v574
      %922 = vmatpush1.msra.mxu0 %v573
      %923 = vmatprep.subr.mxu0 %v578
      %924 = vmatpush1.msra.mxu0 %v577
      %925 = vmatprep.subr.mxu0 %v582
      %926 = vmatpush1.msra.mxu0 %v581
      %927 = vmatprep.subr.mxu0 %v586
      %928 = vmatpush1.msra.mxu0 %v585
      %929 = vmatprep.subr.mxu0 %v590
      %930 = vmatpush1.msra.mxu0 %v589
      %931 = vmatprep.subr.mxu0 %v594
      %932 = vmatpush1.msra.mxu0 %v593
      %933 = vmatprep.subr.mxu0 %v598
      %934 = vmatpush1.msra.mxu0 %v597
      %935 = vmatprep.mubr.f32.mxu0 %v214
      %936 = vmatmul.mubr.f32.gmra.mrb[0].mxu0 %v213
      %v937 = vpop.f32.mrb[0].mxu0
      %v938 = vadd.f32 %v867, %v937
      %v939 = vpop.f32.mrb[0].mxu0
      %v940 = vadd.f32 %v869, %v939
      %941 = vdwg.mxu0
      %942 = vmatprep.subr.mxu0 %v602
      %943 = vmatpush1.msra.mxu0 %v601
      %944 = vmatprep.subr.mxu0 %v606
      %945 = vmatpush1.msra.mxu0 %v605
      %946 = vmatprep.subr.mxu0 %v610
      %947 = vmatpush1.msra.mxu0 %v609
      %948 = vmatprep.subr.mxu0 %v614
      %949 = vmatpush1.msra.mxu0 %v613
      %950 = vmatprep.subr.mxu0 %v618
      %951 = vmatpush1.msra.mxu0 %v617
      %952 = vmatprep.subr.mxu0 %v622
      %953 = vmatpush1.msra.mxu0 %v621
      %954 = vmatprep.subr.mxu0 %v626
      %955 = vmatpush1.msra.mxu0 %v625
      %956 = vmatprep.subr.mxu0 %v630
      %957 = vmatpush1.msra.mxu0 %v629
      %958 = vmatprep.subr.mxu0 %v634
      %959 = vmatpush1.msra.mxu0 %v633
      %960 = vmatprep.subr.mxu0 %v638
      %961 = vmatpush1.msra.mxu0 %v637
      %962 = vmatprep.subr.mxu0 %v642
      %963 = vmatpush1.msra.mxu0 %v641
      %964 = vmatprep.subr.mxu0 %v646
      %965 = vmatpush1.msra.mxu0 %v645
      %966 = vmatprep.subr.mxu0 %v650
      %967 = vmatpush1.msra.mxu0 %v649
      %968 = vmatprep.subr.mxu0 %v654
      %969 = vmatpush1.msra.mxu0 %v653
      %970 = vmatprep.subr.mxu0 %v658
      %971 = vmatpush1.msra.mxu0 %v657
      %972 = vmatprep.subr.mxu0 %v662
      %973 = vmatpush1.msra.mxu0 %v661
      %974 = vmatprep.subr.mxu0 %v666
      %975 = vmatpush1.msra.mxu0 %v665
      %976 = vmatprep.subr.mxu0 %v670
      %977 = vmatpush1.msra.mxu0 %v669
      %978 = vmatprep.subr.mxu0 %v674
      %979 = vmatpush1.msra.mxu0 %v673
      %980 = vmatprep.subr.mxu0 %v678
      %981 = vmatpush1.msra.mxu0 %v677
      %982 = vmatprep.subr.mxu0 %v682
      %983 = vmatpush1.msra.mxu0 %v681
      %984 = vmatprep.subr.mxu0 %v686
      %985 = vmatpush1.msra.mxu0 %v685
      %986 = vmatprep.subr.mxu0 %v690
      %987 = vmatpush1.msra.mxu0 %v689
      %988 = vmatprep.subr.mxu0 %v694
      %989 = vmatpush1.msra.mxu0 %v693
      %990 = vmatprep.subr.mxu0 %v698
      %991 = vmatpush1.msra.mxu0 %v697
      %992 = vmatprep.subr.mxu0 %v702
      %993 = vmatpush1.msra.mxu0 %v701
      %994 = vmatprep.subr.mxu0 %v706
      %995 = vmatpush1.msra.mxu0 %v705
      %996 = vmatprep.subr.mxu0 %v710
      %997 = vmatpush1.msra.mxu0 %v709
      %998 = vmatprep.subr.mxu0 %v714
      %999 = vmatpush1.msra.mxu0 %v713
      %1000 = vmatprep.subr.mxu0 %v718
      %1001 = vmatpush1.msra.mxu0 %v717
      %1002 = vmatprep.subr.mxu0 %v722
      %1003 = vmatpush1.msra.mxu0 %v721
      %1004 = vmatprep.subr.mxu0 %v726
      %1005 = vmatpush1.msra.mxu0 %v725
      %1006 = vmatprep.mubr.f32.mxu0 %v216
      %1007 = vmatmul.mubr.f32.gmra.mrb[0].mxu0 %v215
      %v1008 = vpop.f32.mrb[0].mxu0
      %v1009 = vadd.f32 %v938, %v1008
      %v1010 = vpop.f32.mrb[0].mxu0
      %v1011 = vadd.f32 %v940, %v1010
      %1012 = vdwg.mxu0
      %1013 = vmatprep.subr.mxu0 %v220
      %1014 = vmatpush1.msra.mxu0 %v219
      %1015 = vmatprep.subr.mxu0 %v224
      %1016 = vmatpush1.msra.mxu0 %v223
      %1017 = vmatprep.subr.mxu0 %v228
      %1018 = vmatpush1.msra.mxu0 %v227
      %1019 = vmatprep.subr.mxu0 %v232
      %1020 = vmatpush1.msra.mxu0 %v231
      %1021 = vmatprep.subr.mxu0 %v236
      %1022 = vmatpush1.msra.mxu0 %v235
      %1023 = vmatprep.subr.mxu0 %v240
      %1024 = vmatpush1.msra.mxu0 %v239
      %1025 = vmatprep.subr.mxu0 %v244
      %1026 = vmatpush1.msra.mxu0 %v243
      %1027 = vmatprep.subr.mxu0 %v248
      %1028 = vmatpush1.msra.mxu0 %v247
      %1029 = vmatprep.subr.mxu0 %v252
      %1030 = vmatpush1.msra.mxu0 %v251
      %1031 = vmatprep.subr.mxu0 %v256
      %1032 = vmatpush1.msra.mxu0 %v255
      %1033 = vmatprep.subr.mxu0 %v260
      %1034 = vmatpush1.msra.mxu0 %v259
      %1035 = vmatprep.subr.mxu0 %v264
      %1036 = vmatpush1.msra.mxu0 %v263
      %1037 = vmatprep.subr.mxu0 %v268
      %1038 = vmatpush1.msra.mxu0 %v267
      %1039 = vmatprep.subr.mxu0 %v272
      %1040 = vmatpush1.msra.mxu0 %v271
      %1041 = vmatprep.subr.mxu0 %v276
      %1042 = vmatpush1.msra.mxu0 %v275
      %1043 = vmatprep.subr.mxu0 %v280
      %1044 = vmatpush1.msra.mxu0 %v279
      %1045 = vmatprep.subr.mxu0 %v284
      %1046 = vmatpush1.msra.mxu0 %v283
      %1047 = vmatprep.subr.mxu0 %v288
      %1048 = vmatpush1.msra.mxu0 %v287
      %1049 = vmatprep.subr.mxu0 %v292
      %1050 = vmatpush1.msra.mxu0 %v291
      %1051 = vmatprep.subr.mxu0 %v296
      %1052 = vmatpush1.msra.mxu0 %v295
      %1053 = vmatprep.subr.mxu0 %v300
      %1054 = vmatpush1.msra.mxu0 %v299
      %1055 = vmatprep.subr.mxu0 %v304
      %1056 = vmatpush1.msra.mxu0 %v303
      %1057 = vmatprep.subr.mxu0 %v308
      %1058 = vmatpush1.msra.mxu0 %v307
      %1059 = vmatprep.subr.mxu0 %v312
      %1060 = vmatpush1.msra.mxu0 %v311
      %1061 = vmatprep.subr.mxu0 %v316
      %1062 = vmatpush1.msra.mxu0 %v315
      %1063 = vmatprep.subr.mxu0 %v320
      %1064 = vmatpush1.msra.mxu0 %v319
      %1065 = vmatprep.subr.mxu0 %v324
      %1066 = vmatpush1.msra.mxu0 %v323
      %1067 = vmatprep.subr.mxu0 %v328
      %1068 = vmatpush1.msra.mxu0 %v327
      %1069 = vmatprep.subr.mxu0 %v332
      %1070 = vmatpush1.msra.mxu0 %v331
      %1071 = vmatprep.subr.mxu0 %v336
      %1072 = vmatpush1.msra.mxu0 %v335
      %1073 = vmatprep.subr.mxu0 %v340
      %1074 = vmatpush1.msra.mxu0 %v339
      %1075 = vmatprep.subr.mxu0 %v344
      %1076 = vmatpush1.msra.mxu0 %v343
      %1077 = vmatprep.mubr.f32.mxu0 %v210
      %1078 = vmatmul.mubr.f32.gmra.mrb[0].mxu0 %v209
      %v1079 = vpop.f32.mrb[0].mxu0
      %v1080 = vadd.f32 0.0, %v1079
      %v1081 = vpop.f32.mrb[0].mxu0
      %v1082 = vadd.f32 0.0, %v1081
      %1083 = vdwg.mxu0
      %1084 = vmatprep.subr.mxu0 %v348
      %1085 = vmatpush1.msra.mxu0 %v347
      %1086 = vmatprep.subr.mxu0 %v352
      %1087 = vmatpush1.msra.mxu0 %v351
      %1088 = vmatprep.subr.mxu0 %v356
      %1089 = vmatpush1.msra.mxu0 %v355
      %1090 = vmatprep.subr.mxu0 %v360
      %1091 = vmatpush1.msra.mxu0 %v359
      %1092 = vmatprep.subr.mxu0 %v364
      %1093 = vmatpush1.msra.mxu0 %v363
      %1094 = vmatprep.subr.mxu0 %v368
      %1095 = vmatpush1.msra.mxu0 %v367
      %1096 = vmatprep.subr.mxu0 %v372
      %1097 = vmatpush1.msra.mxu0 %v371
      %1098 = vmatprep.subr.mxu0 %v376
      %1099 = vmatpush1.msra.mxu0 %v375
      %1100 = vmatprep.subr.mxu0 %v380
      %1101 = vmatpush1.msra.mxu0 %v379
      %1102 = vmatprep.subr.mxu0 %v384
      %1103 = vmatpush1.msra.mxu0 %v383
      %1104 = vmatprep.subr.mxu0 %v388
      %1105 = vmatpush1.msra.mxu0 %v387
      %1106 = vmatprep.subr.mxu0 %v392
      %1107 = vmatpush1.msra.mxu0 %v391
      %1108 = vmatprep.subr.mxu0 %v396
      %1109 = vmatpush1.msra.mxu0 %v395
      %1110 = vmatprep.subr.mxu0 %v400
      %1111 = vmatpush1.msra.mxu0 %v399
      %1112 = vmatprep.subr.mxu0 %v404
      %1113 = vmatpush1.msra.mxu0 %v403
      %1114 = vmatprep.subr.mxu0 %v408
      %1115 = vmatpush1.msra.mxu0 %v407
      %1116 = vmatprep.subr.mxu0 %v412
      %1117 = vmatpush1.msra.mxu0 %v411
      %1118 = vmatprep.subr.mxu0 %v416
      %1119 = vmatpush1.msra.mxu0 %v415
      %1120 = vmatprep.subr.mxu0 %v420
      %1121 = vmatpush1.msra.mxu0 %v419
      %1122 = vmatprep.subr.mxu0 %v424
      %1123 = vmatpush1.msra.mxu0 %v423
      %1124 = vmatprep.subr.mxu0 %v428
      %1125 = vmatpush1.msra.mxu0 %v427
      %1126 = vmatprep.subr.mxu0 %v432
      %1127 = vmatpush1.msra.mxu0 %v431
      %1128 = vmatprep.subr.mxu0 %v436
      %1129 = vmatpush1.msra.mxu0 %v435
      %1130 = vmatprep.subr.mxu0 %v440
      %1131 = vmatpush1.msra.mxu0 %v439
      %1132 = vmatprep.subr.mxu0 %v444
      %1133 = vmatpush1.msra.mxu0 %v443
      %1134 = vmatprep.subr.mxu0 %v448
      %1135 = vmatpush1.msra.mxu0 %v447
      %1136 = vmatprep.subr.mxu0 %v452
      %1137 = vmatpush1.msra.mxu0 %v451
      %1138 = vmatprep.subr.mxu0 %v456
      %1139 = vmatpush1.msra.mxu0 %v455
      %1140 = vmatprep.subr.mxu0 %v460
      %1141 = vmatpush1.msra.mxu0 %v459
      %1142 = vmatprep.subr.mxu0 %v464
      %1143 = vmatpush1.msra.mxu0 %v463
      %1144 = vmatprep.subr.mxu0 %v468
      %1145 = vmatpush1.msra.mxu0 %v467
      %1146 = vmatprep.subr.mxu0 %v472
      %1147 = vmatpush1.msra.mxu0 %v471
      %1148 = vmatprep.mubr.f32.mxu0 %v212
      %1149 = vmatmul.mubr.f32.gmra.mrb[0].mxu0 %v211
      %v1150 = vpop.f32.mrb[0].mxu0
      %v1151 = vadd.f32 %v1080, %v1150
      %v1152 = vpop.f32.mrb[0].mxu0
      %v1153 = vadd.f32 %v1082, %v1152
      %1154 = vdwg.mxu0
      %1155 = vmatprep.subr.mxu0 %v476
      %1156 = vmatpush1.msra.mxu0 %v475
      %1157 = vmatprep.subr.mxu0 %v480
      %1158 = vmatpush1.msra.mxu0 %v479
      %1159 = vmatprep.subr.mxu0 %v484
      %1160 = vmatpush1.msra.mxu0 %v483
      %1161 = vmatprep.subr.mxu0 %v488
      %1162 = vmatpush1.msra.mxu0 %v487
      %1163 = vmatprep.subr.mxu0 %v492
      %1164 = vmatpush1.msra.mxu0 %v491
      %1165 = vmatprep.subr.mxu0 %v496
      %1166 = vmatpush1.msra.mxu0 %v495
      %1167 = vmatprep.subr.mxu0 %v500
      %1168 = vmatpush1.msra.mxu0 %v499
      %1169 = vmatprep.subr.mxu0 %v504
      %1170 = vmatpush1.msra.mxu0 %v503
      %1171 = vmatprep.subr.mxu0 %v508
      %1172 = vmatpush1.msra.mxu0 %v507
      %1173 = vmatprep.subr.mxu0 %v512
      %1174 = vmatpush1.msra.mxu0 %v511
      %1175 = vmatprep.subr.mxu0 %v516
      %1176 = vmatpush1.msra.mxu0 %v515
      %1177 = vmatprep.subr.mxu0 %v520
      %1178 = vmatpush1.msra.mxu0 %v519
      %1179 = vmatprep.subr.mxu0 %v524
      %1180 = vmatpush1.msra.mxu0 %v523
      %1181 = vmatprep.subr.mxu0 %v528
      %1182 = vmatpush1.msra.mxu0 %v527
      %1183 = vmatprep.subr.mxu0 %v532
      %1184 = vmatpush1.msra.mxu0 %v531
      %1185 = vmatprep.subr.mxu0 %v536
      %1186 = vmatpush1.msra.mxu0 %v535
      %1187 = vmatprep.subr.mxu0 %v540
      %1188 = vmatpush1.msra.mxu0 %v539
      %1189 = vmatprep.subr.mxu0 %v544
      %1190 = vmatpush1.msra.mxu0 %v543
      %1191 = vmatprep.subr.mxu0 %v548
      %1192 = vmatpush1.msra.mxu0 %v547
      %1193 = vmatprep.subr.mxu0 %v552
      %1194 = vmatpush1.msra.mxu0 %v551
      %1195 = vmatprep.subr.mxu0 %v556
      %1196 = vmatpush1.msra.mxu0 %v555
      %1197 = vmatprep.subr.mxu0 %v560
      %1198 = vmatpush1.msra.mxu0 %v559
      %1199 = vmatprep.subr.mxu0 %v564
      %1200 = vmatpush1.msra.mxu0 %v563
      %1201 = vmatprep.subr.mxu0 %v568
      %1202 = vmatpush1.msra.mxu0 %v567
      %1203 = vmatprep.subr.mxu0 %v572
      %1204 = vmatpush1.msra.mxu0 %v571
      %1205 = vmatprep.subr.mxu0 %v576
      %1206 = vmatpush1.msra.mxu0 %v575
      %1207 = vmatprep.subr.mxu0 %v580
      %1208 = vmatpush1.msra.mxu0 %v579
      %1209 = vmatprep.subr.mxu0 %v584
      %1210 = vmatpush1.msra.mxu0 %v583
      %1211 = vmatprep.subr.mxu0 %v588
      %1212 = vmatpush1.msra.mxu0 %v587
      %1213 = vmatprep.subr.mxu0 %v592
      %1214 = vmatpush1.msra.mxu0 %v591
      %1215 = vmatprep.subr.mxu0 %v596
      %1216 = vmatpush1.msra.mxu0 %v595
      %1217 = vmatprep.subr.mxu0 %v600
      %1218 = vmatpush1.msra.mxu0 %v599
      %1219 = vmatprep.mubr.f32.mxu0 %v214
      %1220 = vmatmul.mubr.f32.gmra.mrb[0].mxu0 %v213
      %v1221 = vpop.f32.mrb[0].mxu0
      %v1222 = vadd.f32 %v1151, %v1221
      %v1223 = vpop.f32.mrb[0].mxu0
      %v1224 = vadd.f32 %v1153, %v1223
      %1225 = vdwg.mxu0
      %1226 = vmatprep.subr.mxu0 %v604
      %1227 = vmatpush1.msra.mxu0 %v603
      %1228 = vmatprep.subr.mxu0 %v608
      %1229 = vmatpush1.msra.mxu0 %v607
      %1230 = vmatprep.subr.mxu0 %v612
      %1231 = vmatpush1.msra.mxu0 %v611
      %1232 = vmatprep.subr.mxu0 %v616
      %1233 = vmatpush1.msra.mxu0 %v615
      %1234 = vmatprep.subr.mxu0 %v620
      %1235 = vmatpush1.msra.mxu0 %v619
      %1236 = vmatprep.subr.mxu0 %v624
      %1237 = vmatpush1.msra.mxu0 %v623
      %1238 = vmatprep.subr.mxu0 %v628
      %1239 = vmatpush1.msra.mxu0 %v627
      %1240 = vmatprep.subr.mxu0 %v632
      %1241 = vmatpush1.msra.mxu0 %v631
      %1242 = vmatprep.subr.mxu0 %v636
      %1243 = vmatpush1.msra.mxu0 %v635
      %1244 = vmatprep.subr.mxu0 %v640
      %1245 = vmatpush1.msra.mxu0 %v639
      %1246 = vmatprep.subr.mxu0 %v644
      %1247 = vmatpush1.msra.mxu0 %v643
      %1248 = vmatprep.subr.mxu0 %v648
      %1249 = vmatpush1.msra.mxu0 %v647
      %1250 = vmatprep.subr.mxu0 %v652
      %1251 = vmatpush1.msra.mxu0 %v651
      %1252 = vmatprep.subr.mxu0 %v656
      %1253 = vmatpush1.msra.mxu0 %v655
      %1254 = vmatprep.subr.mxu0 %v660
      %1255 = vmatpush1.msra.mxu0 %v659
      %1256 = vmatprep.subr.mxu0 %v664
      %1257 = vmatpush1.msra.mxu0 %v663
      %1258 = vmatprep.subr.mxu0 %v668
      %1259 = vmatpush1.msra.mxu0 %v667
      %1260 = vmatprep.subr.mxu0 %v672
      %1261 = vmatpush1.msra.mxu0 %v671
      %1262 = vmatprep.subr.mxu0 %v676
      %1263 = vmatpush1.msra.mxu0 %v675
      %1264 = vmatprep.subr.mxu0 %v680
      %1265 = vmatpush1.msra.mxu0 %v679
      %1266 = vmatprep.subr.mxu0 %v684
      %1267 = vmatpush1.msra.mxu0 %v683
      %1268 = vmatprep.subr.mxu0 %v688
      %1269 = vmatpush1.msra.mxu0 %v687
      %1270 = vmatprep.subr.mxu0 %v692
      %1271 = vmatpush1.msra.mxu0 %v691
      %1272 = vmatprep.subr.mxu0 %v696
      %1273 = vmatpush1.msra.mxu0 %v695
      %1274 = vmatprep.subr.mxu0 %v700
      %1275 = vmatpush1.msra.mxu0 %v699
      %1276 = vmatprep.subr.mxu0 %v704
      %1277 = vmatpush1.msra.mxu0 %v703
      %1278 = vmatprep.subr.mxu0 %v708
      %1279 = vmatpush1.msra.mxu0 %v707
      %1280 = vmatprep.subr.mxu0 %v712
      %1281 = vmatpush1.msra.mxu0 %v711
      %1282 = vmatprep.subr.mxu0 %v716
      %1283 = vmatpush1.msra.mxu0 %v715
      %1284 = vmatprep.subr.mxu0 %v720
      %1285 = vmatpush1.msra.mxu0 %v719
      %1286 = vmatprep.subr.mxu0 %v724
      %1287 = vmatpush1.msra.mxu0 %v723
      %1288 = vmatprep.subr.mxu0 %v728
      %1289 = vmatpush1.msra.mxu0 %v727
      %1290 = vmatprep.mubr.f32.mxu0 %v216
      %1291 = vmatmul.mubr.f32.gmra.mrb[0].mxu0 %v215
      %v1292 = vpop.f32.mrb[0].mxu0
      %v1293 = vadd.f32 %v1222, %v1292
      %v1294 = vpop.f32.mrb[0].mxu0
      %v1295 = vadd.f32 %v1224, %v1294
      %1296 = vdwg.mxu0
      %v1297 = vadd.f32 %v205, %v1009
      %v1298 = vadd.f32 %v206, %v1011
      %v1299 = vadd.f32 %v207, %v1293
      %v1300 = vadd.f32 %v208, %v1295
      %1301 = vst [vmem:[#allocation2] sm:$0xff] %v1297
      %1302 = vst [vmem:[#allocation2 + $0x8] sm:$0xff] %v1298
      %1303 = vst [vmem:[#allocation2 + $0x10] sm:$0xff] %v1299
      %1304 = vst [vmem:[#allocation2 + $0x18] sm:$0xff] %v1300
      %p1305 = scmp.eq.s32.totalorder %s18, 3
      // Predicated region
      $region33: #{forward_pallas.8} parent=27 // pred_check
        %p1306 = pneg %p1305
      $region34: #{forward_pallas.8} parent=27 // pred_check_branch
        %1308 = sbr.rel (%p1306) target = $region36
      $region35: #{forward_pallas.8} parent=27 // pred_region
        %v1309 = vld [vmem:[#allocation2] sm:$0xff]
        %v1310 = vld [vmem:[#allocation2 + $0x8] sm:$0xff]
        %v1311 = vld [vmem:[#allocation2 + $0x10] sm:$0xff]
        %v1312 = vld [vmem:[#allocation2 + $0x18] sm:$0xff]
        %v1313 = vlaneseq
        %v1314 = vshrl.u32 %v1313, 7
        %vm1315 = vcmp.lt.s32.totalorder %v1314, 4
        %v1316 = vsel %vm1315, %v1309, 0.0
        %v1317 = vsel %vm1315, %v1310, 0.0
        %v1318 = vsel %vm1315, %v1311, 0.0
        %v1319 = vsel %vm1315, %v1312, 0.0
        %v1320 = vrot.slane %v1316, 4
        %v1321 = vadd.f32 %v1316, %v1320
        %v1322 = vrot.slane %v1321, 2
        %v1323 = vadd.f32 %v1321, %v1322
        %v1324 = vrot.slane %v1323, 1
        %v1325 = vadd.f32 %v1323, %v1324
        %v1326 = vrot.slane %v1317, 4
        %v1327 = vadd.f32 %v1317, %v1326
        %v1328 = vrot.slane %v1327, 2
        %v1329 = vadd.f32 %v1327, %v1328
        %v1330 = vrot.slane %v1329, 1
        %v1331 = vadd.f32 %v1329, %v1330
        %v1332 = vrot.slane %v1318, 4
        %v1333 = vadd.f32 %v1318, %v1332
        %v1334 = vrot.slane %v1333, 2
        %v1335 = vadd.f32 %v1333, %v1334
        %v1336 = vrot.slane %v1335, 1
        %v1337 = vadd.f32 %v1335, %v1336
        %v1338 = vrot.slane %v1319, 4
        %v1339 = vadd.f32 %v1319, %v1338
        %v1340 = vrot.slane %v1339, 2
        %v1341 = vadd.f32 %v1339, %v1340
        %v1342 = vrot.slane %v1341, 1
        %v1343 = vadd.f32 %v1341, %v1342
        %v1344 = vmul.f32 %v1325, 0.25
        %v1345 = vmul.f32 %v1331, 0.25
        %v1346 = vmul.f32 %v1337, 0.25
        %v1347 = vmul.f32 %v1343, 0.25
        %v1348 = vsub.f32 %v1309, %v1344
        %v1349 = vsub.f32 %v1310, %v1345
        %v1350 = vsub.f32 %v1311, %v1346
        %v1351 = vsub.f32 %v1312, %v1347
        %v1352 = vmul.f32 %v1348, %v1348
        %v1353 = vmul.f32 %v1349, %v1349
        %v1354 = vmul.f32 %v1350, %v1350
        %v1355 = vmul.f32 %v1351, %v1351
        %v1356 = vsel %vm1315, %v1352, 0.0
        %v1357 = vsel %vm1315, %v1353, 0.0
        %v1358 = vsel %vm1315, %v1354, 0.0
        %v1359 = vsel %vm1315, %v1355, 0.0
        %v1360 = vrot.slane %v1356, 4
        %v1361 = vadd.f32 %v1356, %v1360
        %v1362 = vrot.slane %v1361, 2
        %v1363 = vadd.f32 %v1361, %v1362
        %v1364 = vrot.slane %v1363, 1
        %v1365 = vadd.f32 %v1363, %v1364
        %v1366 = vrot.slane %v1357, 4
        %v1367 = vadd.f32 %v1357, %v1366
        %v1368 = vrot.slane %v1367, 2
        %v1369 = vadd.f32 %v1367, %v1368
        %v1370 = vrot.slane %v1369, 1
        %v1371 = vadd.f32 %v1369, %v1370
        %v1372 = vrot.slane %v1358, 4
        %v1373 = vadd.f32 %v1358, %v1372
        %v1374 = vrot.slane %v1373, 2
        %v1375 = vadd.f32 %v1373, %v1374
        %v1376 = vrot.slane %v1375, 1
        %v1377 = vadd.f32 %v1375, %v1376
        %v1378 = vrot.slane %v1359, 4
        %v1379 = vadd.f32 %v1359, %v1378
        %v1380 = vrot.slane %v1379, 2
        %v1381 = vadd.f32 %v1379, %v1380
        %v1382 = vrot.slane %v1381, 1
        %v1383 = vadd.f32 %v1381, %v1382
        %v1384 = vmul.f32 %v1365, 0.25
        %v1385 = vmul.f32 %v1371, 0.25
        %v1386 = vmul.f32 %v1377, 0.25
        %v1387 = vmul.f32 %v1383, 0.25
        %v1388 = vadd.f32 %v1384, 1e-05
        %v1389 = vadd.f32 %v1385, 1e-05
        %v1390 = vadd.f32 %v1386, 1e-05
        %v1391 = vadd.f32 %v1387, 1e-05
        %v1392 = vrsqrt.pop %v1388
        %v1393 = vrsqrt.pop %v1389
        %v1394 = vrsqrt.pop %v1390
        %v1395 = vrsqrt.pop %v1391
        %v1396 = vmul.f32 %v1348, %v1392
        %v1397 = vmul.f32 %v1349, %v1393
        %v1398 = vmul.f32 %v1350, %v1394
        %v1399 = vmul.f32 %v1351, %v1395
        %vm1400 = vcmp.ge.f32.partialorder %v1396, 0.0
        %vm1401 = vcmp.ge.f32.partialorder %v1397, 0.0
        %vm1402 = vcmp.ge.f32.partialorder %v1398, 0.0
        %vm1403 = vcmp.ge.f32.partialorder %v1399, 0.0
        %v1404 = vmul.f32 %v1396, 0.2
        %v1405 = vmul.f32 %v1397, 0.2
        %v1406 = vmul.f32 %v1398, 0.2
        %v1407 = vmul.f32 %v1399, 0.2
        %v1408 = vsel %vm1400, %v1396, %v1404
        %v1409 = vsel %vm1401, %v1397, %v1405
        %v1410 = vsel %vm1402, %v1398, %v1406
        %v1411 = vsel %vm1403, %v1399, %v1407
        %1412 = vst [vmem:[%s196] sm:$0xff] %v1408
        %1413 = vst [vmem:[%s196 + $0x8] sm:$0xff] %v1409
        %1414 = vst [vmem:[%s196 + $0x10] sm:$0xff] %v1410
        %1415 = vst [vmem:[%s196 + $0x18] sm:$0xff] %v1411
      $region36: #{forward_pallas.8} parent=27 // pred_fallthru
        _
      %p1416 = scmp.lt.s32.totalorder %s17, 1
      %s1417 = scalar_select %p1416, %s17, 1
      %s1418 = smul.addr %s1417, 4
      %s1419 = smul.addr %s1418, 8
      %s1420 = scalar_lea.vmem %s2, %s1419
      // Predicated region
      $region37: #{forward_pallas.8} parent=27 // pred_check
        %p1421 = pneg %p97
      $region38: #{forward_pallas.8} parent=27 // pred_check_branch
        %1423 = sbr.rel (%p1421) target = $region40
      $region39: #{forward_pallas.8} parent=27 // pred_region
        _
      $region40: #{forward_pallas.8} parent=27 // pred_fallthru
        _
    $region28: #{forward_pallas.8} parent=5 // pred_fallthru
      _
    %p1424 = scmp.le.s32.totalorder 2, %s8
    // Predicated region
    $region41: #{forward_pallas.8} parent=5 // pred_check
      %p1425 = pneg %p1424
    $region42: #{forward_pallas.8} parent=5 // pred_check_branch
      %1427 = sbr.rel (%p1425) target = $region44
    $region43: #{forward_pallas.8} parent=5 // pred_region
      %s1428 = ssub.s32 %s8, 2
      // Predicated region
      $region45: #{forward_pallas.8} parent=43 // pred_check
        %p1429 = pneg %p103
      $region46: #{forward_pallas.8} parent=43 // pred_check_branch
        %1431 = sbr.rel (%p1429) target = $region48
      $region47: #{forward_pallas.8} parent=43 // pred_region
        %p1432 = scmp.lt.s32.totalorder %s19, 1
        %s1433 = scalar_select %p1432, %s19, 1
        %s1434 = smul.addr %s1433, 4
        %s1435 = smul.addr %s1434, 8
        %s1436 = scalar_lea.vmem %s2, %s1435
      $region48: #{forward_pallas.8} parent=43 // pred_fallthru
        _
    $region44: #{forward_pallas.8} parent=5 // pred_fallthru
      _
  $region6: #{forward_pallas.8} parent=0 // loop_footer
    %s12 = sadd.s32 1, %s8
  $region7: #{forward_pallas.8} parent=0 // loop_footer_branch
    %7 = sbr.rel target = $region3
  $region8: #{forward_pallas.8} parent=0 // loop_exit
    _

// kernel: forward_pallas.9
$region0: #{forward_pallas.9}
  #allocation0 [shape = 'u32[]', space=smem, size = 0x4, offset = 0x4, fixed_abs, tag = 'smem constant byte address 0x4 - core index']
  #allocation1 [shape = 'u32[144,128]{1,0:T(1,128)}', space=vmem, size = 0x12000, scoped, tag = 'internal scratch']
  #allocation2 [shape = 'f32[8,128]{1,0:T(8,128)}', space=vmem, size = 0x1000, scoped, tag = 'scratch operand']
  %s0 = inlined_call_operand.vmem [shape: f32[8,8192], index: 0, kind: input, shape index: {}]
  %s1 = inlined_call_operand.vmem [shape: f32[8192,128], index: 1, kind: input, shape index: {}]
  %s2 = inlined_call_operand.vmem [shape: f32[1,128], index: 2, kind: input, shape index: {}]
  %s3 = inlined_call_operand.vmem [shape: f32[8,128], index: 3, kind: output, shape index: {}]
  %s4 = sld [smem:[#allocation0]]
  $region53: #{forward_pallas.9} parent=0
    _
  %s6 = ssub.s32 1, %s4
  %s7 = scalar_select 0, %s6, %s4
  loop: start=0, step=1, limit=10
  $region2: #{forward_pallas.9} parent=0 // loop_pre_header
    _
  $region3: #{forward_pallas.9} parent=0 // loop_header
    %s9 = sphi 0, %s13
    %p10 = scmp.ge.s32.totalorder %s9, 10
    %s16 = sphi 0, %s28
    %s17 = sphi 0, %s24
    %s18 = sphi 0, %s16
    %s19 = sphi 0, %s17
    %s20 = sphi 0, %s18
    %s21 = sphi 0, %s19
    %s33 = sphi 0, %s35
    %s36 = sphi 0, %s33
    %s37 = sphi 0, %s36
    %s53 = sphi 0, %s37
    %s59 = sphi 0, %s61
    %s62 = sphi 0, %s59
    %s63 = sphi 0, %s62
    %s79 = sphi 0, %s63
    %s83 = sphi 0, %s83
    %s85 = sphi 0, %s83
    %s86 = sphi 0, %s85
    %s100 = sphi 0, %s86
    %s106 = sphi 0, %s108
    %s109 = sphi 0, %s106
    %s110 = sphi 0, %s109
    %s126 = sphi 0, %s110
  $region4: #{forward_pallas.9} parent=0 // loop_header_branch
    %12 = sbr.rel (%p10) target = $region8
  $region5: #{forward_pallas.9} parent=0 // loop_body
    %s14 = ssub.s32 %s9, 1
    %s15 = ssub.s32 %s9, 2
    %s22 = sadd.s32 1, %s17
    %p23 = scmp.ge.s32.totalorder %s22, 8
    %s24 = scalar_select %p23, 0, %s22
    %s25 = sadd.s32 1, %s16
    %s26 = scalar_select %p23, %s25, %s16
    %p27 = scmp.ge.s32.totalorder %s26, 1
    %s28 = scalar_select %p27, 0, %s26
    %s29 = ssub.s32 %s16, %s28
    %s30 = ssub.s32 %s17, %s24
    %s31 = sor.u32 %s29, %s30
    %p32 = scmp.eq.s32.totalorder %s31, 0
    %s34 = sadd.s32 %s33, 1
    %s35 = scalar_select %p32, %s33, %s34
    %p38 = pneg %p32
    %p39 = scmp.eq.s32.totalorder %s9, 7
    %p40 = por %p38, %p39
    %p41 = scmp.ne.s32.totalorder %s33, %s36
    %p42 = scmp.eq.s32.totalorder %s9, 0
    %p43 = por %p41, %p42
    %p44 = scmp.ne.s32.totalorder %s33, %s36
    %p45 = scmp.eq.s32.totalorder %s14, 7
    %p46 = por %p44, %p45
    %p47 = scmp.ne.s32.totalorder %s36, %s37
    %p48 = scmp.eq.s32.totalorder %s14, 0
    %p49 = por %p47, %p48
    %p50 = scmp.ne.s32.totalorder %s36, %s37
    %p51 = scmp.eq.s32.totalorder %s15, 7
    %p52 = por %p50, %p51
    %p54 = scmp.ne.s32.totalorder %s37, %s53
    %p55 = scmp.eq.s32.totalorder %s15, 0
    %p56 = por %p54, %p55
    %s57 = ssub.s32 %s17, %s24
    %p58 = scmp.eq.s32.totalorder %s57, 0
    %s60 = sadd.s32 %s59, 1
    %s61 = scalar_select %p58, %s59, %s60
    %p64 = pneg %p58
    %p65 = scmp.eq.s32.totalorder %s9, 7
    %p66 = por %p64, %p65
    %p67 = scmp.ne.s32.totalorder %s59, %s62
    %p68 = scmp.eq.s32.totalorder %s9, 0
    %p69 = por %p67, %p68
    %p70 = scmp.ne.s32.totalorder %s59, %s62
    %p71 = scmp.eq.s32.totalorder %s14, 7
    %p72 = por %p70, %p71
    %p73 = scmp.ne.s32.totalorder %s62, %s63
    %p74 = scmp.eq.s32.totalorder %s14, 0
    %p75 = por %p73, %p74
    %p76 = scmp.ne.s32.totalorder %s62, %s63
    %p77 = scmp.eq.s32.totalorder %s15, 7
    %p78 = por %p76, %p77
    %p80 = scmp.ne.s32.totalorder %s63, %s79
    %p81 = scmp.eq.s32.totalorder %s15, 0
    %p82 = por %p80, %p81
    %s84 = sadd.s32 %s83, 1
    %p87 = scmp.eq.s32.totalorder %s9, 7
    %p88 = scmp.ne.s32.totalorder %s83, %s85
    %p89 = scmp.eq.s32.totalorder %s9, 0
    %p90 = por %p88, %p89
    %p91 = scmp.ne.s32.totalorder %s83, %s85
    %p92 = scmp.eq.s32.totalorder %s14, 7
    %p93 = por %p91, %p92
    %p94 = scmp.ne.s32.totalorder %s85, %s86
    %p95 = scmp.eq.s32.totalorder %s14, 0
    %p96 = por %p94, %p95
    %p97 = scmp.ne.s32.totalorder %s85, %s86
    %p98 = scmp.eq.s32.totalorder %s15, 7
    %p99 = por %p97, %p98
    %p101 = scmp.ne.s32.totalorder %s86, %s100
    %p102 = scmp.eq.s32.totalorder %s15, 0
    %p103 = por %p101, %p102
    %s104 = ssub.s32 %s16, %s28
    %p105 = scmp.eq.s32.totalorder %s104, 0
    %s107 = sadd.s32 %s106, 1
    %s108 = scalar_select %p105, %s106, %s107
    %p111 = pneg %p105
    %p112 = scmp.eq.s32.totalorder %s9, 7
    %p113 = por %p111, %p112
    %p114 = scmp.ne.s32.totalorder %s106, %s109
    %p115 = scmp.eq.s32.totalorder %s9, 0
    %p116 = por %p114, %p115
    %p117 = scmp.ne.s32.totalorder %s106, %s109
    %p118 = scmp.eq.s32.totalorder %s14, 7
    %p119 = por %p117, %p118
    %p120 = scmp.ne.s32.totalorder %s109, %s110
    %p121 = scmp.eq.s32.totalorder %s14, 0
    %p122 = por %p120, %p121
    %p123 = scmp.ne.s32.totalorder %s109, %s110
    %p124 = scmp.eq.s32.totalorder %s15, 7
    %p125 = por %p123, %p124
    %p127 = scmp.ne.s32.totalorder %s110, %s126
    %p128 = scmp.eq.s32.totalorder %s15, 0
    %p129 = por %p127, %p128
    %p130 = scmp.le.s32.totalorder 1, %s9
    %p131 = scmp.lt.s32.totalorder %s9, 9
    %p132 = pnand %p130, %p131
    %p133 = pneg %p132
    // Predicated region
    $region9: #{forward_pallas.9} parent=5 // pred_check
      _
    $region10: #{forward_pallas.9} parent=5 // pred_check_branch
      %135 = sbr.rel (%p132) target = $region12
    $region11: #{forward_pallas.9} parent=5 // pred_region
      %s136 = ssub.s32 %s9, 1
      // Predicated region
      $region13: #{forward_pallas.9} parent=11 // pred_check
        %p137 = pneg %p96
      $region14: #{forward_pallas.9} parent=11 // pred_check_branch
        %139 = sbr.rel (%p137) target = $region16
      $region15: #{forward_pallas.9} parent=11 // pred_region
        _
      $region16: #{forward_pallas.9} parent=11 // pred_fallthru
        _
    $region12: #{forward_pallas.9} parent=5 // pred_fallthru
      _
    %p140 = scmp.lt.s32.totalorder %s9, 8
    // Predicated region
    $region17: #{forward_pallas.9} parent=5 // pred_check
      %p141 = pneg %p140
    $region18: #{forward_pallas.9} parent=5 // pred_check_branch
      %143 = sbr.rel (%p141) target = $region20
    $region19: #{forward_pallas.9} parent=5 // pred_region
      // Predicated region
      $region21: #{forward_pallas.9} parent=19 // pred_check
        %p144 = pneg %p43
      $region22: #{forward_pallas.9} parent=19 // pred_check_branch
        %146 = sbr.rel (%p144) target = $region24
      $region23: #{forward_pallas.9} parent=19 // pred_region
        %s147 = smul.u32 8, %s17
        %p148 = scmp.lt.s32.totalorder %s16, 0
        %s149 = scalar_select %p148, %s16, 0
        %p150 = scmp.lt.s32.totalorder %s147, 63
        %s151 = scalar_select %p150, %s147, 63
        %s152 = smul.addr %s149, 64
        %s153 = sadd.s32 %s151, %s152
        %s154 = smul.addr %s153, 8
        %s155 = scalar_lea.vmem %s0, %s154
        %s156 = smul.u32 8, %s17
      $region24: #{forward_pallas.9} parent=19 // pred_fallthru
        _
      // Predicated region
      $region25: #{forward_pallas.9} parent=19 // pred_check
        %p157 = pneg %p69
      $region26: #{forward_pallas.9} parent=19 // pred_check_branch
        %159 = sbr.rel (%p157) target = $region28
      $region27: #{forward_pallas.9} parent=19 // pred_region
        %s160 = smul.u32 128, %s17
        %p161 = scmp.lt.s32.totalorder %s160, 1023
        %s162 = scalar_select %p161, %s160, 1023
        %s163 = smul.addr %s162, 8
        %s164 = scalar_lea.vmem %s1, %s163
        %s165 = smul.u32 128, %s17
      $region28: #{forward_pallas.9} parent=19 // pred_fallthru
        _
    $region20: #{forward_pallas.9} parent=5 // pred_fallthru
      _
    %p166 = scmp.le.s32.totalorder 1, %s9
    %p167 = scmp.lt.s32.totalorder %s9, 9
    %p168 = pnand %p166, %p167
    %p169 = pneg %p168
    // Predicated region
    $region29: #{forward_pallas.9} parent=5 // pred_check
      _
    $region30: #{forward_pallas.9} parent=5 // pred_check_branch
      %171 = sbr.rel (%p168) target = $region32
    $region31: #{forward_pallas.9} parent=5 // pred_region
      %s172 = ssub.s32 %s9, 1
      %s173 = smul.u32 8, %s19
      %p174 = scmp.lt.s32.totalorder %s18, 0
      %s175 = scalar_select %p174, %s18, 0
      %p176 = scmp.lt.s32.totalorder %s173, 63
      %s177 = scalar_select %p176, %s173, 63
      %s178 = smul.addr %s175, 64
      %s179 = sadd.s32 %s177, %s178
      %s180 = smul.addr %s179, 8
      %s181 = scalar_lea.vmem %s0, %s180
      %p182 = pneg %p49
      %p183 = pneg %p46
      %s184 = smul.u32 128, %s19
      %p185 = scmp.lt.s32.totalorder %s184, 1023
      %s186 = scalar_select %p185, %s184, 1023
      %s187 = smul.addr %s186, 8
      %s188 = scalar_lea.vmem %s1, %s187
      %p189 = pneg %p75
      %p190 = pneg %p72
      %p191 = pneg %p96
      %p192 = pneg %p93
      %p193 = pneg %p122
      %p194 = pneg %p119
      %p195 = scmp.lt.s32.totalorder %s18, 0
      %s196 = scalar_select %p195, %s18, 0
      %s197 = smul.addr %s196, 8
      %s198 = scalar_lea.vmem %s3, %s197
      %s199 = smul.u32 8, %s19
      %p200 = scmp.lt.s32.totalorder %s18, 0
      %s201 = scalar_select %p200, %s18, 0
      %p202 = scmp.lt.s32.totalorder %s199, 63
      %s203 = scalar_select %p202, %s199, 63
      %s204 = smul.addr %s201, 64
      %s205 = sadd.s32 %s203, %s204
      %s206 = smul.addr %s205, 8
      %s207 = scalar_lea.vmem %s0, %s206
      %s208 = smul.u32 8, %s19
      %s209 = smul.u32 128, %s19
      %p210 = scmp.lt.s32.totalorder %s209, 1023
      %s211 = scalar_select %p210, %s209, 1023
      %s212 = smul.addr %s211, 8
      %s213 = scalar_lea.vmem %s1, %s212
      %s214 = smul.u32 128, %s19
      %p215 = scmp.lt.s32.totalorder %s18, 0
      %s216 = scalar_select %p215, %s18, 0
      %s217 = smul.addr %s216, 8
      %s218 = scalar_lea.vmem %s3, %s217
      %p219 = scmp.eq.s32.totalorder %s19, 0
      // Predicated region
      $region33: #{forward_pallas.9} parent=31 // pred_check
        %p220 = pneg %p219
      $region34: #{forward_pallas.9} parent=31 // pred_check_branch
        %222 = sbr.rel (%p220) target = $region36
      $region35: #{forward_pallas.9} parent=31 // pred_region
        %223 = vst [vmem:[#allocation2] sm:$0xff] 0.0
      $region36: #{forward_pallas.9} parent=31 // pred_fallthru
        _
      %v224 = vld [vmem:[#allocation2] sm:$0xff]
      %v225 = vld [vmem:[%s207] sm:$0xff]
      %v226 = vld [vmem:[%s207 + $0x8] sm:$0xff]
      %v227 = vld [vmem:[%s207 + $0x10] sm:$0xff]
      %v228 = vld [vmem:[%s207 + $0x18] sm:$0xff]
      %v229 = vld [vmem:[%s207 + $0x20] sm:$0xff]
      %v230 = vld [vmem:[%s207 + $0x28] sm:$0xff]
      %v231 = vld [vmem:[%s207 + $0x30] sm:$0xff]
      %v232 = vld [vmem:[%s207 + $0x38] sm:$0xff]
      %v233 = vld [vmem:[%s213] sm:$0xff]
      %v234 = vld [vmem:[%s213 + $0x8] sm:$0xff]
      %v235 = vld [vmem:[%s213 + $0x10] sm:$0xff]
      %v236 = vld [vmem:[%s213 + $0x18] sm:$0xff]
      %v237 = vld [vmem:[%s213 + $0x20] sm:$0xff]
      %v238 = vld [vmem:[%s213 + $0x28] sm:$0xff]
      %v239 = vld [vmem:[%s213 + $0x30] sm:$0xff]
      %v240 = vld [vmem:[%s213 + $0x38] sm:$0xff]
      %v241 = vld [vmem:[%s213 + $0x40] sm:$0xff]
      %v242 = vld [vmem:[%s213 + $0x48] sm:$0xff]
      %v243 = vld [vmem:[%s213 + $0x50] sm:$0xff]
      %v244 = vld [vmem:[%s213 + $0x58] sm:$0xff]
      %v245 = vld [vmem:[%s213 + $0x60] sm:$0xff]
      %v246 = vld [vmem:[%s213 + $0x68] sm:$0xff]
      %v247 = vld [vmem:[%s213 + $0x70] sm:$0xff]
      %v248 = vld [vmem:[%s213 + $0x78] sm:$0xff]
      %v249 = vld [vmem:[%s213 + $0x80] sm:$0xff]
      %v250 = vld [vmem:[%s213 + $0x88] sm:$0xff]
      %v251 = vld [vmem:[%s213 + $0x90] sm:$0xff]
      %v252 = vld [vmem:[%s213 + $0x98] sm:$0xff]
      %v253 = vld [vmem:[%s213 + $0xa0] sm:$0xff]
      %v254 = vld [vmem:[%s213 + $0xa8] sm:$0xff]
      %v255 = vld [vmem:[%s213 + $0xb0] sm:$0xff]
      %v256 = vld [vmem:[%s213 + $0xb8] sm:$0xff]
      %v257 = vld [vmem:[%s213 + $0xc0] sm:$0xff]
      %v258 = vld [vmem:[%s213 + $0xc8] sm:$0xff]
      %v259 = vld [vmem:[%s213 + $0xd0] sm:$0xff]
      %v260 = vld [vmem:[%s213 + $0xd8] sm:$0xff]
      %v261 = vld [vmem:[%s213 + $0xe0] sm:$0xff]
      %v262 = vld [vmem:[%s213 + $0xe8] sm:$0xff]
      %v263 = vld [vmem:[%s213 + $0xf0] sm:$0xff]
      %v264 = vld [vmem:[%s213 + $0xf8] sm:$0xff]
      %v265 = vld [vmem:[%s213 + $0x100] sm:$0xff]
      %v266 = vld [vmem:[%s213 + $0x108] sm:$0xff]
      %v267 = vld [vmem:[%s213 + $0x110] sm:$0xff]
      %v268 = vld [vmem:[%s213 + $0x118] sm:$0xff]
      %v269 = vld [vmem:[%s213 + $0x120] sm:$0xff]
      %v270 = vld [vmem:[%s213 + $0x128] sm:$0xff]
      %v271 = vld [vmem:[%s213 + $0x130] sm:$0xff]
      %v272 = vld [vmem:[%s213 + $0x138] sm:$0xff]
      %v273 = vld [vmem:[%s213 + $0x140] sm:$0xff]
      %v274 = vld [vmem:[%s213 + $0x148] sm:$0xff]
      %v275 = vld [vmem:[%s213 + $0x150] sm:$0xff]
      %v276 = vld [vmem:[%s213 + $0x158] sm:$0xff]
      %v277 = vld [vmem:[%s213 + $0x160] sm:$0xff]
      %v278 = vld [vmem:[%s213 + $0x168] sm:$0xff]
      %v279 = vld [vmem:[%s213 + $0x170] sm:$0xff]
      %v280 = vld [vmem:[%s213 + $0x178] sm:$0xff]
      %v281 = vld [vmem:[%s213 + $0x180] sm:$0xff]
      %v282 = vld [vmem:[%s213 + $0x188] sm:$0xff]
      %v283 = vld [vmem:[%s213 + $0x190] sm:$0xff]
      %v284 = vld [vmem:[%s213 + $0x198] sm:$0xff]
      %v285 = vld [vmem:[%s213 + $0x1a0] sm:$0xff]
      %v286 = vld [vmem:[%s213 + $0x1a8] sm:$0xff]
      %v287 = vld [vmem:[%s213 + $0x1b0] sm:$0xff]
      %v288 = vld [vmem:[%s213 + $0x1b8] sm:$0xff]
      %v289 = vld [vmem:[%s213 + $0x1c0] sm:$0xff]
      %v290 = vld [vmem:[%s213 + $0x1c8] sm:$0xff]
      %v291 = vld [vmem:[%s213 + $0x1d0] sm:$0xff]
      %v292 = vld [vmem:[%s213 + $0x1d8] sm:$0xff]
      %v293 = vld [vmem:[%s213 + $0x1e0] sm:$0xff]
      %v294 = vld [vmem:[%s213 + $0x1e8] sm:$0xff]
      %v295 = vld [vmem:[%s213 + $0x1f0] sm:$0xff]
      %v296 = vld [vmem:[%s213 + $0x1f8] sm:$0xff]
      %v297 = vld [vmem:[%s213 + $0x200] sm:$0xff]
      %v298 = vld [vmem:[%s213 + $0x208] sm:$0xff]
      %v299 = vld [vmem:[%s213 + $0x210] sm:$0xff]
      %v300 = vld [vmem:[%s213 + $0x218] sm:$0xff]
      %v301 = vld [vmem:[%s213 + $0x220] sm:$0xff]
      %v302 = vld [vmem:[%s213 + $0x228] sm:$0xff]
      %v303 = vld [vmem:[%s213 + $0x230] sm:$0xff]
      %v304 = vld [vmem:[%s213 + $0x238] sm:$0xff]
      %v305 = vld [vmem:[%s213 + $0x240] sm:$0xff]
      %v306 = vld [vmem:[%s213 + $0x248] sm:$0xff]
      %v307 = vld [vmem:[%s213 + $0x250] sm:$0xff]
      %v308 = vld [vmem:[%s213 + $0x258] sm:$0xff]
      %v309 = vld [vmem:[%s213 + $0x260] sm:$0xff]
      %v310 = vld [vmem:[%s213 + $0x268] sm:$0xff]
      %v311 = vld [vmem:[%s213 + $0x270] sm:$0xff]
      %v312 = vld [vmem:[%s213 + $0x278] sm:$0xff]
      %v313 = vld [vmem:[%s213 + $0x280] sm:$0xff]
      %v314 = vld [vmem:[%s213 + $0x288] sm:$0xff]
      %v315 = vld [vmem:[%s213 + $0x290] sm:$0xff]
      %v316 = vld [vmem:[%s213 + $0x298] sm:$0xff]
      %v317 = vld [vmem:[%s213 + $0x2a0] sm:$0xff]
      %v318 = vld [vmem:[%s213 + $0x2a8] sm:$0xff]
      %v319 = vld [vmem:[%s213 + $0x2b0] sm:$0xff]
      %v320 = vld [vmem:[%s213 + $0x2b8] sm:$0xff]
      %v321 = vld [vmem:[%s213 + $0x2c0] sm:$0xff]
      %v322 = vld [vmem:[%s213 + $0x2c8] sm:$0xff]
      %v323 = vld [vmem:[%s213 + $0x2d0] sm:$0xff]
      %v324 = vld [vmem:[%s213 + $0x2d8] sm:$0xff]
      %v325 = vld [vmem:[%s213 + $0x2e0] sm:$0xff]
      %v326 = vld [vmem:[%s213 + $0x2e8] sm:$0xff]
      %v327 = vld [vmem:[%s213 + $0x2f0] sm:$0xff]
      %v328 = vld [vmem:[%s213 + $0x2f8] sm:$0xff]
      %v329 = vld [vmem:[%s213 + $0x300] sm:$0xff]
      %v330 = vld [vmem:[%s213 + $0x308] sm:$0xff]
      %v331 = vld [vmem:[%s213 + $0x310] sm:$0xff]
      %v332 = vld [vmem:[%s213 + $0x318] sm:$0xff]
      %v333 = vld [vmem:[%s213 + $0x320] sm:$0xff]
      %v334 = vld [vmem:[%s213 + $0x328] sm:$0xff]
      %v335 = vld [vmem:[%s213 + $0x330] sm:$0xff]
      %v336 = vld [vmem:[%s213 + $0x338] sm:$0xff]
      %v337 = vld [vmem:[%s213 + $0x340] sm:$0xff]
      %v338 = vld [vmem:[%s213 + $0x348] sm:$0xff]
      %v339 = vld [vmem:[%s213 + $0x350] sm:$0xff]
      %v340 = vld [vmem:[%s213 + $0x358] sm:$0xff]
      %v341 = vld [vmem:[%s213 + $0x360] sm:$0xff]
      %v342 = vld [vmem:[%s213 + $0x368] sm:$0xff]
      %v343 = vld [vmem:[%s213 + $0x370] sm:$0xff]
      %v344 = vld [vmem:[%s213 + $0x378] sm:$0xff]
      %v345 = vld [vmem:[%s213 + $0x380] sm:$0xff]
      %v346 = vld [vmem:[%s213 + $0x388] sm:$0xff]
      %v347 = vld [vmem:[%s213 + $0x390] sm:$0xff]
      %v348 = vld [vmem:[%s213 + $0x398] sm:$0xff]
      %v349 = vld [vmem:[%s213 + $0x3a0] sm:$0xff]
      %v350 = vld [vmem:[%s213 + $0x3a8] sm:$0xff]
      %v351 = vld [vmem:[%s213 + $0x3b0] sm:$0xff]
      %v352 = vld [vmem:[%s213 + $0x3b8] sm:$0xff]
      %v353 = vld [vmem:[%s213 + $0x3c0] sm:$0xff]
      %v354 = vld [vmem:[%s213 + $0x3c8] sm:$0xff]
      %v355 = vld [vmem:[%s213 + $0x3d0] sm:$0xff]
      %v356 = vld [vmem:[%s213 + $0x3d8] sm:$0xff]
      %v357 = vld [vmem:[%s213 + $0x3e0] sm:$0xff]
      %v358 = vld [vmem:[%s213 + $0x3e8] sm:$0xff]
      %v359 = vld [vmem:[%s213 + $0x3f0] sm:$0xff]
      %v360 = vld [vmem:[%s213 + $0x3f8] sm:$0xff]
      %361 = vmatprep.subr.mxu0 0.0
      %362 = vmatpush1.msra.mxu0 %v233
      %363 = vmatprep.subr.mxu0 0.0
      %364 = vmatpush1.msra.mxu0 %v234
      %365 = vmatprep.subr.mxu0 0.0
      %366 = vmatpush1.msra.mxu0 %v235
      %367 = vmatprep.subr.mxu0 0.0
      %368 = vmatpush1.msra.mxu0 %v236
      %369 = vmatprep.subr.mxu0 0.0
      %370 = vmatpush1.msra.mxu0 %v237
      %371 = vmatprep.subr.mxu0 0.0
      %372 = vmatpush1.msra.mxu0 %v238
      %373 = vmatprep.subr.mxu0 0.0
      %374 = vmatpush1.msra.mxu0 %v239
      %375 = vmatprep.subr.mxu0 0.0
      %376 = vmatpush1.msra.mxu0 %v240
      %377 = vmatprep.subr.mxu0 0.0
      %378 = vmatpush1.msra.mxu0 %v241
      %379 = vmatprep.subr.mxu0 0.0
      %380 = vmatpush1.msra.mxu0 %v242
      %381 = vmatprep.subr.mxu0 0.0
      %382 = vmatpush1.msra.mxu0 %v243
      %383 = vmatprep.subr.mxu0 0.0
      %384 = vmatpush1.msra.mxu0 %v244
      %385 = vmatprep.subr.mxu0 0.0
      %386 = vmatpush1.msra.mxu0 %v245
      %387 = vmatprep.subr.mxu0 0.0
      %388 = vmatpush1.msra.mxu0 %v246
      %389 = vmatprep.subr.mxu0 0.0
      %390 = vmatpush1.msra.mxu0 %v247
      %391 = vmatprep.subr.mxu0 0.0
      %392 = vmatpush1.msra.mxu0 %v248
      %393 = vmatprep.subr.mxu0 0.0
      %394 = vmatpush1.msra.mxu0 %v249
      %395 = vmatprep.subr.mxu0 0.0
      %396 = vmatpush1.msra.mxu0 %v250
      %397 = vmatprep.subr.mxu0 0.0
      %398 = vmatpush1.msra.mxu0 %v251
      %399 = vmatprep.subr.mxu0 0.0
      %400 = vmatpush1.msra.mxu0 %v252
      %401 = vmatprep.subr.mxu0 0.0
      %402 = vmatpush1.msra.mxu0 %v253
      %403 = vmatprep.subr.mxu0 0.0
      %404 = vmatpush1.msra.mxu0 %v254
      %405 = vmatprep.subr.mxu0 0.0
      %406 = vmatpush1.msra.mxu0 %v255
      %407 = vmatprep.subr.mxu0 0.0
      %408 = vmatpush1.msra.mxu0 %v256
      %409 = vmatprep.subr.mxu0 0.0
      %410 = vmatpush1.msra.mxu0 %v257
      %411 = vmatprep.subr.mxu0 0.0
      %412 = vmatpush1.msra.mxu0 %v258
      %413 = vmatprep.subr.mxu0 0.0
      %414 = vmatpush1.msra.mxu0 %v259
      %415 = vmatprep.subr.mxu0 0.0
      %416 = vmatpush1.msra.mxu0 %v260
      %417 = vmatprep.subr.mxu0 0.0
      %418 = vmatpush1.msra.mxu0 %v261
      %419 = vmatprep.subr.mxu0 0.0
      %420 = vmatpush1.msra.mxu0 %v262
      %421 = vmatprep.subr.mxu0 0.0
      %422 = vmatpush1.msra.mxu0 %v263
      %423 = vmatprep.subr.mxu0 0.0
      %424 = vmatpush1.msra.mxu0 %v264
      %425 = vmatprep.mubr.f32.mxu0 %v226
      %426 = vmatmul.mubr.f32.gmra.mrb[0].mxu0 %v225
      %v427 = vpop.f32.mrb[0].mxu0
      %v428 = vadd.f32 0.0, %v427
      %v429 = vpop.f32.mrb[0].mxu0
      %430 = vdwg.mxu0
      %431 = vmatprep.subr.mxu0 0.0
      %432 = vmatpush1.msra.mxu0 %v265
      %433 = vmatprep.subr.mxu0 0.0
      %434 = vmatpush1.msra.mxu0 %v266
      %435 = vmatprep.subr.mxu0 0.0
      %436 = vmatpush1.msra.mxu0 %v267
      %437 = vmatprep.subr.mxu0 0.0
      %438 = vmatpush1.msra.mxu0 %v268
      %439 = vmatprep.subr.mxu0 0.0
      %440 = vmatpush1.msra.mxu0 %v269
      %441 = vmatprep.subr.mxu0 0.0
      %442 = vmatpush1.msra.mxu0 %v270
      %443 = vmatprep.subr.mxu0 0.0
      %444 = vmatpush1.msra.mxu0 %v271
      %445 = vmatprep.subr.mxu0 0.0
      %446 = vmatpush1.msra.mxu0 %v272
      %447 = vmatprep.subr.mxu0 0.0
      %448 = vmatpush1.msra.mxu0 %v273
      %449 = vmatprep.subr.mxu0 0.0
      %450 = vmatpush1.msra.mxu0 %v274
      %451 = vmatprep.subr.mxu0 0.0
      %452 = vmatpush1.msra.mxu0 %v275
      %453 = vmatprep.subr.mxu0 0.0
      %454 = vmatpush1.msra.mxu0 %v276
      %455 = vmatprep.subr.mxu0 0.0
      %456 = vmatpush1.msra.mxu0 %v277
      %457 = vmatprep.subr.mxu0 0.0
      %458 = vmatpush1.msra.mxu0 %v278
      %459 = vmatprep.subr.mxu0 0.0
      %460 = vmatpush1.msra.mxu0 %v279
      %461 = vmatprep.subr.mxu0 0.0
      %462 = vmatpush1.msra.mxu0 %v280
      %463 = vmatprep.subr.mxu0 0.0
      %464 = vmatpush1.msra.mxu0 %v281
      %465 = vmatprep.subr.mxu0 0.0
      %466 = vmatpush1.msra.mxu0 %v282
      %467 = vmatprep.subr.mxu0 0.0
      %468 = vmatpush1.msra.mxu0 %v283
      %469 = vmatprep.subr.mxu0 0.0
      %470 = vmatpush1.msra.mxu0 %v284
      %471 = vmatprep.subr.mxu0 0.0
      %472 = vmatpush1.msra.mxu0 %v285
      %473 = vmatprep.subr.mxu0 0.0
      %474 = vmatpush1.msra.mxu0 %v286
      %475 = vmatprep.subr.mxu0 0.0
      %476 = vmatpush1.msra.mxu0 %v287
      %477 = vmatprep.subr.mxu0 0.0
      %478 = vmatpush1.msra.mxu0 %v288
      %479 = vmatprep.subr.mxu0 0.0
      %480 = vmatpush1.msra.mxu0 %v289
      %481 = vmatprep.subr.mxu0 0.0
      %482 = vmatpush1.msra.mxu0 %v290
      %483 = vmatprep.subr.mxu0 0.0
      %484 = vmatpush1.msra.mxu0 %v291
      %485 = vmatprep.subr.mxu0 0.0
      %486 = vmatpush1.msra.mxu0 %v292
      %487 = vmatprep.subr.mxu0 0.0
      %488 = vmatpush1.msra.mxu0 %v293
      %489 = vmatprep.subr.mxu0 0.0
      %490 = vmatpush1.msra.mxu0 %v294
      %491 = vmatprep.subr.mxu0 0.0
      %492 = vmatpush1.msra.mxu0 %v295
      %493 = vmatprep.subr.mxu0 0.0
      %494 = vmatpush1.msra.mxu0 %v296
      %495 = vmatprep.mubr.f32.mxu0 %v228
      %496 = vmatmul.mubr.f32.gmra.mrb[0].mxu0 %v227
      %v497 = vpop.f32.mrb[0].mxu0
      %v498 = vadd.f32 %v428, %v497
      %v499 = vpop.f32.mrb[0].mxu0
      %500 = vdwg.mxu0
      %501 = vmatprep.subr.mxu0 0.0
      %502 = vmatpush1.msra.mxu0 %v297
      %503 = vmatprep.subr.mxu0 0.0
      %504 = vmatpush1.msra.mxu0 %v298
      %505 = vmatprep.subr.mxu0 0.0
      %506 = vmatpush1.msra.mxu0 %v299
      %507 = vmatprep.subr.mxu0 0.0
      %508 = vmatpush1.msra.mxu0 %v300
      %509 = vmatprep.subr.mxu0 0.0
      %510 = vmatpush1.msra.mxu0 %v301
      %511 = vmatprep.subr.mxu0 0.0
      %512 = vmatpush1.msra.mxu0 %v302
      %513 = vmatprep.subr.mxu0 0.0
      %514 = vmatpush1.msra.mxu0 %v303
      %515 = vmatprep.subr.mxu0 0.0
      %516 = vmatpush1.msra.mxu0 %v304
      %517 = vmatprep.subr.mxu0 0.0
      %518 = vmatpush1.msra.mxu0 %v305
      %519 = vmatprep.subr.mxu0 0.0
      %520 = vmatpush1.msra.mxu0 %v306
      %521 = vmatprep.subr.mxu0 0.0
      %522 = vmatpush1.msra.mxu0 %v307
      %523 = vmatprep.subr.mxu0 0.0
      %524 = vmatpush1.msra.mxu0 %v308
      %525 = vmatprep.subr.mxu0 0.0
      %526 = vmatpush1.msra.mxu0 %v309
      %527 = vmatprep.subr.mxu0 0.0
      %528 = vmatpush1.msra.mxu0 %v310
      %529 = vmatprep.subr.mxu0 0.0
      %530 = vmatpush1.msra.mxu0 %v311
      %531 = vmatprep.subr.mxu0 0.0
      %532 = vmatpush1.msra.mxu0 %v312
      %533 = vmatprep.subr.mxu0 0.0
      %534 = vmatpush1.msra.mxu0 %v313
      %535 = vmatprep.subr.mxu0 0.0
      %536 = vmatpush1.msra.mxu0 %v314
      %537 = vmatprep.subr.mxu0 0.0
      %538 = vmatpush1.msra.mxu0 %v315
      %539 = vmatprep.subr.mxu0 0.0
      %540 = vmatpush1.msra.mxu0 %v316
      %541 = vmatprep.subr.mxu0 0.0
      %542 = vmatpush1.msra.mxu0 %v317
      %543 = vmatprep.subr.mxu0 0.0
      %544 = vmatpush1.msra.mxu0 %v318
      %545 = vmatprep.subr.mxu0 0.0
      %546 = vmatpush1.msra.mxu0 %v319
      %547 = vmatprep.subr.mxu0 0.0
      %548 = vmatpush1.msra.mxu0 %v320
      %549 = vmatprep.subr.mxu0 0.0
      %550 = vmatpush1.msra.mxu0 %v321
      %551 = vmatprep.subr.mxu0 0.0
      %552 = vmatpush1.msra.mxu0 %v322
      %553 = vmatprep.subr.mxu0 0.0
      %554 = vmatpush1.msra.mxu0 %v323
      %555 = vmatprep.subr.mxu0 0.0
      %556 = vmatpush1.msra.mxu0 %v324
      %557 = vmatprep.subr.mxu0 0.0
      %558 = vmatpush1.msra.mxu0 %v325
      %559 = vmatprep.subr.mxu0 0.0
      %560 = vmatpush1.msra.mxu0 %v326
      %561 = vmatprep.subr.mxu0 0.0
      %562 = vmatpush1.msra.mxu0 %v327
      %563 = vmatprep.subr.mxu0 0.0
      %564 = vmatpush1.msra.mxu0 %v328
      %565 = vmatprep.mubr.f32.mxu0 %v230
      %566 = vmatmul.mubr.f32.gmra.mrb[0].mxu0 %v229
      %v567 = vpop.f32.mrb[0].mxu0
      %v568 = vadd.f32 %v498, %v567
      %v569 = vpop.f32.mrb[0].mxu0
      %570 = vdwg.mxu0
      %571 = vmatprep.subr.mxu0 0.0
      %572 = vmatpush1.msra.mxu0 %v329
      %573 = vmatprep.subr.mxu0 0.0
      %574 = vmatpush1.msra.mxu0 %v330
      %575 = vmatprep.subr.mxu0 0.0
      %576 = vmatpush1.msra.mxu0 %v331
      %577 = vmatprep.subr.mxu0 0.0
      %578 = vmatpush1.msra.mxu0 %v332
      %579 = vmatprep.subr.mxu0 0.0
      %580 = vmatpush1.msra.mxu0 %v333
      %581 = vmatprep.subr.mxu0 0.0
      %582 = vmatpush1.msra.mxu0 %v334
      %583 = vmatprep.subr.mxu0 0.0
      %584 = vmatpush1.msra.mxu0 %v335
      %585 = vmatprep.subr.mxu0 0.0
      %586 = vmatpush1.msra.mxu0 %v336
      %587 = vmatprep.subr.mxu0 0.0
      %588 = vmatpush1.msra.mxu0 %v337
      %589 = vmatprep.subr.mxu0 0.0
      %590 = vmatpush1.msra.mxu0 %v338
      %591 = vmatprep.subr.mxu0 0.0
      %592 = vmatpush1.msra.mxu0 %v339
      %593 = vmatprep.subr.mxu0 0.0
      %594 = vmatpush1.msra.mxu0 %v340
      %595 = vmatprep.subr.mxu0 0.0
      %596 = vmatpush1.msra.mxu0 %v341
      %597 = vmatprep.subr.mxu0 0.0
      %598 = vmatpush1.msra.mxu0 %v342
      %599 = vmatprep.subr.mxu0 0.0
      %600 = vmatpush1.msra.mxu0 %v343
      %601 = vmatprep.subr.mxu0 0.0
      %602 = vmatpush1.msra.mxu0 %v344
      %603 = vmatprep.subr.mxu0 0.0
      %604 = vmatpush1.msra.mxu0 %v345
      %605 = vmatprep.subr.mxu0 0.0
      %606 = vmatpush1.msra.mxu0 %v346
      %607 = vmatprep.subr.mxu0 0.0
      %608 = vmatpush1.msra.mxu0 %v347
      %609 = vmatprep.subr.mxu0 0.0
      %610 = vmatpush1.msra.mxu0 %v348
      %611 = vmatprep.subr.mxu0 0.0
      %612 = vmatpush1.msra.mxu0 %v349
      %613 = vmatprep.subr.mxu0 0.0
      %614 = vmatpush1.msra.mxu0 %v350
      %615 = vmatprep.subr.mxu0 0.0
      %616 = vmatpush1.msra.mxu0 %v351
      %617 = vmatprep.subr.mxu0 0.0
      %618 = vmatpush1.msra.mxu0 %v352
      %619 = vmatprep.subr.mxu0 0.0
      %620 = vmatpush1.msra.mxu0 %v353
      %621 = vmatprep.subr.mxu0 0.0
      %622 = vmatpush1.msra.mxu0 %v354
      %623 = vmatprep.subr.mxu0 0.0
      %624 = vmatpush1.msra.mxu0 %v355
      %625 = vmatprep.subr.mxu0 0.0
      %626 = vmatpush1.msra.mxu0 %v356
      %627 = vmatprep.subr.mxu0 0.0
      %628 = vmatpush1.msra.mxu0 %v357
      %629 = vmatprep.subr.mxu0 0.0
      %630 = vmatpush1.msra.mxu0 %v358
      %631 = vmatprep.subr.mxu0 0.0
      %632 = vmatpush1.msra.mxu0 %v359
      %633 = vmatprep.subr.mxu0 0.0
      %634 = vmatpush1.msra.mxu0 %v360
      %635 = vmatprep.mubr.f32.mxu0 %v232
      %636 = vmatmul.mubr.f32.gmra.mrb[0].mxu0 %v231
      %v637 = vpop.f32.mrb[0].mxu0
      %v638 = vadd.f32 %v568, %v637
      %v639 = vpop.f32.mrb[0].mxu0
      %640 = vdwg.mxu0
      %v641 = vadd.f32 %v224, %v638
      %642 = vst [vmem:[#allocation2] sm:$0xff] %v641
      %p643 = scmp.eq.s32.totalorder %s19, 7
      // Predicated region
      $region37: #{forward_pallas.9} parent=31 // pred_check
        %p644 = pneg %p643
      $region38: #{forward_pallas.9} parent=31 // pred_check_branch
        %646 = sbr.rel (%p644) target = $region40
      $region39: #{forward_pallas.9} parent=31 // pred_region
        %v647 = vld [vmem:[#allocation2] sm:$0xff]
        %648 = vst [vmem:[%s218] sm:$0xff] %v647
      $region40: #{forward_pallas.9} parent=31 // pred_fallthru
        _
      %p649 = scmp.lt.s32.totalorder %s18, 0
      %s650 = scalar_select %p649, %s18, 0
      %s651 = smul.addr %s650, 8
      %s652 = scalar_lea.vmem %s3, %s651
      // Predicated region
      $region41: #{forward_pallas.9} parent=31 // pred_check
        %p653 = pneg %p119
      $region42: #{forward_pallas.9} parent=31 // pred_check_branch
        %655 = sbr.rel (%p653) target = $region44
      $region43: #{forward_pallas.9} parent=31 // pred_region
        _
      $region44: #{forward_pallas.9} parent=31 // pred_fallthru
        _
      // Predicated region
      $region45: #{forward_pallas.9} parent=31 // pred_check
        %p656 = pneg %p119
      $region46: #{forward_pallas.9} parent=31 // pred_check_branch
        %658 = sbr.rel (%p656) target = $region48
      $region47: #{forward_pallas.9} parent=31 // pred_region
        %p659 = scmp.lt.s32.totalorder %s18, 0
        %s660 = scalar_select %p659, %s18, 0
        %s661 = smul.addr %s660, 8
        %s662 = scalar_lea.vmem %s3, %s661
      $region48: #{forward_pallas.9} parent=31 // pred_fallthru
        _
    $region32: #{forward_pallas.9} parent=5 // pred_fallthru
      _
    %p663 = scmp.le.s32.totalorder 2, %s9
    // Predicated region
    $region49: #{forward_pallas.9} parent=5 // pred_check
      %p664 = pneg %p663
    $region50: #{forward_pallas.9} parent=5 // pred_check_branch
      %666 = sbr.rel (%p664) target = $region52
    $region51: #{forward_pallas.9} parent=5 // pred_region
      %s667 = ssub.s32 %s9, 2
    $region52: #{forward_pallas.9} parent=5 // pred_fallthru
      _
  $region6: #{forward_pallas.9} parent=0 // loop_footer
    %s13 = sadd.s32 1, %s9
  $region7: #{forward_pallas.9} parent=0 // loop_footer_branch
    %8 = sbr.rel target = $region3
  $region8: #{forward_pallas.9} parent=0 // loop_exit
    _

</llo_original>
